<compile_context>
chip_gen: v7x
topology: tpu7x:2x2x1
jax: 0.10.0
libtpu: 0.0.40
codegen_flags: <defaults>
</compile_context>

<pallas_src>
import functools
import math
import random

import jax
import jax.numpy as jnp
from jax import lax
from jax.experimental import pallas as pl
from jax.experimental.pallas import tpu as pltpu

LANE = 128
SUBLANE = 8
NEG_INF = -1e10


def _rup(n, m):
    return ((n + m - 1) // m) * m


def _vmem():
    return pl.BlockSpec(memory_space=pltpu.MemorySpace.VMEM)


def _smem():
    return pl.BlockSpec(memory_space=pltpu.MemorySpace.SMEM)


# ----------------------------------------------------------------------------
# Shared GRU gate math (PyTorch GRU semantics).  gi/gh are [B, 3*HP] with gate g
# occupying lanes [g*HP, g*HP + H); padded lanes of everything are zero, so the
# padded part of h stays exactly zero across steps.
# ----------------------------------------------------------------------------
def _gru_update(gi, gh, h, HP):
    r = jax.nn.sigmoid(gi[:, 0:HP] + gh[:, 0:HP])
    z = jax.nn.sigmoid(gi[:, HP:2 * HP] + gh[:, HP:2 * HP])
    n = jnp.tanh(gi[:, 2 * HP:3 * HP] + r * gh[:, 2 * HP:3 * HP])
    return (1.0 - z) * n + z * h


# ----------------------------------------------------------------------------
# Fused encoder kernel: forward GRU pass + backward GRU pass + tanh(fc) hidden,
# looping over the whole sequence inside a single kernel invocation.
# ----------------------------------------------------------------------------
def encoder_kernel(emb_ref,
                   wif_ref, whf_ref, bif_ref, bhf_ref,
                   wib_ref, whb_ref, bib_ref, bhb_ref,
                   fcf_ref, fcb_ref, fcbias_ref,
                   outf_ref, outb_ref, hid_ref):
    S, B, _ = emb_ref.shape
    HP = whf_ref.shape[0]

    wif = wif_ref[...]; whf = whf_ref[...]
    bif = bif_ref[...]; bhf = bhf_ref[...]
    wib = wib_ref[...]; whb = whb_ref[...]
    bib = bib_ref[...]; bhb = bhb_ref[...]

    h0 = jnp.zeros((B, HP), jnp.float32)

    def fwd_step(s, h):
        x = emb_ref[s]
        gi = jnp.dot(x, wif, preferred_element_type=jnp.float32) + bif
        gh = jnp.dot(h, whf, preferred_element_type=jnp.float32) + bhf
        h = _gru_update(gi, gh, h, HP)
        outf_ref[s, :, :] = h
        return h

    h_f = lax.fori_loop(0, S, fwd_step, h0)

    def bwd_step(i, h):
        s = S - 1 - i
        x = emb_ref[s]
        gi = jnp.dot(x, wib, preferred_element_type=jnp.float32) + bib
        gh = jnp.dot(h, whb, preferred_element_type=jnp.float32) + bhb
        h = _gru_update(gi, gh, h, HP)
        outb_ref[s, :, :] = h
        return h

    h_b = lax.fori_loop(0, S, bwd_step, h0)

    hid_ref[...] = jnp.tanh(
        jnp.dot(h_f, fcf_ref[...], preferred_element_type=jnp.float32)
        + jnp.dot(h_b, fcb_ref[...], preferred_element_type=jnp.float32)
        + fcbias_ref[...])


# ----------------------------------------------------------------------------
# Fused decoder kernel: the entire T-step decode loop (attention, GRU cell,
# output projection, greedy argmax, teacher-forcing input selection) in one
# kernel; encoder outputs / weights stay VMEM-resident across all steps.
# ----------------------------------------------------------------------------
def _make_decoder_kernel(out_dim):
    def decoder_kernel(tf_ref,
                       hid0_ref, enc_ref, maskb_ref, headoh_ref, demb_ref,
                       awh_ref, awe_ref, ab_ref, av_ref,
                       wie_ref, wiw_ref, whd_ref, bid_ref, bhd_ref,
                       wo_ref, ww_ref, weo_ref, ob_ref,
                       out_ref):
        T, B, V = out_ref.shape
        _, S, E = enc_ref.shape
        DHP = awh_ref.shape[1]

        enc = enc_ref[...]                               # [B, S, E]
        maskb = maskb_ref[...]                           # [B, S] additive bias
        demb = demb_ref[...]                             # [V, EMBP]
        awh = awh_ref[...]
        av = av_ref[...]                                 # [1, DHP]
        wie = wie_ref[...]; wiw = wiw_ref[...]; whd = whd_ref[...]
        bid = bid_ref[...]; bhd = bhd_ref[...]
        wo = wo_ref[...]; ww = ww_ref[...]; weo = weo_ref[...]; ob = ob_ref[...]

        # Step-invariant attention projection of the encoder outputs (hoisted
        # out of the decode loop).
        epart = (jnp.dot(enc.reshape(B * S, E), awe_ref[...],
                         preferred_element_type=jnp.float32)
                 + ab_ref[...]).reshape(B, S, DHP)

        col = lax.broadcasted_iota(jnp.int32, (B, V), 1)

        # outputs[0] stays zero, as in the PyTorch reference.
        out_ref[0, :, :] = jnp.zeros((B, V), jnp.float32)

        def step(s, carry):
            hidden, input_oh = carry
            t = s + 1

            # embedding lookup as one-hot @ table (MXU friendly)
            emb = jnp.dot(input_oh, demb, preferred_element_type=jnp.float32)

            # Bahdanau attention with additive mask bias + stable softmax
            hpart = jnp.dot(hidden, awh, preferred_element_type=jnp.float32)
            energy = jnp.tanh(hpart[:, None, :] + epart)          # [B, S, DHP]
            scores = jnp.sum(energy * av[None], axis=-1) + maskb  # [B, S]
            scores = scores - jnp.max(scores, axis=1, keepdims=True)
            p = jnp.exp(scores)
            a = p * pl.reciprocal(jnp.sum(p, axis=1, keepdims=True), approx=True)
            weighted = jnp.sum(a[:, :, None] * enc, axis=1)       # [B, E]

            # GRU cell on cat(emb, weighted): weights pre-split, gates fused
            gi = (jnp.dot(emb, wie, preferred_element_type=jnp.float32)
                  + jnp.dot(weighted, wiw, preferred_element_type=jnp.float32)
                  + bid)
            gh = jnp.dot(hidden, whd, preferred_element_type=jnp.float32) + bhd
            hidden_new = _gru_update(gi, gh, hidden, DHP)

            # output projection fc_out(cat(out, weighted, emb))
            pred = (jnp.dot(hidden_new, wo, preferred_element_type=jnp.float32)
                    + jnp.dot(weighted, ww, preferred_element_type=jnp.float32)
                    + jnp.dot(emb, weo, preferred_element_type=jnp.float32)
                    + ob)
            out_ref[t, :, :] = pred

            # greedy argmax over real vocab columns (first max), as a one-hot
            logits = jnp.where(col < out_dim, pred, -1e30)
            maxv = jnp.max(logits, axis=1, keepdims=True)
            idx = jnp.min(jnp.where(logits == maxv, col, V), axis=1, keepdims=True)
            top1_oh = (col == idx).astype(jnp.float32)

            # teacher forcing blend (tf is 0.0 / 1.0 per step, from SMEM)
            tf = tf_ref[t]
            input_oh_new = tf * headoh_ref[t] + (1.0 - tf) * top1_oh
            return hidden_new, input_oh_new

        lax.fori_loop(0, T - 1, step, (hid0_ref[...], headoh_ref[0]))

    return decoder_kernel


# ----------------------------------------------------------------------------
# Parameter init (PyTorch-like uniform init) producing lane/gate-padded weights.
# ----------------------------------------------------------------------------
def _uniform(key, shape, k):
    return jax.random.uniform(key, shape, jnp.float32, -k, k)


def _pad_block(x, rows, cols):
    x = jnp.asarray(x, jnp.float32)
    return jnp.zeros((rows, cols), jnp.float32).at[:x.shape[0], :x.shape[1]].set(x)


def _pad_gates(w, H, HP):
    """[rows, 3H] -> [rows, 3*HP]; gate g lives at columns [g*HP, g*HP + H)."""
    out = jnp.zeros((w.shape[0], 3 * HP), jnp.float32)
    for g in range(3):
        out = out.at[:, g * HP:g * HP + H].set(w[:, g * H:(g + 1) * H])
    return out


def _pad_rows(w, RP):
    return jnp.zeros((RP, w.shape[1]), jnp.float32).at[:w.shape[0], :].set(w)


def _pad_enc_rows(w, enc_hid, HP):
    """[2*enc_hid, C] -> [2*HP, C]: fwd rows at offset 0, bwd rows at offset HP."""
    out = jnp.zeros((2 * HP, w.shape[1]), jnp.float32)
    out = out.at[:enc_hid, :].set(w[:enc_hid])
    out = out.at[HP:HP + enc_hid, :].set(w[enc_hid:])
    return out


def _init_gru_raw(key, in_size, H):
    ks = jax.random.split(key, 4)
    k = 1.0 / math.sqrt(H)
    return dict(w_ih=_uniform(ks[0], (3 * H, in_size), k),
                w_hh=_uniform(ks[1], (3 * H, H), k),
                b_ih=_uniform(ks[2], (3 * H,), k),
                b_hh=_uniform(ks[3], (3 * H,), k))


def _pad_gru(raw, H, INP, HP):
    w_ih = _pad_rows(_pad_gates(jnp.transpose(raw['w_ih']), H, HP), INP)
    w_hh = _pad_rows(_pad_gates(jnp.transpose(raw['w_hh']), H, HP), HP)
    b_ih = _pad_gates(raw['b_ih'].reshape(1, 3 * H), H, HP)
    b_hh = _pad_gates(raw['b_hh'].reshape(1, 3 * H), H, HP)
    return w_ih, w_hh, b_ih, b_hh


def init_params(key, input_dim, output_dim, emb_dim, enc_hid, dec_hid):
    HP = _rup(enc_hid, LANE)
    DHP = _rup(dec_hid, LANE)
    EMBP = _rup(emb_dim, LANE)
    VP = _rup(output_dim, LANE)
    E = 2 * enc_hid

    keys = jax.random.split(key, 12)

    # ---- encoder ----
    enc_emb = _uniform(keys[0], (input_dim, emb_dim), 1.0)
    gru_f = _init_gru_raw(keys[1], emb_dim, enc_hid)
    gru_b = _init_gru_raw(keys[2], emb_dim, enc_hid)
    kfc = 1.0 / math.sqrt(E)
    fc_w = _uniform(keys[3], (dec_hid, E), kfc)
    fc_b = _uniform(keys[4], (dec_hid,), kfc)

    wif, whf, bif, bhf = _pad_gru(gru_f, enc_hid, EMBP, HP)
    wib, whb, bib, bhb = _pad_gru(gru_b, enc_hid, EMBP, HP)

    encoder = dict(
        emb=_pad_block(enc_emb, input_dim, EMBP),
        wif=wif, whf=whf, bif=bif, bhf=bhf,
        wib=wib, whb=whb, bib=bib, bhb=bhb,
        fcf=_pad_block(jnp.transpose(fc_w[:, :enc_hid]), HP, DHP),
        fcb=_pad_block(jnp.transpose(fc_w[:, enc_hid:]), HP, DHP),
        fcbias=_pad_block(fc_b.reshape(1, dec_hid), 1, DHP),
    )

    # ---- attention: Linear(dec_hid + E, dec_hid), v = Linear(dec_hid, 1) no bias
    ka = 1.0 / math.sqrt(E + dec_hid)
    attn_w = _uniform(keys[5], (dec_hid, dec_hid + E), ka)
    attn_b = _uniform(keys[6], (dec_hid,), ka)
    v_w = _uniform(keys[7], (1, dec_hid), 1.0 / math.sqrt(dec_hid))

    # ---- decoder ----
    dec_emb = _uniform(keys[8], (output_dim, emb_dim), 1.0)
    gru_d = _init_gru_raw(keys[9], emb_dim + E, dec_hid)
    ko = 1.0 / math.sqrt(dec_hid + E + emb_dim)
    out_w = _uniform(keys[10], (output_dim, dec_hid + E + emb_dim), ko)
    out_b = _uniform(keys[11], (output_dim,), ko)

    # decoder GRU input is cat(emb, weighted): split w_ih into the two parts
    wie = _pad_rows(_pad_gates(jnp.transpose(gru_d['w_ih'][:, :emb_dim]),
                               dec_hid, DHP), EMBP)
    wiw = _pad_enc_rows(_pad_gates(jnp.transpose(gru_d['w_ih'][:, emb_dim:]),
                                   dec_hid, DHP), enc_hid, HP)
    whd = _pad_rows(_pad_gates(jnp.transpose(gru_d['w_hh']), dec_hid, DHP), DHP)
    bid = _pad_gates(gru_d['b_ih'].reshape(1, 3 * dec_hid), dec_hid, DHP)
    bhd = _pad_gates(gru_d['b_hh'].reshape(1, 3 * dec_hid), dec_hid, DHP)

    decoder = dict(
        demb=_pad_block(dec_emb, VP, EMBP),
        awh=_pad_block(jnp.transpose(attn_w[:, :dec_hid]), DHP, DHP),
        awe=_pad_enc_rows(_pad_block(jnp.transpose(attn_w[:, dec_hid:]), E, DHP),
                          enc_hid, HP),
        ab=_pad_block(attn_b.reshape(1, dec_hid), 1, DHP),
        av=_pad_block(v_w, 1, DHP),
        wie=wie, wiw=wiw, whd=whd, bid=bid, bhd=bhd,
        wo=_pad_block(jnp.transpose(out_w[:, :dec_hid]), DHP, VP),
        ww=_pad_enc_rows(_pad_block(jnp.transpose(out_w[:, dec_hid:dec_hid + E]),
                                    E, VP), enc_hid, HP),
        weo=_pad_block(jnp.transpose(out_w[:, dec_hid + E:]), EMBP, VP),
        ob=_pad_block(out_b.reshape(1, output_dim), 1, VP),
    )

    return dict(encoder=encoder, decoder=decoder)


# ----------------------------------------------------------------------------
# Jitted forward (mirrors PyTorch Seq2Seq.forward): 2 Pallas calls total.
# ----------------------------------------------------------------------------
def make_seq2seq_forward(out_dim, pad_idx):
    decoder_kernel = _make_decoder_kernel(out_dim)

    @jax.jit
    def forward(params, text, text_len, headline, tf_flags):
        # TODO(synk): pack_padded_sequence is not modeled; the encoder consumes
        # the full (possibly padded) sequence and the attention mask hides pads.
        del text_len
        enc_p = params['encoder']
        dec_p = params['decoder']

        S, B = text.shape
        T = headline.shape[0]
        BP = _rup(B, SUBLANE)
        HP = enc_p['whf'].shape[0]
        DHP = enc_p['fcf'].shape[1]
        VP = dec_p['demb'].shape[0]

        # ---- encoder: embedding gather in XLA, one fused Pallas call ----
        emb_seq = jnp.take(enc_p['emb'], text, axis=0)           # [S, B, EMBP]
        emb_seq = jnp.pad(emb_seq, ((0, 0), (0, BP - B), (0, 0)))

        out_f, out_b, hidden = pl.pallas_call(
            encoder_kernel,
            out_shape=(jax.ShapeDtypeStruct((S, BP, HP), jnp.float32),
                       jax.ShapeDtypeStruct((S, BP, HP), jnp.float32),
                       jax.ShapeDtypeStruct((BP, DHP), jnp.float32)),
            in_specs=[_vmem()] * 12,
            out_specs=(_vmem(), _vmem(), _vmem()),
        )(emb_seq,
          enc_p['wif'], enc_p['whf'], enc_p['bif'], enc_p['bhf'],
          enc_p['wib'], enc_p['whb'], enc_p['bib'], enc_p['bhb'],
          enc_p['fcf'], enc_p['fcb'], enc_p['fcbias'])

        # batch-first encoder outputs, lanes = [fwd pad(128) | bwd pad(128)]
        enc_bse = jnp.transpose(jnp.concatenate([out_f, out_b], axis=-1),
                                (1, 0, 2))                        # [BP, S, 2*HP]

        # additive attention-mask bias (0 valid / -1e10 pad), batch-first
        maskb = jnp.where(text != pad_idx, 0.0, NEG_INF).astype(jnp.float32).T
        maskb = jnp.pad(maskb, ((0, BP - B), (0, 0)))             # [BP, S]

        # headline tokens as one-hots (teacher inputs + initial <sos> input)
        head_oh = jax.nn.one_hot(headline, VP, dtype=jnp.float32)  # [T, B, VP]
        head_oh = jnp.pad(head_oh, ((0, 0), (0, BP - B), (0, 0)))

        # ---- decoder: one fused Pallas call over all T steps ----
        out_pad = pl.pallas_call(
            decoder_kernel,
            out_shape=jax.ShapeDtypeStruct((T, BP, VP), jnp.float32),
            in_specs=[_smem()] + [_vmem()] * 18,
            out_specs=_vmem(),
        )(tf_flags.astype(jnp.float32),
          hidden, enc_bse, maskb, head_oh, dec_p['demb'],
          dec_p['awh'], dec_p['awe'], dec_p['ab'], dec_p['av'],
          dec_p['wie'], dec_p['wiw'], dec_p['whd'], dec_p['bid'], dec_p['bhd'],
          dec_p['wo'], dec_p['ww'], dec_p['weo'], dec_p['ob'])

        return out_pad[:, :B, :out_dim]                           # [T, B, out_dim]

    return forward


# ----------------------------------------------------------------------------
if __name__ == "__main__":
    random.seed(0)                                  # deterministic teacher forcing
    key = jax.random.PRNGKey(0)

    B, S, T = 2, 8, 6
    INPUT_DIM, OUTPUT_DIM = 30, 25
    EMB_DIM, ENC_HID, DEC_HID = 16, 16, 16
    PAD_IDX = 1
    TEACHER_FORCING_RATIO = 0.5

    k_params, k_text, k_head = jax.random.split(key, 3)
    params = init_params(k_params, INPUT_DIM, OUTPUT_DIM, EMB_DIM, ENC_HID, DEC_HID)

    # tokens in [2, vocab) so there are no pads (text_len == S for every example)
    text = jax.random.randint(k_text, (S, B), 2, INPUT_DIM).astype(jnp.int32)
    text_len = jnp.full((B,), S, dtype=jnp.int32)
    headline = jax.random.randint(k_head, (T, B), 2, OUTPUT_DIM).astype(jnp.int32)

    # teacher-forcing decisions drawn per call OUTSIDE the jitted forward so the
    # semantics match PyTorch's per-call random.random() (index 0 is unused).
    tf_flags = jnp.array(
        [0.0] + [1.0 if random.random() < TEACHER_FORCING_RATIO else 0.0
                 for _ in range(1, T)], dtype=jnp.float32)

    forward = make_seq2seq_forward(OUTPUT_DIM, PAD_IDX)
    out = forward(params, text, text_len, headline, tf_flags)
    out = jax.block_until_ready(out)

    assert out.shape == (T, B, OUTPUT_DIM), out.shape
    assert bool(jnp.all(jnp.isfinite(out)))
    print("KERNEL_OK")
</pallas_src>

<mosaic_0001>
module attributes {stable_mosaic.version = 11 : i64} {
  func.func @encoder_kernel(%arg0: memref<8x8x128xf32, #tpu.memory_space<vmem>>, %arg1: memref<128x384xf32, #tpu.memory_space<vmem>>, %arg2: memref<128x384xf32, #tpu.memory_space<vmem>>, %arg3: memref<1x384xf32, #tpu.memory_space<vmem>>, %arg4: memref<1x384xf32, #tpu.memory_space<vmem>>, %arg5: memref<128x384xf32, #tpu.memory_space<vmem>>, %arg6: memref<128x384xf32, #tpu.memory_space<vmem>>, %arg7: memref<1x384xf32, #tpu.memory_space<vmem>>, %arg8: memref<1x384xf32, #tpu.memory_space<vmem>>, %arg9: memref<128x128xf32, #tpu.memory_space<vmem>>, %arg10: memref<128x128xf32, #tpu.memory_space<vmem>>, %arg11: memref<1x128xf32, #tpu.memory_space<vmem>>, %arg12: memref<8x8x128xf32, #tpu.memory_space<vmem>>, %arg13: memref<8x8x128xf32, #tpu.memory_space<vmem>>, %arg14: memref<8x128xf32, #tpu.memory_space<vmem>>) attributes {dimension_semantics = [], scalar_prefetch = 0 : i64, scratch_operands = 0 : i64, tpu.core_type = #tpu.core_type<tc>} {
    %c0 = arith.constant 0 : index
    %c0_0 = arith.constant 0 : index
    %0 = vector.load %arg1[%c0, %c0_0] : memref<128x384xf32, #tpu.memory_space<vmem>>, vector<128x384xf32>
    %c0_1 = arith.constant 0 : index
    %c0_2 = arith.constant 0 : index
    %1 = vector.load %arg2[%c0_1, %c0_2] : memref<128x384xf32, #tpu.memory_space<vmem>>, vector<128x384xf32>
    %c0_3 = arith.constant 0 : index
    %c0_4 = arith.constant 0 : index
    %2 = vector.load %arg3[%c0_3, %c0_4] : memref<1x384xf32, #tpu.memory_space<vmem>>, vector<1x384xf32>
    %c0_5 = arith.constant 0 : index
    %c0_6 = arith.constant 0 : index
    %3 = vector.load %arg4[%c0_5, %c0_6] : memref<1x384xf32, #tpu.memory_space<vmem>>, vector<1x384xf32>
    %c0_7 = arith.constant 0 : index
    %c0_8 = arith.constant 0 : index
    %4 = vector.load %arg5[%c0_7, %c0_8] : memref<128x384xf32, #tpu.memory_space<vmem>>, vector<128x384xf32>
    %c0_9 = arith.constant 0 : index
    %c0_10 = arith.constant 0 : index
    %5 = vector.load %arg6[%c0_9, %c0_10] : memref<128x384xf32, #tpu.memory_space<vmem>>, vector<128x384xf32>
    %c0_11 = arith.constant 0 : index
    %c0_12 = arith.constant 0 : index
    %6 = vector.load %arg7[%c0_11, %c0_12] : memref<1x384xf32, #tpu.memory_space<vmem>>, vector<1x384xf32>
    %c0_13 = arith.constant 0 : index
    %c0_14 = arith.constant 0 : index
    %7 = vector.load %arg8[%c0_13, %c0_14] : memref<1x384xf32, #tpu.memory_space<vmem>>, vector<1x384xf32>
    %cst = arith.constant 0.000000e+00 : f32
    %8 = vector.broadcast %cst : f32 to vector<8x128xf32>
    %c0_i32 = arith.constant 0 : i32
    %c8_i32 = arith.constant 8 : i32
    %9 = arith.addi %c0_i32, %c8_i32 : i32
    %c1_i32 = arith.constant 1 : i32
    %10 = scf.for %arg15 = %c0_i32 to %9 step %c1_i32 iter_args(%arg16 = %8) -> (vector<8x128xf32>)  : i32 {
      %23 = arith.index_cast %arg15 : i32 to index
      %c0_30 = arith.constant 0 : index
      %c0_31 = arith.constant 0 : index
      %24 = vector.load %arg0[%23, %c0_30, %c0_31] : memref<8x8x128xf32, #tpu.memory_space<vmem>>, vector<1x8x128xf32>
      %25 = vector.shape_cast %24 : vector<1x8x128xf32> to vector<8x128xf32>
      %cst_32 = arith.constant dense<0.000000e+00> : vector<8x384xf32>
      %26 = tpu.matmul %25, %0, %cst_32 {dimension_numbers = #tpu.dot_dimension_numbers<[1], [0], [0], [1], [0, 0, 1, 1], [], []>} : vector<8x128xf32>, vector<128x384xf32>, vector<8x384xf32> -> vector<8x384xf32>
      %27 = vector.broadcast %2 : vector<1x384xf32> to vector<8x384xf32>
      %28 = arith.addf %26, %27 : vector<8x384xf32>
      %cst_33 = arith.constant dense<0.000000e+00> : vector<8x384xf32>
      %29 = tpu.matmul %arg16, %1, %cst_33 {dimension_numbers = #tpu.dot_dimension_numbers<[1], [0], [0], [1], [0, 0, 1, 1], [], []>} : vector<8x128xf32>, vector<128x384xf32>, vector<8x384xf32> -> vector<8x384xf32>
      %30 = vector.broadcast %3 : vector<1x384xf32> to vector<8x384xf32>
      %31 = arith.addf %29, %30 : vector<8x384xf32>
      %32 = vector.extract_strided_slice %28 {offsets = [0, 0], sizes = [8, 128], strides = [1, 1]} : vector<8x384xf32> to vector<8x128xf32>
      %33 = vector.extract_strided_slice %31 {offsets = [0, 0], sizes = [8, 128], strides = [1, 1]} : vector<8x384xf32> to vector<8x128xf32>
      %34 = arith.addf %32, %33 : vector<8x128xf32>
      %35 = arith.negf %34 : vector<8x128xf32>
      %36 = math.exp %35 : vector<8x128xf32>
      %cst_34 = arith.constant 1.000000e+00 : f32
      %37 = vector.broadcast %cst_34 : f32 to vector<8x128xf32>
      %38 = arith.addf %37, %36 : vector<8x128xf32>
      %39 = arith.divf %37, %38 : vector<8x128xf32>
      %40 = vector.extract_strided_slice %28 {offsets = [0, 128], sizes = [8, 128], strides = [1, 1]} : vector<8x384xf32> to vector<8x128xf32>
      %41 = vector.extract_strided_slice %31 {offsets = [0, 128], sizes = [8, 128], strides = [1, 1]} : vector<8x384xf32> to vector<8x128xf32>
      %42 = arith.addf %40, %41 : vector<8x128xf32>
      %43 = arith.negf %42 : vector<8x128xf32>
      %44 = math.exp %43 : vector<8x128xf32>
      %cst_35 = arith.constant 1.000000e+00 : f32
      %45 = vector.broadcast %cst_35 : f32 to vector<8x128xf32>
      %46 = arith.addf %45, %44 : vector<8x128xf32>
      %47 = arith.divf %45, %46 : vector<8x128xf32>
      %48 = vector.extract_strided_slice %28 {offsets = [0, 256], sizes = [8, 128], strides = [1, 1]} : vector<8x384xf32> to vector<8x128xf32>
      %49 = vector.extract_strided_slice %31 {offsets = [0, 256], sizes = [8, 128], strides = [1, 1]} : vector<8x384xf32> to vector<8x128xf32>
      %50 = arith.mulf %39, %49 : vector<8x128xf32>
      %51 = arith.addf %48, %50 : vector<8x128xf32>
      %52 = math.tanh %51 : vector<8x128xf32>
      %cst_36 = arith.constant 1.000000e+00 : f32
      %53 = vector.broadcast %cst_36 : f32 to vector<8x128xf32>
      %54 = arith.subf %53, %47 : vector<8x128xf32>
      %55 = arith.mulf %54, %52 : vector<8x128xf32>
      %56 = arith.mulf %47, %arg16 : vector<8x128xf32>
      %57 = arith.addf %55, %56 : vector<8x128xf32>
      %58 = arith.index_cast %arg15 : i32 to index
      %c0_37 = arith.constant 0 : index
      %c0_38 = arith.constant 0 : index
      %59 = vector.load %arg12[%58, %c0_37, %c0_38] : memref<8x8x128xf32, #tpu.memory_space<vmem>>, vector<1x8x128xf32>
      %60 = vector.shape_cast %59 : vector<1x8x128xf32> to vector<8x128xf32>
      %61 = vector.shape_cast %57 : vector<8x128xf32> to vector<1x8x128xf32>
      tpu.vector_store %arg12[%58, %c0_37, %c0_38], %61 {strides = array<i32>} : memref<8x8x128xf32, #tpu.memory_space<vmem>>, vector<1x8x128xf32>,
      scf.yield %57 : vector<8x128xf32>
    }
    %c8_i32_15 = arith.constant 8 : i32
    %c0_i32_16 = arith.constant 0 : i32
    %c8_i32_17 = arith.constant 8 : i32
    %11 = arith.addi %c0_i32_16, %c8_i32_17 : i32
    %c1_i32_18 = arith.constant 1 : i32
    %12 = scf.for %arg15 = %c0_i32_16 to %11 step %c1_i32_18 iter_args(%arg16 = %8) -> (vector<8x128xf32>)  : i32 {
      %c7_i32 = arith.constant 7 : i32
      %23 = arith.subi %c7_i32, %arg15 : i32
      %24 = arith.index_cast %23 : i32 to index
      %c0_30 = arith.constant 0 : index
      %c0_31 = arith.constant 0 : index
      %25 = vector.load %arg0[%24, %c0_30, %c0_31] : memref<8x8x128xf32, #tpu.memory_space<vmem>>, vector<1x8x128xf32>
      %26 = vector.shape_cast %25 : vector<1x8x128xf32> to vector<8x128xf32>
      %cst_32 = arith.constant dense<0.000000e+00> : vector<8x384xf32>
      %27 = tpu.matmul %26, %4, %cst_32 {dimension_numbers = #tpu.dot_dimension_numbers<[1], [0], [0], [1], [0, 0, 1, 1], [], []>} : vector<8x128xf32>, vector<128x384xf32>, vector<8x384xf32> -> vector<8x384xf32>
      %28 = vector.broadcast %6 : vector<1x384xf32> to vector<8x384xf32>
      %29 = arith.addf %27, %28 : vector<8x384xf32>
      %cst_33 = arith.constant dense<0.000000e+00> : vector<8x384xf32>
      %30 = tpu.matmul %arg16, %5, %cst_33 {dimension_numbers = #tpu.dot_dimension_numbers<[1], [0], [0], [1], [0, 0, 1, 1], [], []>} : vector<8x128xf32>, vector<128x384xf32>, vector<8x384xf32> -> vector<8x384xf32>
      %31 = vector.broadcast %7 : vector<1x384xf32> to vector<8x384xf32>
      %32 = arith.addf %30, %31 : vector<8x384xf32>
      %33 = vector.extract_strided_slice %29 {offsets = [0, 0], sizes = [8, 128], strides = [1, 1]} : vector<8x384xf32> to vector<8x128xf32>
      %34 = vector.extract_strided_slice %32 {offsets = [0, 0], sizes = [8, 128], strides = [1, 1]} : vector<8x384xf32> to vector<8x128xf32>
      %35 = arith.addf %33, %34 : vector<8x128xf32>
      %36 = arith.negf %35 : vector<8x128xf32>
      %37 = math.exp %36 : vector<8x128xf32>
      %cst_34 = arith.constant 1.000000e+00 : f32
      %38 = vector.broadcast %cst_34 : f32 to vector<8x128xf32>
      %39 = arith.addf %38, %37 : vector<8x128xf32>
      %40 = arith.divf %38, %39 : vector<8x128xf32>
      %41 = vector.extract_strided_slice %29 {offsets = [0, 128], sizes = [8, 128], strides = [1, 1]} : vector<8x384xf32> to vector<8x128xf32>
      %42 = vector.extract_strided_slice %32 {offsets = [0, 128], sizes = [8, 128], strides = [1, 1]} : vector<8x384xf32> to vector<8x128xf32>
      %43 = arith.addf %41, %42 : vector<8x128xf32>
      %44 = arith.negf %43 : vector<8x128xf32>
      %45 = math.exp %44 : vector<8x128xf32>
      %cst_35 = arith.constant 1.000000e+00 : f32
      %46 = vector.broadcast %cst_35 : f32 to vector<8x128xf32>
      %47 = arith.addf %46, %45 : vector<8x128xf32>
      %48 = arith.divf %46, %47 : vector<8x128xf32>
      %49 = vector.extract_strided_slice %29 {offsets = [0, 256], sizes = [8, 128], strides = [1, 1]} : vector<8x384xf32> to vector<8x128xf32>
      %50 = vector.extract_strided_slice %32 {offsets = [0, 256], sizes = [8, 128], strides = [1, 1]} : vector<8x384xf32> to vector<8x128xf32>
      %51 = arith.mulf %40, %50 : vector<8x128xf32>
      %52 = arith.addf %49, %51 : vector<8x128xf32>
      %53 = math.tanh %52 : vector<8x128xf32>
      %cst_36 = arith.constant 1.000000e+00 : f32
      %54 = vector.broadcast %cst_36 : f32 to vector<8x128xf32>
      %55 = arith.subf %54, %48 : vector<8x128xf32>
      %56 = arith.mulf %55, %53 : vector<8x128xf32>
      %57 = arith.mulf %48, %arg16 : vector<8x128xf32>
      %58 = arith.addf %56, %57 : vector<8x128xf32>
      %59 = arith.index_cast %23 : i32 to index
      %c0_37 = arith.constant 0 : index
      %c0_38 = arith.constant 0 : index
      %60 = vector.load %arg13[%59, %c0_37, %c0_38] : memref<8x8x128xf32, #tpu.memory_space<vmem>>, vector<1x8x128xf32>
      %61 = vector.shape_cast %60 : vector<1x8x128xf32> to vector<8x128xf32>
      %62 = vector.shape_cast %58 : vector<8x128xf32> to vector<1x8x128xf32>
      tpu.vector_store %arg13[%59, %c0_37, %c0_38], %62 {strides = array<i32>} : memref<8x8x128xf32, #tpu.memory_space<vmem>>, vector<1x8x128xf32>,
      scf.yield %58 : vector<8x128xf32>
    }
    %c8_i32_19 = arith.constant 8 : i32
    %c0_20 = arith.constant 0 : index
    %c0_21 = arith.constant 0 : index
    %13 = vector.load %arg9[%c0_20, %c0_21] : memref<128x128xf32, #tpu.memory_space<vmem>>, vector<128x128xf32>
    %cst_22 = arith.constant dense<0.000000e+00> : vector<8x128xf32>
    %14 = tpu.matmul %10, %13, %cst_22 {dimension_numbers = #tpu.dot_dimension_numbers<[1], [0], [0], [1], [0, 0, 1, 1], [], []>} : vector<8x128xf32>, vector<128x128xf32>, vector<8x128xf32> -> vector<8x128xf32>
    %c0_23 = arith.constant 0 : index
    %c0_24 = arith.constant 0 : index
    %15 = vector.load %arg10[%c0_23, %c0_24] : memref<128x128xf32, #tpu.memory_space<vmem>>, vector<128x128xf32>
    %cst_25 = arith.constant dense<0.000000e+00> : vector<8x128xf32>
    %16 = tpu.matmul %12, %15, %cst_25 {dimension_numbers = #tpu.dot_dimension_numbers<[1], [0], [0], [1], [0, 0, 1, 1], [], []>} : vector<8x128xf32>, vector<128x128xf32>, vector<8x128xf32> -> vector<8x128xf32>
    %17 = arith.addf %14, %16 : vector<8x128xf32>
    %c0_26 = arith.constant 0 : index
    %c0_27 = arith.constant 0 : index
    %18 = vector.load %arg11[%c0_26, %c0_27] : memref<1x128xf32, #tpu.memory_space<vmem>>, vector<1x128xf32>
    %19 = vector.broadcast %18 : vector<1x128xf32> to vector<8x128xf32>
    %20 = arith.addf %17, %19 : vector<8x128xf32>
    %21 = math.tanh %20 : vector<8x128xf32>
    %c0_28 = arith.constant 0 : index
    %c0_29 = arith.constant 0 : index
    %22 = vector.load %arg14[%c0_28, %c0_29] : memref<8x128xf32, #tpu.memory_space<vmem>>, vector<8x128xf32>
    tpu.vector_store %arg14[%c0_28, %c0_29], %21 {strides = array<i32>} : memref<8x128xf32, #tpu.memory_space<vmem>>, vector<8x128xf32>,
    return
  }
}

module attributes {stable_mosaic.version = 11 : i64} {
  func.func @decoder_kernel(%arg0: memref<6xf32, #tpu.memory_space<smem>>, %arg1: memref<8x128xf32, #tpu.memory_space<vmem>>, %arg2: memref<8x8x256xf32, #tpu.memory_space<vmem>>, %arg3: memref<8x8xf32, #tpu.memory_space<vmem>>, %arg4: memref<6x8x128xf32, #tpu.memory_space<vmem>>, %arg5: memref<128x128xf32, #tpu.memory_space<vmem>>, %arg6: memref<128x128xf32, #tpu.memory_space<vmem>>, %arg7: memref<256x128xf32, #tpu.memory_space<vmem>>, %arg8: memref<1x128xf32, #tpu.memory_space<vmem>>, %arg9: memref<1x128xf32, #tpu.memory_space<vmem>>, %arg10: memref<128x384xf32, #tpu.memory_space<vmem>>, %arg11: memref<256x384xf32, #tpu.memory_space<vmem>>, %arg12: memref<128x384xf32, #tpu.memory_space<vmem>>, %arg13: memref<1x384xf32, #tpu.memory_space<vmem>>, %arg14: memref<1x384xf32, #tpu.memory_space<vmem>>, %arg15: memref<128x128xf32, #tpu.memory_space<vmem>>, %arg16: memref<256x128xf32, #tpu.memory_space<vmem>>, %arg17: memref<128x128xf32, #tpu.memory_space<vmem>>, %arg18: memref<1x128xf32, #tpu.memory_space<vmem>>, %arg19: memref<6x8x128xf32, #tpu.memory_space<vmem>>) attributes {dimension_semantics = [], scalar_prefetch = 0 : i64, scratch_operands = 0 : i64, tpu.core_type = #tpu.core_type<tc>} {
    %c0 = arith.constant 0 : index
    %c0_0 = arith.constant 0 : index
    %c0_1 = arith.constant 0 : index
    %0 = vector.load %arg2[%c0, %c0_0, %c0_1] : memref<8x8x256xf32, #tpu.memory_space<vmem>>, vector<8x8x256xf32>
    %c0_2 = arith.constant 0 : index
    %c0_3 = arith.constant 0 : index
    %1 = vector.load %arg3[%c0_2, %c0_3] : memref<8x8xf32, #tpu.memory_space<vmem>>, vector<8x8xf32>
    %c0_4 = arith.constant 0 : index
    %c0_5 = arith.constant 0 : index
    %2 = vector.load %arg5[%c0_4, %c0_5] : memref<128x128xf32, #tpu.memory_space<vmem>>, vector<128x128xf32>
    %c0_6 = arith.constant 0 : index
    %c0_7 = arith.constant 0 : index
    %3 = vector.load %arg6[%c0_6, %c0_7] : memref<128x128xf32, #tpu.memory_space<vmem>>, vector<128x128xf32>
    %c0_8 = arith.constant 0 : index
    %c0_9 = arith.constant 0 : index
    %4 = vector.load %arg9[%c0_8, %c0_9] : memref<1x128xf32, #tpu.memory_space<vmem>>, vector<1x128xf32>
    %c0_10 = arith.constant 0 : index
    %c0_11 = arith.constant 0 : index
    %5 = vector.load %arg10[%c0_10, %c0_11] : memref<128x384xf32, #tpu.memory_space<vmem>>, vector<128x384xf32>
    %c0_12 = arith.constant 0 : index
    %c0_13 = arith.constant 0 : index
    %6 = vector.load %arg11[%c0_12, %c0_13] : memref<256x384xf32, #tpu.memory_space<vmem>>, vector<256x384xf32>
    %c0_14 = arith.constant 0 : index
    %c0_15 = arith.constant 0 : index
    %7 = vector.load %arg12[%c0_14, %c0_15] : memref<128x384xf32, #tpu.memory_space<vmem>>, vector<128x384xf32>
    %c0_16 = arith.constant 0 : index
    %c0_17 = arith.constant 0 : index
    %8 = vector.load %arg13[%c0_16, %c0_17] : memref<1x384xf32, #tpu.memory_space<vmem>>, vector<1x384xf32>
    %c0_18 = arith.constant 0 : index
    %c0_19 = arith.constant 0 : index
    %9 = vector.load %arg14[%c0_18, %c0_19] : memref<1x384xf32, #tpu.memory_space<vmem>>, vector<1x384xf32>
    %c0_20 = arith.constant 0 : index
    %c0_21 = arith.constant 0 : index
    %10 = vector.load %arg15[%c0_20, %c0_21] : memref<128x128xf32, #tpu.memory_space<vmem>>, vector<128x128xf32>
    %c0_22 = arith.constant 0 : index
    %c0_23 = arith.constant 0 : index
    %11 = vector.load %arg16[%c0_22, %c0_23] : memref<256x128xf32, #tpu.memory_space<vmem>>, vector<256x128xf32>
    %c0_24 = arith.constant 0 : index
    %c0_25 = arith.constant 0 : index
    %12 = vector.load %arg17[%c0_24, %c0_25] : memref<128x128xf32, #tpu.memory_space<vmem>>, vector<128x128xf32>
    %c0_26 = arith.constant 0 : index
    %c0_27 = arith.constant 0 : index
    %13 = vector.load %arg18[%c0_26, %c0_27] : memref<1x128xf32, #tpu.memory_space<vmem>>, vector<1x128xf32>
    %14 = vector.shape_cast %0 : vector<8x8x256xf32> to vector<64x256xf32>
    %c0_28 = arith.constant 0 : index
    %c0_29 = arith.constant 0 : index
    %15 = vector.load %arg7[%c0_28, %c0_29] : memref<256x128xf32, #tpu.memory_space<vmem>>, vector<256x128xf32>
    %cst = arith.constant dense<0.000000e+00> : vector<64x128xf32>
    %16 = tpu.matmul %14, %15, %cst {dimension_numbers = #tpu.dot_dimension_numbers<[1], [0], [0], [1], [0, 0, 1, 1], [], []>} : vector<64x256xf32>, vector<256x128xf32>, vector<64x128xf32> -> vector<64x128xf32>
    %c0_30 = arith.constant 0 : index
    %c0_31 = arith.constant 0 : index
    %17 = vector.load %arg8[%c0_30, %c0_31] : memref<1x128xf32, #tpu.memory_space<vmem>>, vector<1x128xf32>
    %18 = vector.broadcast %17 : vector<1x128xf32> to vector<64x128xf32>
    %19 = arith.addf %16, %18 : vector<64x128xf32>
    %20 = vector.shape_cast %19 : vector<64x128xf32> to vector<8x8x128xf32>
    %21 = tpu.iota {dimensions = array<i32: 1>} : vector<8x128xi32>
    %cst_32 = arith.constant 0.000000e+00 : f32
    %22 = vector.broadcast %cst_32 : f32 to vector<8x128xf32>
    %c0_33 = arith.constant 0 : index
    %c0_34 = arith.constant 0 : index
    %c0_35 = arith.constant 0 : index
    %23 = vector.load %arg19[%c0_33, %c0_34, %c0_35] : memref<6x8x128xf32, #tpu.memory_space<vmem>>, vector<1x8x128xf32>
    %24 = vector.shape_cast %23 : vector<1x8x128xf32> to vector<8x128xf32>
    %25 = vector.shape_cast %22 : vector<8x128xf32> to vector<1x8x128xf32>
    tpu.vector_store %arg19[%c0_33, %c0_34, %c0_35], %25 {strides = array<i32>} : memref<6x8x128xf32, #tpu.memory_space<vmem>>, vector<1x8x128xf32>,
    %c0_36 = arith.constant 0 : index
    %c0_37 = arith.constant 0 : index
    %26 = vector.load %arg1[%c0_36, %c0_37] : memref<8x128xf32, #tpu.memory_space<vmem>>, vector<8x128xf32>
    %c0_38 = arith.constant 0 : index
    %c0_39 = arith.constant 0 : index
    %c0_40 = arith.constant 0 : index
    %27 = vector.load %arg4[%c0_38, %c0_39, %c0_40] : memref<6x8x128xf32, #tpu.memory_space<vmem>>, vector<1x8x128xf32>
    %28 = vector.shape_cast %27 : vector<1x8x128xf32> to vector<8x128xf32>
    %c0_i32 = arith.constant 0 : i32
    %c5_i32 = arith.constant 5 : i32
    %29 = arith.addi %c0_i32, %c5_i32 : i32
    %c1_i32 = arith.constant 1 : i32
    %30:2 = scf.for %arg20 = %c0_i32 to %29 step %c1_i32 iter_args(%arg21 = %26, %arg22 = %28) -> (vector<8x128xf32>, vector<8x128xf32>)  : i32 {
      %c1_i32_42 = arith.constant 1 : i32
      %31 = arith.addi %arg20, %c1_i32_42 : i32
      %cst_43 = arith.constant dense<0.000000e+00> : vector<8x128xf32>
      %32 = tpu.matmul %arg22, %2, %cst_43 {dimension_numbers = #tpu.dot_dimension_numbers<[1], [0], [0], [1], [0, 0, 1, 1], [], []>} : vector<8x128xf32>, vector<128x128xf32>, vector<8x128xf32> -> vector<8x128xf32>
      %cst_44 = arith.constant dense<0.000000e+00> : vector<8x128xf32>
      %33 = tpu.matmul %arg21, %3, %cst_44 {dimension_numbers = #tpu.dot_dimension_numbers<[1], [0], [0], [1], [0, 0, 1, 1], [], []>} : vector<8x128xf32>, vector<128x128xf32>, vector<8x128xf32> -> vector<8x128xf32>
      %34 = vector.shape_cast %33 : vector<8x128xf32> to vector<8x1x128xf32>
      %35 = vector.broadcast %34 : vector<8x1x128xf32> to vector<8x8x128xf32>
      %36 = arith.addf %35, %20 : vector<8x8x128xf32>
      %37 = math.tanh %36 : vector<8x8x128xf32>
      %38 = vector.shape_cast %4 : vector<1x128xf32> to vector<1x1x128xf32>
      %39 = vector.broadcast %38 : vector<1x1x128xf32> to vector<8x8x128xf32>
      %40 = arith.mulf %37, %39 : vector<8x8x128xf32>
      %cst_45 = arith.constant dense<0.000000e+00> : vector<8x8xf32>
      %41 = vector.multi_reduction <add>, %40, %cst_45 [2] : vector<8x8x128xf32> to vector<8x8xf32>
      %42 = arith.addf %41, %1 : vector<8x8xf32>
      %cst_46 = arith.constant dense<0xFF800000> : vector<8xf32>
      %43 = vector.multi_reduction <maximumf>, %42, %cst_46 [1] : vector<8x8xf32> to vector<8xf32>
      %44 = vector.shape_cast %43 : vector<8xf32> to vector<8x1xf32>
      %45 = vector.broadcast %44 : vector<8x1xf32> to vector<8x8xf32>
      %46 = arith.subf %42, %45 : vector<8x8xf32>
      %47 = math.exp %46 : vector<8x8xf32>
      %cst_47 = arith.constant dense<0.000000e+00> : vector<8xf32>
      %48 = vector.multi_reduction <add>, %47, %cst_47 [1] : vector<8x8xf32> to vector<8xf32>
      %49 = vector.shape_cast %48 : vector<8xf32> to vector<8x1xf32>
      %50 = tpu.reciprocal %49 {approx = true} : vector<8x1xf32> -> vector<8x1xf32>
      %51 = vector.broadcast %50 : vector<8x1xf32> to vector<8x8xf32>
      %52 = arith.mulf %47, %51 : vector<8x8xf32>
      %53 = vector.shape_cast %52 : vector<8x8xf32> to vector<8x8x1xf32>
      %54 = vector.broadcast %53 : vector<8x8x1xf32> to vector<8x8x256xf32>
      %55 = arith.mulf %54, %0 : vector<8x8x256xf32>
      %cst_48 = arith.constant dense<0.000000e+00> : vector<8x256xf32>
      %56 = vector.multi_reduction <add>, %55, %cst_48 [1] : vector<8x8x256xf32> to vector<8x256xf32>
      %cst_49 = arith.constant dense<0.000000e+00> : vector<8x384xf32>
      %57 = tpu.matmul %32, %5, %cst_49 {dimension_numbers = #tpu.dot_dimension_numbers<[1], [0], [0], [1], [0, 0, 1, 1], [], []>} : vector<8x128xf32>, vector<128x384xf32>, vector<8x384xf32> -> vector<8x384xf32>
      %cst_50 = arith.constant dense<0.000000e+00> : vector<8x384xf32>
      %58 = tpu.matmul %56, %6, %cst_50 {dimension_numbers = #tpu.dot_dimension_numbers<[1], [0], [0], [1], [0, 0, 1, 1], [], []>} : vector<8x256xf32>, vector<256x384xf32>, vector<8x384xf32> -> vector<8x384xf32>
      %59 = arith.addf %57, %58 : vector<8x384xf32>
      %60 = vector.broadcast %8 : vector<1x384xf32> to vector<8x384xf32>
      %61 = arith.addf %59, %60 : vector<8x384xf32>
      %cst_51 = arith.constant dense<0.000000e+00> : vector<8x384xf32>
      %62 = tpu.matmul %arg21, %7, %cst_51 {dimension_numbers = #tpu.dot_dimension_numbers<[1], [0], [0], [1], [0, 0, 1, 1], [], []>} : vector<8x128xf32>, vector<128x384xf32>, vector<8x384xf32> -> vector<8x384xf32>
      %63 = vector.broadcast %9 : vector<1x384xf32> to vector<8x384xf32>
      %64 = arith.addf %62, %63 : vector<8x384xf32>
      %65 = vector.extract_strided_slice %61 {offsets = [0, 0], sizes = [8, 128], strides = [1, 1]} : vector<8x384xf32> to vector<8x128xf32>
      %66 = vector.extract_strided_slice %64 {offsets = [0, 0], sizes = [8, 128], strides = [1, 1]} : vector<8x384xf32> to vector<8x128xf32>
      %67 = arith.addf %65, %66 : vector<8x128xf32>
      %68 = arith.negf %67 : vector<8x128xf32>
      %69 = math.exp %68 : vector<8x128xf32>
      %cst_52 = arith.constant 1.000000e+00 : f32
      %70 = vector.broadcast %cst_52 : f32 to vector<8x128xf32>
      %71 = arith.addf %70, %69 : vector<8x128xf32>
      %72 = arith.divf %70, %71 : vector<8x128xf32>
      %73 = vector.extract_strided_slice %61 {offsets = [0, 128], sizes = [8, 128], strides = [1, 1]} : vector<8x384xf32> to vector<8x128xf32>
      %74 = vector.extract_strided_slice %64 {offsets = [0, 128], sizes = [8, 128], strides = [1, 1]} : vector<8x384xf32> to vector<8x128xf32>
      %75 = arith.addf %73, %74 : vector<8x128xf32>
      %76 = arith.negf %75 : vector<8x128xf32>
      %77 = math.exp %76 : vector<8x128xf32>
      %cst_53 = arith.constant 1.000000e+00 : f32
      %78 = vector.broadcast %cst_53 : f32 to vector<8x128xf32>
      %79 = arith.addf %78, %77 : vector<8x128xf32>
      %80 = arith.divf %78, %79 : vector<8x128xf32>
      %81 = vector.extract_strided_slice %61 {offsets = [0, 256], sizes = [8, 128], strides = [1, 1]} : vector<8x384xf32> to vector<8x128xf32>
      %82 = vector.extract_strided_slice %64 {offsets = [0, 256], sizes = [8, 128], strides = [1, 1]} : vector<8x384xf32> to vector<8x128xf32>
      %83 = arith.mulf %72, %82 : vector<8x128xf32>
      %84 = arith.addf %81, %83 : vector<8x128xf32>
      %85 = math.tanh %84 : vector<8x128xf32>
      %cst_54 = arith.constant 1.000000e+00 : f32
      %86 = vector.broadcast %cst_54 : f32 to vector<8x128xf32>
      %87 = arith.subf %86, %80 : vector<8x128xf32>
      %88 = arith.mulf %87, %85 : vector<8x128xf32>
      %89 = arith.mulf %80, %arg21 : vector<8x128xf32>
      %90 = arith.addf %88, %89 : vector<8x128xf32>
      %cst_55 = arith.constant dense<0.000000e+00> : vector<8x128xf32>
      %91 = tpu.matmul %90, %10, %cst_55 {dimension_numbers = #tpu.dot_dimension_numbers<[1], [0], [0], [1], [0, 0, 1, 1], [], []>} : vector<8x128xf32>, vector<128x128xf32>, vector<8x128xf32> -> vector<8x128xf32>
      %cst_56 = arith.constant dense<0.000000e+00> : vector<8x128xf32>
      %92 = tpu.matmul %56, %11, %cst_56 {dimension_numbers = #tpu.dot_dimension_numbers<[1], [0], [0], [1], [0, 0, 1, 1], [], []>} : vector<8x256xf32>, vector<256x128xf32>, vector<8x128xf32> -> vector<8x128xf32>
      %93 = arith.addf %91, %92 : vector<8x128xf32>
      %cst_57 = arith.constant dense<0.000000e+00> : vector<8x128xf32>
      %94 = tpu.matmul %32, %12, %cst_57 {dimension_numbers = #tpu.dot_dimension_numbers<[1], [0], [0], [1], [0, 0, 1, 1], [], []>} : vector<8x128xf32>, vector<128x128xf32>, vector<8x128xf32> -> vector<8x128xf32>
      %95 = arith.addf %93, %94 : vector<8x128xf32>
      %96 = vector.broadcast %13 : vector<1x128xf32> to vector<8x128xf32>
      %97 = arith.addf %95, %96 : vector<8x128xf32>
      %98 = arith.index_cast %31 : i32 to index
      %c0_58 = arith.constant 0 : index
      %c0_59 = arith.constant 0 : index
      %99 = vector.load %arg19[%98, %c0_58, %c0_59] : memref<6x8x128xf32, #tpu.memory_space<vmem>>, vector<1x8x128xf32>
      %100 = vector.shape_cast %99 : vector<1x8x128xf32> to vector<8x128xf32>
      %101 = vector.shape_cast %97 : vector<8x128xf32> to vector<1x8x128xf32>
      tpu.vector_store %arg19[%98, %c0_58, %c0_59], %101 {strides = array<i32>} : memref<6x8x128xf32, #tpu.memory_space<vmem>>, vector<1x8x128xf32>,
      %c25_i32 = arith.constant 25 : i32
      %102 = vector.broadcast %c25_i32 : i32 to vector<8x128xi32>
      %103 = arith.cmpi slt, %21, %102 : vector<8x128xi32>
      %cst_60 = arith.constant -1.000000e+30 : f32
      %104 = vector.broadcast %cst_60 : f32 to vector<8x128xf32>
      %105 = arith.select %103, %97, %104 : vector<8x128xi1>, vector<8x128xf32>
      %cst_61 = arith.constant dense<0xFF800000> : vector<8xf32>
      %106 = vector.multi_reduction <maximumf>, %105, %cst_61 [1] : vector<8x128xf32> to vector<8xf32>
      %107 = vector.shape_cast %106 : vector<8xf32> to vector<8x1xf32>
      %108 = vector.broadcast %107 : vector<8x1xf32> to vector<8x128xf32>
      %109 = arith.cmpf oeq, %105, %108 : vector<8x128xf32>
      %c128_i32 = arith.constant 128 : i32
      %110 = vector.broadcast %c128_i32 : i32 to vector<8x128xi32>
      %111 = arith.select %109, %21, %110 : vector<8x128xi1>, vector<8x128xi32>
      %cst_62 = arith.constant dense<2147483647> : vector<8xi32>
      %112 = vector.multi_reduction <minsi>, %111, %cst_62 [1] : vector<8x128xi32> to vector<8xi32>
      %113 = vector.shape_cast %112 : vector<8xi32> to vector<8x1xi32>
      %114 = vector.broadcast %113 : vector<8x1xi32> to vector<8x128xi32>
      %115 = arith.cmpi eq, %21, %114 : vector<8x128xi32>
      %116 = arith.extui %115 : vector<8x128xi1> to vector<8x128xi32>
      %117 = arith.sitofp %116 : vector<8x128xi32> to vector<8x128xf32>
      %118 = arith.index_cast %31 : i32 to index
      %119 = memref.load %arg0[%118] : memref<6xf32, #tpu.memory_space<smem>>
      %120 = arith.index_cast %31 : i32 to index
      %c0_63 = arith.constant 0 : index
      %c0_64 = arith.constant 0 : index
      %121 = vector.load %arg4[%120, %c0_63, %c0_64] : memref<6x8x128xf32, #tpu.memory_space<vmem>>, vector<1x8x128xf32>
      %122 = vector.shape_cast %121 : vector<1x8x128xf32> to vector<8x128xf32>
      %123 = vector.broadcast %119 : f32 to vector<8x128xf32>
      %124 = arith.mulf %123, %122 : vector<8x128xf32>
      %cst_65 = arith.constant 1.000000e+00 : f32
      %125 = arith.subf %cst_65, %119 : f32
      %126 = vector.broadcast %125 : f32 to vector<8x128xf32>
      %127 = arith.mulf %126, %117 : vector<8x128xf32>
      %128 = arith.addf %124, %127 : vector<8x128xf32>
      scf.yield %90, %128 : vector<8x128xf32>, vector<8x128xf32>
    }
    %c5_i32_41 = arith.constant 5 : i32
    return
  }
}

</mosaic_0001>

<llo_original>
// kernel: forward.2
$region0: #{forward.2}
  #allocation0 [shape = 'u32[]', space=smem, size = 0x4, offset = 0x4, fixed_abs, tag = 'smem constant byte address 0x4 - core index']
  #allocation1 [shape = 'u32[144,128]{1,0:T(1,128)}', space=vmem, size = 0x12000, scoped, tag = 'internal scratch']
  %s0 = inlined_call_operand.vmem [shape: f32[8,8,128], index: 0, kind: input, shape index: {}]
  %s1 = inlined_call_operand.vmem [shape: f32[128,384], index: 1, kind: input, shape index: {}]
  %s2 = inlined_call_operand.hbm [shape: f32[128,384], index: 2, kind: input, shape index: {}]
  %s3 = inlined_call_operand.vmem [shape: f32[1,384], index: 3, kind: input, shape index: {}]
  %s4 = inlined_call_operand.vmem [shape: f32[1,384], index: 4, kind: input, shape index: {}]
  %s5 = inlined_call_operand.hbm [shape: f32[128,384], index: 5, kind: input, shape index: {}]
  %s6 = inlined_call_operand.hbm [shape: f32[128,384], index: 6, kind: input, shape index: {}]
  %s7 = inlined_call_operand.vmem [shape: f32[1,384], index: 7, kind: input, shape index: {}]
  %s8 = inlined_call_operand.vmem [shape: f32[1,384], index: 8, kind: input, shape index: {}]
  %s9 = inlined_call_operand.hbm [shape: f32[128,128], index: 9, kind: input, shape index: {}]
  %s10 = inlined_call_operand.hbm [shape: f32[128,128], index: 10, kind: input, shape index: {}]
  %s11 = inlined_call_operand.vmem [shape: f32[1,128], index: 11, kind: input, shape index: {}]
  %s12 = inlined_call_operand.vmem [shape: f32[8,8,128], index: 12, kind: output, shape index: {0}]
  %s13 = inlined_call_operand.vmem [shape: f32[8,8,128], index: 13, kind: output, shape index: {1}]
  %s14 = inlined_call_operand.vmem [shape: f32[8,128], index: 14, kind: output, shape index: {2}]
  %15 = xla_tuple %s12, %s13, %s14
  %s16 = sld [smem:[#allocation0]]
  $region108: #{forward.2} parent=0
    _
  %s18 = ssub.s32 1, %s16
  %s19 = scalar_select 0, %s18, %s16
  $region1: #{forward.2} parent=0
    #allocation2 [shape = 'u8[196608]{0}', space=vmem, size = 0x30000, scoped, tag = 'input window, operand 2, single buffered']
    #allocation3 [shape = 's32[1]{0}', space=sflag, size = 0x4, scoped, tag = 'scoped memory for forward.2']
    #allocation4 [shape = 'u8[196608]{0}', space=vmem, size = 0x30000, scoped, tag = 'input window, operand 5, single buffered']
    #allocation5 [shape = 's32[1]{0}', space=sflag, size = 0x4, scoped, tag = 'scoped memory for forward.2']
    #allocation6 [shape = 'u8[196608]{0}', space=vmem, size = 0x30000, scoped, tag = 'input window, operand 6, single buffered']
    #allocation7 [shape = 'u8[65536]{0}', space=vmem, size = 0x10000, scoped, tag = 'input window, operand 9, single buffered']
    #allocation8 [shape = 's32[1]{0}', space=sflag, size = 0x4, scoped, tag = 'scoped memory for forward.2']
    #allocation9 [shape = 'u8[65536]{0}', space=vmem, size = 0x10000, scoped, tag = 'input window, operand 10, single buffered']
    %20 = vsyncpa [#allocation3], 0
    %21 = vsyncpa [#allocation5], 0
    %22 = vsyncpa [#allocation8], 0
    // Predicated region
    $region2: #{forward.2} parent=1 // pred_check
      _
    $region3: #{forward.2} parent=1 // pred_check_branch
      %24 = sbr.rel (0) target = $region5
    $region4: #{forward.2} parent=1 // pred_region
      _
    $region5: #{forward.2} parent=1 // pred_fallthru
      _
    // Predicated region
    $region6: #{forward.2} parent=1 // pred_check
      _
    $region7: #{forward.2} parent=1 // pred_check_branch
      %26 = sbr.rel (0) target = $region9
    $region8: #{forward.2} parent=1 // pred_region
      _
    $region9: #{forward.2} parent=1 // pred_fallthru
      _
    // Predicated region
    $region10: #{forward.2} parent=1 // pred_check
      _
    $region11: #{forward.2} parent=1 // pred_check_branch
      %28 = sbr.rel (0) target = $region13
    $region12: #{forward.2} parent=1 // pred_region
      %s30 = ssub.s32 6144, 6144
      %31 = vsyncadd [#allocation3], %s30
      %s32 = sshll.u32 [#allocation2], 4
      %s33 = int_to_ptr.vmem [resolvable:$true] %s32
      %38 = dma.hbm_to_vmem [thread:$0]  %s2, 6144, %s33, [#allocation3], 384, 384, 24
    $region13: #{forward.2} parent=1 // pred_fallthru
      _
    // Predicated region
    $region14: #{forward.2} parent=1 // pred_check
      _
    $region15: #{forward.2} parent=1 // pred_check_branch
      %40 = sbr.rel (0) target = $region17
    $region16: #{forward.2} parent=1 // pred_region
      _
    $region17: #{forward.2} parent=1 // pred_fallthru
      _
    // Predicated region
    $region18: #{forward.2} parent=1 // pred_check
      _
    $region19: #{forward.2} parent=1 // pred_check_branch
      %42 = sbr.rel (0) target = $region21
    $region20: #{forward.2} parent=1 // pred_region
      _
    $region21: #{forward.2} parent=1 // pred_fallthru
      _
    // Predicated region
    $region22: #{forward.2} parent=1 // pred_check
      _
    $region23: #{forward.2} parent=1 // pred_check_branch
      %44 = sbr.rel (0) target = $region25
    $region24: #{forward.2} parent=1 // pred_region
      %s46 = ssub.s32 6144, 6144
      %47 = vsyncadd [#allocation5], %s46
      %s48 = sshll.u32 [#allocation4], 4
      %s49 = int_to_ptr.vmem [resolvable:$true] %s48
      %54 = dma.hbm_to_vmem [thread:$0]  %s5, 6144, %s49, [#allocation5], 384, 384, 24
    $region25: #{forward.2} parent=1 // pred_fallthru
      _
    // Predicated region
    $region26: #{forward.2} parent=1 // pred_check
      _
    $region27: #{forward.2} parent=1 // pred_check_branch
      %56 = sbr.rel (0) target = $region29
    $region28: #{forward.2} parent=1 // pred_region
      %s58 = ssub.s32 6144, 6144
      %59 = vsyncadd [#allocation5], %s58
      %s60 = sshll.u32 [#allocation6], 4
      %s61 = int_to_ptr.vmem [resolvable:$true] %s60
      %66 = dma.hbm_to_vmem [thread:$0]  %s6, 6144, %s61, [#allocation5], 384, 384, 24
    $region29: #{forward.2} parent=1 // pred_fallthru
      _
    // Predicated region
    $region30: #{forward.2} parent=1 // pred_check
      _
    $region31: #{forward.2} parent=1 // pred_check_branch
      %68 = sbr.rel (0) target = $region33
    $region32: #{forward.2} parent=1 // pred_region
      _
    $region33: #{forward.2} parent=1 // pred_fallthru
      _
    // Predicated region
    $region34: #{forward.2} parent=1 // pred_check
      _
    $region35: #{forward.2} parent=1 // pred_check_branch
      %70 = sbr.rel (0) target = $region37
    $region36: #{forward.2} parent=1 // pred_region
      _
    $region37: #{forward.2} parent=1 // pred_fallthru
      _
    // Predicated region
    $region38: #{forward.2} parent=1 // pred_check
      _
    $region39: #{forward.2} parent=1 // pred_check_branch
      %72 = sbr.rel (0) target = $region41
    $region40: #{forward.2} parent=1 // pred_region
      %s74 = ssub.s32 2048, 2048
      %75 = vsyncadd [#allocation8], %s74
      %s76 = sshll.u32 [#allocation7], 4
      %s77 = int_to_ptr.vmem [resolvable:$true] %s76
      %82 = dma.hbm_to_vmem [thread:$0]  %s9, 2048, %s77, [#allocation8], 128, 128, 8
    $region41: #{forward.2} parent=1 // pred_fallthru
      _
    // Predicated region
    $region42: #{forward.2} parent=1 // pred_check
      _
    $region43: #{forward.2} parent=1 // pred_check_branch
      %84 = sbr.rel (0) target = $region45
    $region44: #{forward.2} parent=1 // pred_region
      %s86 = ssub.s32 2048, 2048
      %87 = vsyncadd [#allocation8], %s86
      %s88 = sshll.u32 [#allocation9], 4
      %s89 = int_to_ptr.vmem [resolvable:$true] %s88
      %94 = dma.hbm_to_vmem [thread:$0]  %s10, 2048, %s89, [#allocation8], 128, 128, 8
    $region45: #{forward.2} parent=1 // pred_fallthru
      _
    // Predicated region
    $region46: #{forward.2} parent=1 // pred_check
      _
    $region47: #{forward.2} parent=1 // pred_check_branch
      %96 = sbr.rel (0) target = $region49
    $region48: #{forward.2} parent=1 // pred_region
      _
    $region49: #{forward.2} parent=1 // pred_fallthru
      _
    // Predicated region
    $region50: #{forward.2} parent=1 // pred_check
      _
    $region51: #{forward.2} parent=1 // pred_check_branch
      %98 = sbr.rel (0) target = $region53
    $region52: #{forward.2} parent=1 // pred_region
      %99 = dma.done [#allocation3], 6144
    $region53: #{forward.2} parent=1 // pred_fallthru
      _
    // Predicated region
    $region54: #{forward.2} parent=1 // pred_check
      _
    $region55: #{forward.2} parent=1 // pred_check_branch
      %101 = sbr.rel (0) target = $region57
    $region56: #{forward.2} parent=1 // pred_region
      %102 = dma.done [#allocation5], 6144
    $region57: #{forward.2} parent=1 // pred_fallthru
      _
    // Predicated region
    $region58: #{forward.2} parent=1 // pred_check
      _
    $region59: #{forward.2} parent=1 // pred_check_branch
      %104 = sbr.rel (0) target = $region61
    $region60: #{forward.2} parent=1 // pred_region
      %105 = dma.done [#allocation5], 6144
    $region61: #{forward.2} parent=1 // pred_fallthru
      _
    // Predicated region
    $region62: #{forward.2} parent=1 // pred_check
      _
    $region63: #{forward.2} parent=1 // pred_check_branch
      %107 = sbr.rel (0) target = $region65
    $region64: #{forward.2} parent=1 // pred_region
      %108 = dma.done [#allocation8], 2048
    $region65: #{forward.2} parent=1 // pred_fallthru
      _
    // Predicated region
    $region66: #{forward.2} parent=1 // pred_check
      _
    $region67: #{forward.2} parent=1 // pred_check_branch
      %110 = sbr.rel (0) target = $region69
    $region68: #{forward.2} parent=1 // pred_region
      %111 = dma.done [#allocation8], 2048
    $region69: #{forward.2} parent=1 // pred_fallthru
      _
    %v112 = vld [vmem:[%s1] sm:$0xff]
    %v113 = vld [vmem:[%s1 + $0x8] sm:$0xff]
    %v114 = vld [vmem:[%s1 + $0x10] sm:$0xff]
    %v115 = vld [vmem:[%s1 + $0x18] sm:$0xff]
    %v116 = vld [vmem:[%s1 + $0x20] sm:$0xff]
    %v117 = vld [vmem:[%s1 + $0x28] sm:$0xff]
    %v118 = vld [vmem:[%s1 + $0x30] sm:$0xff]
    %v119 = vld [vmem:[%s1 + $0x38] sm:$0xff]
    %v120 = vld [vmem:[%s1 + $0x40] sm:$0xff]
    %v121 = vld [vmem:[%s1 + $0x48] sm:$0xff]
    %v122 = vld [vmem:[%s1 + $0x50] sm:$0xff]
    %v123 = vld [vmem:[%s1 + $0x58] sm:$0xff]
    %v124 = vld [vmem:[%s1 + $0x60] sm:$0xff]
    %v125 = vld [vmem:[%s1 + $0x68] sm:$0xff]
    %v126 = vld [vmem:[%s1 + $0x70] sm:$0xff]
    %v127 = vld [vmem:[%s1 + $0x78] sm:$0xff]
    %v128 = vld [vmem:[%s1 + $0x80] sm:$0xff]
    %v129 = vld [vmem:[%s1 + $0x88] sm:$0xff]
    %v130 = vld [vmem:[%s1 + $0x90] sm:$0xff]
    %v131 = vld [vmem:[%s1 + $0x98] sm:$0xff]
    %v132 = vld [vmem:[%s1 + $0xa0] sm:$0xff]
    %v133 = vld [vmem:[%s1 + $0xa8] sm:$0xff]
    %v134 = vld [vmem:[%s1 + $0xb0] sm:$0xff]
    %v135 = vld [vmem:[%s1 + $0xb8] sm:$0xff]
    %v136 = vld [vmem:[%s1 + $0xc0] sm:$0xff]
    %v137 = vld [vmem:[%s1 + $0xc8] sm:$0xff]
    %v138 = vld [vmem:[%s1 + $0xd0] sm:$0xff]
    %v139 = vld [vmem:[%s1 + $0xd8] sm:$0xff]
    %v140 = vld [vmem:[%s1 + $0xe0] sm:$0xff]
    %v141 = vld [vmem:[%s1 + $0xe8] sm:$0xff]
    %v142 = vld [vmem:[%s1 + $0xf0] sm:$0xff]
    %v143 = vld [vmem:[%s1 + $0xf8] sm:$0xff]
    %v144 = vld [vmem:[%s1 + $0x100] sm:$0xff]
    %v145 = vld [vmem:[%s1 + $0x108] sm:$0xff]
    %v146 = vld [vmem:[%s1 + $0x110] sm:$0xff]
    %v147 = vld [vmem:[%s1 + $0x118] sm:$0xff]
    %v148 = vld [vmem:[%s1 + $0x120] sm:$0xff]
    %v149 = vld [vmem:[%s1 + $0x128] sm:$0xff]
    %v150 = vld [vmem:[%s1 + $0x130] sm:$0xff]
    %v151 = vld [vmem:[%s1 + $0x138] sm:$0xff]
    %v152 = vld [vmem:[%s1 + $0x140] sm:$0xff]
    %v153 = vld [vmem:[%s1 + $0x148] sm:$0xff]
    %v154 = vld [vmem:[%s1 + $0x150] sm:$0xff]
    %v155 = vld [vmem:[%s1 + $0x158] sm:$0xff]
    %v156 = vld [vmem:[%s1 + $0x160] sm:$0xff]
    %v157 = vld [vmem:[%s1 + $0x168] sm:$0xff]
    %v158 = vld [vmem:[%s1 + $0x170] sm:$0xff]
    %v159 = vld [vmem:[%s1 + $0x178] sm:$0xff]
    %v160 = vld [vmem:[#allocation2] sm:$0xff]
    %v161 = vld [vmem:[#allocation2 + $0x8] sm:$0xff]
    %v162 = vld [vmem:[#allocation2 + $0x10] sm:$0xff]
    %v163 = vld [vmem:[#allocation2 + $0x18] sm:$0xff]
    %v164 = vld [vmem:[#allocation2 + $0x20] sm:$0xff]
    %v165 = vld [vmem:[#allocation2 + $0x28] sm:$0xff]
    %v166 = vld [vmem:[#allocation2 + $0x30] sm:$0xff]
    %v167 = vld [vmem:[#allocation2 + $0x38] sm:$0xff]
    %v168 = vld [vmem:[#allocation2 + $0x40] sm:$0xff]
    %v169 = vld [vmem:[#allocation2 + $0x48] sm:$0xff]
    %v170 = vld [vmem:[#allocation2 + $0x50] sm:$0xff]
    %v171 = vld [vmem:[#allocation2 + $0x58] sm:$0xff]
    %v172 = vld [vmem:[#allocation2 + $0x60] sm:$0xff]
    %v173 = vld [vmem:[#allocation2 + $0x68] sm:$0xff]
    %v174 = vld [vmem:[#allocation2 + $0x70] sm:$0xff]
    %v175 = vld [vmem:[#allocation2 + $0x78] sm:$0xff]
    %v176 = vld [vmem:[#allocation2 + $0x80] sm:$0xff]
    %v177 = vld [vmem:[#allocation2 + $0x88] sm:$0xff]
    %v178 = vld [vmem:[#allocation2 + $0x90] sm:$0xff]
    %v179 = vld [vmem:[#allocation2 + $0x98] sm:$0xff]
    %v180 = vld [vmem:[#allocation2 + $0xa0] sm:$0xff]
    %v181 = vld [vmem:[#allocation2 + $0xa8] sm:$0xff]
    %v182 = vld [vmem:[#allocation2 + $0xb0] sm:$0xff]
    %v183 = vld [vmem:[#allocation2 + $0xb8] sm:$0xff]
    %v184 = vld [vmem:[#allocation2 + $0xc0] sm:$0xff]
    %v185 = vld [vmem:[#allocation2 + $0xc8] sm:$0xff]
    %v186 = vld [vmem:[#allocation2 + $0xd0] sm:$0xff]
    %v187 = vld [vmem:[#allocation2 + $0xd8] sm:$0xff]
    %v188 = vld [vmem:[#allocation2 + $0xe0] sm:$0xff]
    %v189 = vld [vmem:[#allocation2 + $0xe8] sm:$0xff]
    %v190 = vld [vmem:[#allocation2 + $0xf0] sm:$0xff]
    %v191 = vld [vmem:[#allocation2 + $0xf8] sm:$0xff]
    %v192 = vld [vmem:[#allocation2 + $0x100] sm:$0xff]
    %v193 = vld [vmem:[#allocation2 + $0x108] sm:$0xff]
    %v194 = vld [vmem:[#allocation2 + $0x110] sm:$0xff]
    %v195 = vld [vmem:[#allocation2 + $0x118] sm:$0xff]
    %v196 = vld [vmem:[#allocation2 + $0x120] sm:$0xff]
    %v197 = vld [vmem:[#allocation2 + $0x128] sm:$0xff]
    %v198 = vld [vmem:[#allocation2 + $0x130] sm:$0xff]
    %v199 = vld [vmem:[#allocation2 + $0x138] sm:$0xff]
    %v200 = vld [vmem:[#allocation2 + $0x140] sm:$0xff]
    %v201 = vld [vmem:[#allocation2 + $0x148] sm:$0xff]
    %v202 = vld [vmem:[#allocation2 + $0x150] sm:$0xff]
    %v203 = vld [vmem:[#allocation2 + $0x158] sm:$0xff]
    %v204 = vld [vmem:[#allocation2 + $0x160] sm:$0xff]
    %v205 = vld [vmem:[#allocation2 + $0x168] sm:$0xff]
    %v206 = vld [vmem:[#allocation2 + $0x170] sm:$0xff]
    %v207 = vld [vmem:[#allocation2 + $0x178] sm:$0xff]
    %v208 = vld [vmem:[%s3] sm:$0x7]
    %v209 = vld [vmem:[%s4] sm:$0x7]
    %v210 = vld [vmem:[#allocation4] sm:$0xff]
    %v211 = vld [vmem:[#allocation4 + $0x8] sm:$0xff]
    %v212 = vld [vmem:[#allocation4 + $0x10] sm:$0xff]
    %v213 = vld [vmem:[#allocation4 + $0x18] sm:$0xff]
    %v214 = vld [vmem:[#allocation4 + $0x20] sm:$0xff]
    %v215 = vld [vmem:[#allocation4 + $0x28] sm:$0xff]
    %v216 = vld [vmem:[#allocation4 + $0x30] sm:$0xff]
    %v217 = vld [vmem:[#allocation4 + $0x38] sm:$0xff]
    %v218 = vld [vmem:[#allocation4 + $0x40] sm:$0xff]
    %v219 = vld [vmem:[#allocation4 + $0x48] sm:$0xff]
    %v220 = vld [vmem:[#allocation4 + $0x50] sm:$0xff]
    %v221 = vld [vmem:[#allocation4 + $0x58] sm:$0xff]
    %v222 = vld [vmem:[#allocation4 + $0x60] sm:$0xff]
    %v223 = vld [vmem:[#allocation4 + $0x68] sm:$0xff]
    %v224 = vld [vmem:[#allocation4 + $0x70] sm:$0xff]
    %v225 = vld [vmem:[#allocation4 + $0x78] sm:$0xff]
    %v226 = vld [vmem:[#allocation4 + $0x80] sm:$0xff]
    %v227 = vld [vmem:[#allocation4 + $0x88] sm:$0xff]
    %v228 = vld [vmem:[#allocation4 + $0x90] sm:$0xff]
    %v229 = vld [vmem:[#allocation4 + $0x98] sm:$0xff]
    %v230 = vld [vmem:[#allocation4 + $0xa0] sm:$0xff]
    %v231 = vld [vmem:[#allocation4 + $0xa8] sm:$0xff]
    %v232 = vld [vmem:[#allocation4 + $0xb0] sm:$0xff]
    %v233 = vld [vmem:[#allocation4 + $0xb8] sm:$0xff]
    %v234 = vld [vmem:[#allocation4 + $0xc0] sm:$0xff]
    %v235 = vld [vmem:[#allocation4 + $0xc8] sm:$0xff]
    %v236 = vld [vmem:[#allocation4 + $0xd0] sm:$0xff]
    %v237 = vld [vmem:[#allocation4 + $0xd8] sm:$0xff]
    %v238 = vld [vmem:[#allocation4 + $0xe0] sm:$0xff]
    %v239 = vld [vmem:[#allocation4 + $0xe8] sm:$0xff]
    %v240 = vld [vmem:[#allocation4 + $0xf0] sm:$0xff]
    %v241 = vld [vmem:[#allocation4 + $0xf8] sm:$0xff]
    %v242 = vld [vmem:[#allocation4 + $0x100] sm:$0xff]
    %v243 = vld [vmem:[#allocation4 + $0x108] sm:$0xff]
    %v244 = vld [vmem:[#allocation4 + $0x110] sm:$0xff]
    %v245 = vld [vmem:[#allocation4 + $0x118] sm:$0xff]
    %v246 = vld [vmem:[#allocation4 + $0x120] sm:$0xff]
    %v247 = vld [vmem:[#allocation4 + $0x128] sm:$0xff]
    %v248 = vld [vmem:[#allocation4 + $0x130] sm:$0xff]
    %v249 = vld [vmem:[#allocation4 + $0x138] sm:$0xff]
    %v250 = vld [vmem:[#allocation4 + $0x140] sm:$0xff]
    %v251 = vld [vmem:[#allocation4 + $0x148] sm:$0xff]
    %v252 = vld [vmem:[#allocation4 + $0x150] sm:$0xff]
    %v253 = vld [vmem:[#allocation4 + $0x158] sm:$0xff]
    %v254 = vld [vmem:[#allocation4 + $0x160] sm:$0xff]
    %v255 = vld [vmem:[#allocation4 + $0x168] sm:$0xff]
    %v256 = vld [vmem:[#allocation4 + $0x170] sm:$0xff]
    %v257 = vld [vmem:[#allocation4 + $0x178] sm:$0xff]
    %v258 = vld [vmem:[#allocation6] sm:$0xff]
    %v259 = vld [vmem:[#allocation6 + $0x8] sm:$0xff]
    %v260 = vld [vmem:[#allocation6 + $0x10] sm:$0xff]
    %v261 = vld [vmem:[#allocation6 + $0x18] sm:$0xff]
    %v262 = vld [vmem:[#allocation6 + $0x20] sm:$0xff]
    %v263 = vld [vmem:[#allocation6 + $0x28] sm:$0xff]
    %v264 = vld [vmem:[#allocation6 + $0x30] sm:$0xff]
    %v265 = vld [vmem:[#allocation6 + $0x38] sm:$0xff]
    %v266 = vld [vmem:[#allocation6 + $0x40] sm:$0xff]
    %v267 = vld [vmem:[#allocation6 + $0x48] sm:$0xff]
    %v268 = vld [vmem:[#allocation6 + $0x50] sm:$0xff]
    %v269 = vld [vmem:[#allocation6 + $0x58] sm:$0xff]
    %v270 = vld [vmem:[#allocation6 + $0x60] sm:$0xff]
    %v271 = vld [vmem:[#allocation6 + $0x68] sm:$0xff]
    %v272 = vld [vmem:[#allocation6 + $0x70] sm:$0xff]
    %v273 = vld [vmem:[#allocation6 + $0x78] sm:$0xff]
    %v274 = vld [vmem:[#allocation6 + $0x80] sm:$0xff]
    %v275 = vld [vmem:[#allocation6 + $0x88] sm:$0xff]
    %v276 = vld [vmem:[#allocation6 + $0x90] sm:$0xff]
    %v277 = vld [vmem:[#allocation6 + $0x98] sm:$0xff]
    %v278 = vld [vmem:[#allocation6 + $0xa0] sm:$0xff]
    %v279 = vld [vmem:[#allocation6 + $0xa8] sm:$0xff]
    %v280 = vld [vmem:[#allocation6 + $0xb0] sm:$0xff]
    %v281 = vld [vmem:[#allocation6 + $0xb8] sm:$0xff]
    %v282 = vld [vmem:[#allocation6 + $0xc0] sm:$0xff]
    %v283 = vld [vmem:[#allocation6 + $0xc8] sm:$0xff]
    %v284 = vld [vmem:[#allocation6 + $0xd0] sm:$0xff]
    %v285 = vld [vmem:[#allocation6 + $0xd8] sm:$0xff]
    %v286 = vld [vmem:[#allocation6 + $0xe0] sm:$0xff]
    %v287 = vld [vmem:[#allocation6 + $0xe8] sm:$0xff]
    %v288 = vld [vmem:[#allocation6 + $0xf0] sm:$0xff]
    %v289 = vld [vmem:[#allocation6 + $0xf8] sm:$0xff]
    %v290 = vld [vmem:[#allocation6 + $0x100] sm:$0xff]
    %v291 = vld [vmem:[#allocation6 + $0x108] sm:$0xff]
    %v292 = vld [vmem:[#allocation6 + $0x110] sm:$0xff]
    %v293 = vld [vmem:[#allocation6 + $0x118] sm:$0xff]
    %v294 = vld [vmem:[#allocation6 + $0x120] sm:$0xff]
    %v295 = vld [vmem:[#allocation6 + $0x128] sm:$0xff]
    %v296 = vld [vmem:[#allocation6 + $0x130] sm:$0xff]
    %v297 = vld [vmem:[#allocation6 + $0x138] sm:$0xff]
    %v298 = vld [vmem:[#allocation6 + $0x140] sm:$0xff]
    %v299 = vld [vmem:[#allocation6 + $0x148] sm:$0xff]
    %v300 = vld [vmem:[#allocation6 + $0x150] sm:$0xff]
    %v301 = vld [vmem:[#allocation6 + $0x158] sm:$0xff]
    %v302 = vld [vmem:[#allocation6 + $0x160] sm:$0xff]
    %v303 = vld [vmem:[#allocation6 + $0x168] sm:$0xff]
    %v304 = vld [vmem:[#allocation6 + $0x170] sm:$0xff]
    %v305 = vld [vmem:[#allocation6 + $0x178] sm:$0xff]
    %v306 = vld [vmem:[%s7] sm:$0x7]
    %v307 = vld [vmem:[%s8] sm:$0x7]
    loop: start=0, step=1, limit=8
    $region70: #{forward.2} parent=1 // loop_pre_header
      _
    $region71: #{forward.2} parent=1 // loop_header
      %s309 = sphi 0, %s313
      %p310 = scmp.ge.s32.totalorder %s309, 8
      %v314 = vphi 0.0, %v652
    $region72: #{forward.2} parent=1 // loop_header_branch
      %312 = sbr.rel (%p310) target = $region76
    $region73: #{forward.2} parent=1 // loop_body
      %s315 = smul.u32 %s309, 8
      %s316 = scalar_lea.vmem %s0, %s315
      %v317 = vld [vmem:[%s316] sm:$0xff]
      %v319 = vlaneseq
      %v320 = vshrl.u32 %v319, 7
      %v321 = vsub.s32 0, %v320
      %v322 = vrot.slane %v208, %v321
      %v323 = vlaneseq
      %v324 = vshrl.u32 %v323, 7
      %v325 = vsub.s32 1, %v324
      %v326 = vrot.slane %v208, %v325
      %v327 = vlaneseq
      %v328 = vshrl.u32 %v327, 7
      %v329 = vsub.s32 2, %v328
      %v330 = vrot.slane %v208, %v329
      %334 = vmatprep.subr.mxu0 %v113
      %335 = vmatpush1.msra.mxu0 %v112
      %336 = vmatprep.subr.mxu0 %v116
      %337 = vmatpush1.msra.mxu0 %v115
      %338 = vmatprep.subr.mxu0 %v119
      %339 = vmatpush1.msra.mxu0 %v118
      %340 = vmatprep.subr.mxu0 %v122
      %341 = vmatpush1.msra.mxu0 %v121
      %342 = vmatprep.subr.mxu0 %v125
      %343 = vmatpush1.msra.mxu0 %v124
      %344 = vmatprep.subr.mxu0 %v128
      %345 = vmatpush1.msra.mxu0 %v127
      %346 = vmatprep.subr.mxu0 %v131
      %347 = vmatpush1.msra.mxu0 %v130
      %348 = vmatprep.subr.mxu0 %v134
      %349 = vmatpush1.msra.mxu0 %v133
      %350 = vmatprep.subr.mxu0 %v137
      %351 = vmatpush1.msra.mxu0 %v136
      %352 = vmatprep.subr.mxu0 %v140
      %353 = vmatpush1.msra.mxu0 %v139
      %354 = vmatprep.subr.mxu0 %v143
      %355 = vmatpush1.msra.mxu0 %v142
      %356 = vmatprep.subr.mxu0 %v146
      %357 = vmatpush1.msra.mxu0 %v145
      %358 = vmatprep.subr.mxu0 %v149
      %359 = vmatpush1.msra.mxu0 %v148
      %360 = vmatprep.subr.mxu0 %v152
      %361 = vmatpush1.msra.mxu0 %v151
      %362 = vmatprep.subr.mxu0 %v155
      %363 = vmatpush1.msra.mxu0 %v154
      %364 = vmatprep.subr.mxu0 %v158
      %365 = vmatpush1.msra.mxu0 %v157
      %366 = vmatprep.subr.mxu0 0.0
      %367 = vmatpush1.msra.mxu0 0.0
      %368 = vmatprep.subr.mxu0 0.0
      %369 = vmatpush1.msra.mxu0 0.0
      %370 = vmatprep.subr.mxu0 0.0
      %371 = vmatpush1.msra.mxu0 0.0
      %372 = vmatprep.subr.mxu0 0.0
      %373 = vmatpush1.msra.mxu0 0.0
      %374 = vmatprep.subr.mxu0 0.0
      %375 = vmatpush1.msra.mxu0 0.0
      %376 = vmatprep.subr.mxu0 0.0
      %377 = vmatpush1.msra.mxu0 0.0
      %378 = vmatprep.subr.mxu0 0.0
      %379 = vmatpush1.msra.mxu0 0.0
      %380 = vmatprep.subr.mxu0 0.0
      %381 = vmatpush1.msra.mxu0 0.0
      %382 = vmatprep.subr.mxu0 0.0
      %383 = vmatpush1.msra.mxu0 0.0
      %384 = vmatprep.subr.mxu0 0.0
      %385 = vmatpush1.msra.mxu0 0.0
      %386 = vmatprep.subr.mxu0 0.0
      %387 = vmatpush1.msra.mxu0 0.0
      %388 = vmatprep.subr.mxu0 0.0
      %389 = vmatpush1.msra.mxu0 0.0
      %390 = vmatprep.subr.mxu0 0.0
      %391 = vmatpush1.msra.mxu0 0.0
      %392 = vmatprep.subr.mxu0 0.0
      %393 = vmatpush1.msra.mxu0 0.0
      %394 = vmatprep.subr.mxu0 0.0
      %395 = vmatpush1.msra.mxu0 0.0
      %396 = vmatprep.subr.mxu0 0.0
      %397 = vmatpush1.msra.mxu0 0.0
      %398 = vmatprep.mubr.f32.mxu0 0.0
      %399 = vmatmul.mubr.f32.gmra.mrb[0].mxu0 %v317
      %v400 = vpop.f32.mrb[0].mxu0
      %v401 = vadd.f32 %v322, %v400
      %v402 = vpop.f32.mrb[0].mxu0
      %v403 = vadd.f32 %v326, %v402
      %404 = vdwg.mxu0
      %405 = vmatprep.subr.mxu0 0.0
      %406 = vmatpush1.msra.mxu0 %v114
      %407 = vmatprep.subr.mxu0 0.0
      %408 = vmatpush1.msra.mxu0 %v117
      %409 = vmatprep.subr.mxu0 0.0
      %410 = vmatpush1.msra.mxu0 %v120
      %411 = vmatprep.subr.mxu0 0.0
      %412 = vmatpush1.msra.mxu0 %v123
      %413 = vmatprep.subr.mxu0 0.0
      %414 = vmatpush1.msra.mxu0 %v126
      %415 = vmatprep.subr.mxu0 0.0
      %416 = vmatpush1.msra.mxu0 %v129
      %417 = vmatprep.subr.mxu0 0.0
      %418 = vmatpush1.msra.mxu0 %v132
      %419 = vmatprep.subr.mxu0 0.0
      %420 = vmatpush1.msra.mxu0 %v135
      %421 = vmatprep.subr.mxu0 0.0
      %422 = vmatpush1.msra.mxu0 %v138
      %423 = vmatprep.subr.mxu0 0.0
      %424 = vmatpush1.msra.mxu0 %v141
      %425 = vmatprep.subr.mxu0 0.0
      %426 = vmatpush1.msra.mxu0 %v144
      %427 = vmatprep.subr.mxu0 0.0
      %428 = vmatpush1.msra.mxu0 %v147
      %429 = vmatprep.subr.mxu0 0.0
      %430 = vmatpush1.msra.mxu0 %v150
      %431 = vmatprep.subr.mxu0 0.0
      %432 = vmatpush1.msra.mxu0 %v153
      %433 = vmatprep.subr.mxu0 0.0
      %434 = vmatpush1.msra.mxu0 %v156
      %435 = vmatprep.subr.mxu0 0.0
      %436 = vmatpush1.msra.mxu0 %v159
      %437 = vmatprep.subr.mxu0 0.0
      %438 = vmatpush1.msra.mxu0 0.0
      %439 = vmatprep.subr.mxu0 0.0
      %440 = vmatpush1.msra.mxu0 0.0
      %441 = vmatprep.subr.mxu0 0.0
      %442 = vmatpush1.msra.mxu0 0.0
      %443 = vmatprep.subr.mxu0 0.0
      %444 = vmatpush1.msra.mxu0 0.0
      %445 = vmatprep.subr.mxu0 0.0
      %446 = vmatpush1.msra.mxu0 0.0
      %447 = vmatprep.subr.mxu0 0.0
      %448 = vmatpush1.msra.mxu0 0.0
      %449 = vmatprep.subr.mxu0 0.0
      %450 = vmatpush1.msra.mxu0 0.0
      %451 = vmatprep.subr.mxu0 0.0
      %452 = vmatpush1.msra.mxu0 0.0
      %453 = vmatprep.subr.mxu0 0.0
      %454 = vmatpush1.msra.mxu0 0.0
      %455 = vmatprep.subr.mxu0 0.0
      %456 = vmatpush1.msra.mxu0 0.0
      %457 = vmatprep.subr.mxu0 0.0
      %458 = vmatpush1.msra.mxu0 0.0
      %459 = vmatprep.subr.mxu0 0.0
      %460 = vmatpush1.msra.mxu0 0.0
      %461 = vmatprep.subr.mxu0 0.0
      %462 = vmatpush1.msra.mxu0 0.0
      %463 = vmatprep.subr.mxu0 0.0
      %464 = vmatpush1.msra.mxu0 0.0
      %465 = vmatprep.subr.mxu0 0.0
      %466 = vmatpush1.msra.mxu0 0.0
      %467 = vmatprep.subr.mxu0 0.0
      %468 = vmatpush1.msra.mxu0 0.0
      %469 = vmatprep.mubr.f32.mxu0 0.0
      %470 = vmatmul.mubr.f32.gmra.mrb[0].mxu0 %v317
      %v471 = vpop.f32.mrb[0].mxu0
      %v472 = vadd.f32 %v330, %v471
      %v473 = vpop.f32.mrb[0].mxu0
      %474 = vdwg.mxu0
      %v476 = vlaneseq
      %v477 = vshrl.u32 %v476, 7
      %v478 = vsub.s32 0, %v477
      %v479 = vrot.slane %v209, %v478
      %v480 = vlaneseq
      %v481 = vshrl.u32 %v480, 7
      %v482 = vsub.s32 1, %v481
      %v483 = vrot.slane %v209, %v482
      %v484 = vlaneseq
      %v485 = vshrl.u32 %v484, 7
      %v486 = vsub.s32 2, %v485
      %v487 = vrot.slane %v209, %v486
      %491 = vmatprep.subr.mxu0 %v161
      %492 = vmatpush1.msra.mxu0 %v160
      %493 = vmatprep.subr.mxu0 %v164
      %494 = vmatpush1.msra.mxu0 %v163
      %495 = vmatprep.subr.mxu0 %v167
      %496 = vmatpush1.msra.mxu0 %v166
      %497 = vmatprep.subr.mxu0 %v170
      %498 = vmatpush1.msra.mxu0 %v169
      %499 = vmatprep.subr.mxu0 %v173
      %500 = vmatpush1.msra.mxu0 %v172
      %501 = vmatprep.subr.mxu0 %v176
      %502 = vmatpush1.msra.mxu0 %v175
      %503 = vmatprep.subr.mxu0 %v179
      %504 = vmatpush1.msra.mxu0 %v178
      %505 = vmatprep.subr.mxu0 %v182
      %506 = vmatpush1.msra.mxu0 %v181
      %507 = vmatprep.subr.mxu0 %v185
      %508 = vmatpush1.msra.mxu0 %v184
      %509 = vmatprep.subr.mxu0 %v188
      %510 = vmatpush1.msra.mxu0 %v187
      %511 = vmatprep.subr.mxu0 %v191
      %512 = vmatpush1.msra.mxu0 %v190
      %513 = vmatprep.subr.mxu0 %v194
      %514 = vmatpush1.msra.mxu0 %v193
      %515 = vmatprep.subr.mxu0 %v197
      %516 = vmatpush1.msra.mxu0 %v196
      %517 = vmatprep.subr.mxu0 %v200
      %518 = vmatpush1.msra.mxu0 %v199
      %519 = vmatprep.subr.mxu0 %v203
      %520 = vmatpush1.msra.mxu0 %v202
      %521 = vmatprep.subr.mxu0 %v206
      %522 = vmatpush1.msra.mxu0 %v205
      %523 = vmatprep.subr.mxu0 0.0
      %524 = vmatpush1.msra.mxu0 0.0
      %525 = vmatprep.subr.mxu0 0.0
      %526 = vmatpush1.msra.mxu0 0.0
      %527 = vmatprep.subr.mxu0 0.0
      %528 = vmatpush1.msra.mxu0 0.0
      %529 = vmatprep.subr.mxu0 0.0
      %530 = vmatpush1.msra.mxu0 0.0
      %531 = vmatprep.subr.mxu0 0.0
      %532 = vmatpush1.msra.mxu0 0.0
      %533 = vmatprep.subr.mxu0 0.0
      %534 = vmatpush1.msra.mxu0 0.0
      %535 = vmatprep.subr.mxu0 0.0
      %536 = vmatpush1.msra.mxu0 0.0
      %537 = vmatprep.subr.mxu0 0.0
      %538 = vmatpush1.msra.mxu0 0.0
      %539 = vmatprep.subr.mxu0 0.0
      %540 = vmatpush1.msra.mxu0 0.0
      %541 = vmatprep.subr.mxu0 0.0
      %542 = vmatpush1.msra.mxu0 0.0
      %543 = vmatprep.subr.mxu0 0.0
      %544 = vmatpush1.msra.mxu0 0.0
      %545 = vmatprep.subr.mxu0 0.0
      %546 = vmatpush1.msra.mxu0 0.0
      %547 = vmatprep.subr.mxu0 0.0
      %548 = vmatpush1.msra.mxu0 0.0
      %549 = vmatprep.subr.mxu0 0.0
      %550 = vmatpush1.msra.mxu0 0.0
      %551 = vmatprep.subr.mxu0 0.0
      %552 = vmatpush1.msra.mxu0 0.0
      %553 = vmatprep.subr.mxu0 0.0
      %554 = vmatpush1.msra.mxu0 0.0
      %555 = vmatprep.mubr.f32.mxu0 0.0
      %556 = vmatmul.mubr.f32.gmra.mrb[0].mxu0 %v314
      %v557 = vpop.f32.mrb[0].mxu0
      %v558 = vadd.f32 %v479, %v557
      %v559 = vpop.f32.mrb[0].mxu0
      %v560 = vadd.f32 %v483, %v559
      %561 = vdwg.mxu0
      %562 = vmatprep.subr.mxu0 0.0
      %563 = vmatpush1.msra.mxu0 %v162
      %564 = vmatprep.subr.mxu0 0.0
      %565 = vmatpush1.msra.mxu0 %v165
      %566 = vmatprep.subr.mxu0 0.0
      %567 = vmatpush1.msra.mxu0 %v168
      %568 = vmatprep.subr.mxu0 0.0
      %569 = vmatpush1.msra.mxu0 %v171
      %570 = vmatprep.subr.mxu0 0.0
      %571 = vmatpush1.msra.mxu0 %v174
      %572 = vmatprep.subr.mxu0 0.0
      %573 = vmatpush1.msra.mxu0 %v177
      %574 = vmatprep.subr.mxu0 0.0
      %575 = vmatpush1.msra.mxu0 %v180
      %576 = vmatprep.subr.mxu0 0.0
      %577 = vmatpush1.msra.mxu0 %v183
      %578 = vmatprep.subr.mxu0 0.0
      %579 = vmatpush1.msra.mxu0 %v186
      %580 = vmatprep.subr.mxu0 0.0
      %581 = vmatpush1.msra.mxu0 %v189
      %582 = vmatprep.subr.mxu0 0.0
      %583 = vmatpush1.msra.mxu0 %v192
      %584 = vmatprep.subr.mxu0 0.0
      %585 = vmatpush1.msra.mxu0 %v195
      %586 = vmatprep.subr.mxu0 0.0
      %587 = vmatpush1.msra.mxu0 %v198
      %588 = vmatprep.subr.mxu0 0.0
      %589 = vmatpush1.msra.mxu0 %v201
      %590 = vmatprep.subr.mxu0 0.0
      %591 = vmatpush1.msra.mxu0 %v204
      %592 = vmatprep.subr.mxu0 0.0
      %593 = vmatpush1.msra.mxu0 %v207
      %594 = vmatprep.subr.mxu0 0.0
      %595 = vmatpush1.msra.mxu0 0.0
      %596 = vmatprep.subr.mxu0 0.0
      %597 = vmatpush1.msra.mxu0 0.0
      %598 = vmatprep.subr.mxu0 0.0
      %599 = vmatpush1.msra.mxu0 0.0
      %600 = vmatprep.subr.mxu0 0.0
      %601 = vmatpush1.msra.mxu0 0.0
      %602 = vmatprep.subr.mxu0 0.0
      %603 = vmatpush1.msra.mxu0 0.0
      %604 = vmatprep.subr.mxu0 0.0
      %605 = vmatpush1.msra.mxu0 0.0
      %606 = vmatprep.subr.mxu0 0.0
      %607 = vmatpush1.msra.mxu0 0.0
      %608 = vmatprep.subr.mxu0 0.0
      %609 = vmatpush1.msra.mxu0 0.0
      %610 = vmatprep.subr.mxu0 0.0
      %611 = vmatpush1.msra.mxu0 0.0
      %612 = vmatprep.subr.mxu0 0.0
      %613 = vmatpush1.msra.mxu0 0.0
      %614 = vmatprep.subr.mxu0 0.0
      %615 = vmatpush1.msra.mxu0 0.0
      %616 = vmatprep.subr.mxu0 0.0
      %617 = vmatpush1.msra.mxu0 0.0
      %618 = vmatprep.subr.mxu0 0.0
      %619 = vmatpush1.msra.mxu0 0.0
      %620 = vmatprep.subr.mxu0 0.0
      %621 = vmatpush1.msra.mxu0 0.0
      %622 = vmatprep.subr.mxu0 0.0
      %623 = vmatpush1.msra.mxu0 0.0
      %624 = vmatprep.subr.mxu0 0.0
      %625 = vmatpush1.msra.mxu0 0.0
      %626 = vmatprep.mubr.f32.mxu0 0.0
      %627 = vmatmul.mubr.f32.gmra.mrb[0].mxu0 %v314
      %v628 = vpop.f32.mrb[0].mxu0
      %v629 = vadd.f32 %v487, %v628
      %v630 = vpop.f32.mrb[0].mxu0
      %631 = vdwg.mxu0
      %v632 = vadd.f32 %v401, %v558
      %v633 = vxor.u32 %v632, 2147483648
      %v634 = vmul.f32 %v633, 1.442695
      %v635 = vpow.pop %v634
      %v636 = vadd.f32 %v635, 1.0
      %v637 = vrcp.pop %v636
      %v638 = vmul.f32 1.0, %v637
      %v639 = vadd.f32 %v403, %v560
      %v640 = vxor.u32 %v639, 2147483648
      %v641 = vmul.f32 %v640, 1.442695
      %v642 = vpow.pop %v641
      %v643 = vadd.f32 %v642, 1.0
      %v644 = vrcp.pop %v643
      %v645 = vmul.f32 1.0, %v644
      %v646 = vmul.f32 %v638, %v629
      %v647 = vadd.f32 %v472, %v646
      %v648 = vtanh.pop %v647
      %v649 = vsub.f32 1.0, %v645
      %v650 = vmul.f32 %v649, %v648
      %v651 = vmul.f32 %v645, %v314
      %v652 = vadd.f32 %v650, %v651
      %s653 = scalar_lea.vmem %s12, %s315
      %654 = vst [vmem:[%s653] sm:$0xff] %v652
    $region74: #{forward.2} parent=1 // loop_footer
      %s313 = sadd.s32 1, %s309
    $region75: #{forward.2} parent=1 // loop_footer_branch
      %308 = sbr.rel target = $region71
    $region76: #{forward.2} parent=1 // loop_exit
      _
    loop: start=0, step=1, limit=8
    $region77: #{forward.2} parent=1 // loop_pre_header
      _
    $region78: #{forward.2} parent=1 // loop_header
      %s656 = sphi 0, %s660
      %p657 = scmp.ge.s32.totalorder %s656, 8
      %v661 = vphi 0.0, %v1000
    $region79: #{forward.2} parent=1 // loop_header_branch
      %659 = sbr.rel (%p657) target = $region83
    $region80: #{forward.2} parent=1 // loop_body
      %s662 = ssub.s32 7, %s656
      %s663 = smul.u32 %s662, 8
      %s664 = scalar_lea.vmem %s0, %s663
      %v665 = vld [vmem:[%s664] sm:$0xff]
      %v667 = vlaneseq
      %v668 = vshrl.u32 %v667, 7
      %v669 = vsub.s32 0, %v668
      %v670 = vrot.slane %v306, %v669
      %v671 = vlaneseq
      %v672 = vshrl.u32 %v671, 7
      %v673 = vsub.s32 1, %v672
      %v674 = vrot.slane %v306, %v673
      %v675 = vlaneseq
      %v676 = vshrl.u32 %v675, 7
      %v677 = vsub.s32 2, %v676
      %v678 = vrot.slane %v306, %v677
      %682 = vmatprep.subr.mxu0 %v211
      %683 = vmatpush1.msra.mxu0 %v210
      %684 = vmatprep.subr.mxu0 %v214
      %685 = vmatpush1.msra.mxu0 %v213
      %686 = vmatprep.subr.mxu0 %v217
      %687 = vmatpush1.msra.mxu0 %v216
      %688 = vmatprep.subr.mxu0 %v220
      %689 = vmatpush1.msra.mxu0 %v219
      %690 = vmatprep.subr.mxu0 %v223
      %691 = vmatpush1.msra.mxu0 %v222
      %692 = vmatprep.subr.mxu0 %v226
      %693 = vmatpush1.msra.mxu0 %v225
      %694 = vmatprep.subr.mxu0 %v229
      %695 = vmatpush1.msra.mxu0 %v228
      %696 = vmatprep.subr.mxu0 %v232
      %697 = vmatpush1.msra.mxu0 %v231
      %698 = vmatprep.subr.mxu0 %v235
      %699 = vmatpush1.msra.mxu0 %v234
      %700 = vmatprep.subr.mxu0 %v238
      %701 = vmatpush1.msra.mxu0 %v237
      %702 = vmatprep.subr.mxu0 %v241
      %703 = vmatpush1.msra.mxu0 %v240
      %704 = vmatprep.subr.mxu0 %v244
      %705 = vmatpush1.msra.mxu0 %v243
      %706 = vmatprep.subr.mxu0 %v247
      %707 = vmatpush1.msra.mxu0 %v246
      %708 = vmatprep.subr.mxu0 %v250
      %709 = vmatpush1.msra.mxu0 %v249
      %710 = vmatprep.subr.mxu0 %v253
      %711 = vmatpush1.msra.mxu0 %v252
      %712 = vmatprep.subr.mxu0 %v256
      %713 = vmatpush1.msra.mxu0 %v255
      %714 = vmatprep.subr.mxu0 0.0
      %715 = vmatpush1.msra.mxu0 0.0
      %716 = vmatprep.subr.mxu0 0.0
      %717 = vmatpush1.msra.mxu0 0.0
      %718 = vmatprep.subr.mxu0 0.0
      %719 = vmatpush1.msra.mxu0 0.0
      %720 = vmatprep.subr.mxu0 0.0
      %721 = vmatpush1.msra.mxu0 0.0
      %722 = vmatprep.subr.mxu0 0.0
      %723 = vmatpush1.msra.mxu0 0.0
      %724 = vmatprep.subr.mxu0 0.0
      %725 = vmatpush1.msra.mxu0 0.0
      %726 = vmatprep.subr.mxu0 0.0
      %727 = vmatpush1.msra.mxu0 0.0
      %728 = vmatprep.subr.mxu0 0.0
      %729 = vmatpush1.msra.mxu0 0.0
      %730 = vmatprep.subr.mxu0 0.0
      %731 = vmatpush1.msra.mxu0 0.0
      %732 = vmatprep.subr.mxu0 0.0
      %733 = vmatpush1.msra.mxu0 0.0
      %734 = vmatprep.subr.mxu0 0.0
      %735 = vmatpush1.msra.mxu0 0.0
      %736 = vmatprep.subr.mxu0 0.0
      %737 = vmatpush1.msra.mxu0 0.0
      %738 = vmatprep.subr.mxu0 0.0
      %739 = vmatpush1.msra.mxu0 0.0
      %740 = vmatprep.subr.mxu0 0.0
      %741 = vmatpush1.msra.mxu0 0.0
      %742 = vmatprep.subr.mxu0 0.0
      %743 = vmatpush1.msra.mxu0 0.0
      %744 = vmatprep.subr.mxu0 0.0
      %745 = vmatpush1.msra.mxu0 0.0
      %746 = vmatprep.mubr.f32.mxu0 0.0
      %747 = vmatmul.mubr.f32.gmra.mrb[0].mxu0 %v665
      %v748 = vpop.f32.mrb[0].mxu0
      %v749 = vadd.f32 %v670, %v748
      %v750 = vpop.f32.mrb[0].mxu0
      %v751 = vadd.f32 %v674, %v750
      %752 = vdwg.mxu0
      %753 = vmatprep.subr.mxu0 0.0
      %754 = vmatpush1.msra.mxu0 %v212
      %755 = vmatprep.subr.mxu0 0.0
      %756 = vmatpush1.msra.mxu0 %v215
      %757 = vmatprep.subr.mxu0 0.0
      %758 = vmatpush1.msra.mxu0 %v218
      %759 = vmatprep.subr.mxu0 0.0
      %760 = vmatpush1.msra.mxu0 %v221
      %761 = vmatprep.subr.mxu0 0.0
      %762 = vmatpush1.msra.mxu0 %v224
      %763 = vmatprep.subr.mxu0 0.0
      %764 = vmatpush1.msra.mxu0 %v227
      %765 = vmatprep.subr.mxu0 0.0
      %766 = vmatpush1.msra.mxu0 %v230
      %767 = vmatprep.subr.mxu0 0.0
      %768 = vmatpush1.msra.mxu0 %v233
      %769 = vmatprep.subr.mxu0 0.0
      %770 = vmatpush1.msra.mxu0 %v236
      %771 = vmatprep.subr.mxu0 0.0
      %772 = vmatpush1.msra.mxu0 %v239
      %773 = vmatprep.subr.mxu0 0.0
      %774 = vmatpush1.msra.mxu0 %v242
      %775 = vmatprep.subr.mxu0 0.0
      %776 = vmatpush1.msra.mxu0 %v245
      %777 = vmatprep.subr.mxu0 0.0
      %778 = vmatpush1.msra.mxu0 %v248
      %779 = vmatprep.subr.mxu0 0.0
      %780 = vmatpush1.msra.mxu0 %v251
      %781 = vmatprep.subr.mxu0 0.0
      %782 = vmatpush1.msra.mxu0 %v254
      %783 = vmatprep.subr.mxu0 0.0
      %784 = vmatpush1.msra.mxu0 %v257
      %785 = vmatprep.subr.mxu0 0.0
      %786 = vmatpush1.msra.mxu0 0.0
      %787 = vmatprep.subr.mxu0 0.0
      %788 = vmatpush1.msra.mxu0 0.0
      %789 = vmatprep.subr.mxu0 0.0
      %790 = vmatpush1.msra.mxu0 0.0
      %791 = vmatprep.subr.mxu0 0.0
      %792 = vmatpush1.msra.mxu0 0.0
      %793 = vmatprep.subr.mxu0 0.0
      %794 = vmatpush1.msra.mxu0 0.0
      %795 = vmatprep.subr.mxu0 0.0
      %796 = vmatpush1.msra.mxu0 0.0
      %797 = vmatprep.subr.mxu0 0.0
      %798 = vmatpush1.msra.mxu0 0.0
      %799 = vmatprep.subr.mxu0 0.0
      %800 = vmatpush1.msra.mxu0 0.0
      %801 = vmatprep.subr.mxu0 0.0
      %802 = vmatpush1.msra.mxu0 0.0
      %803 = vmatprep.subr.mxu0 0.0
      %804 = vmatpush1.msra.mxu0 0.0
      %805 = vmatprep.subr.mxu0 0.0
      %806 = vmatpush1.msra.mxu0 0.0
      %807 = vmatprep.subr.mxu0 0.0
      %808 = vmatpush1.msra.mxu0 0.0
      %809 = vmatprep.subr.mxu0 0.0
      %810 = vmatpush1.msra.mxu0 0.0
      %811 = vmatprep.subr.mxu0 0.0
      %812 = vmatpush1.msra.mxu0 0.0
      %813 = vmatprep.subr.mxu0 0.0
      %814 = vmatpush1.msra.mxu0 0.0
      %815 = vmatprep.subr.mxu0 0.0
      %816 = vmatpush1.msra.mxu0 0.0
      %817 = vmatprep.mubr.f32.mxu0 0.0
      %818 = vmatmul.mubr.f32.gmra.mrb[0].mxu0 %v665
      %v819 = vpop.f32.mrb[0].mxu0
      %v820 = vadd.f32 %v678, %v819
      %v821 = vpop.f32.mrb[0].mxu0
      %822 = vdwg.mxu0
      %v824 = vlaneseq
      %v825 = vshrl.u32 %v824, 7
      %v826 = vsub.s32 0, %v825
      %v827 = vrot.slane %v307, %v826
      %v828 = vlaneseq
      %v829 = vshrl.u32 %v828, 7
      %v830 = vsub.s32 1, %v829
      %v831 = vrot.slane %v307, %v830
      %v832 = vlaneseq
      %v833 = vshrl.u32 %v832, 7
      %v834 = vsub.s32 2, %v833
      %v835 = vrot.slane %v307, %v834
      %839 = vmatprep.subr.mxu0 %v259
      %840 = vmatpush1.msra.mxu0 %v258
      %841 = vmatprep.subr.mxu0 %v262
      %842 = vmatpush1.msra.mxu0 %v261
      %843 = vmatprep.subr.mxu0 %v265
      %844 = vmatpush1.msra.mxu0 %v264
      %845 = vmatprep.subr.mxu0 %v268
      %846 = vmatpush1.msra.mxu0 %v267
      %847 = vmatprep.subr.mxu0 %v271
      %848 = vmatpush1.msra.mxu0 %v270
      %849 = vmatprep.subr.mxu0 %v274
      %850 = vmatpush1.msra.mxu0 %v273
      %851 = vmatprep.subr.mxu0 %v277
      %852 = vmatpush1.msra.mxu0 %v276
      %853 = vmatprep.subr.mxu0 %v280
      %854 = vmatpush1.msra.mxu0 %v279
      %855 = vmatprep.subr.mxu0 %v283
      %856 = vmatpush1.msra.mxu0 %v282
      %857 = vmatprep.subr.mxu0 %v286
      %858 = vmatpush1.msra.mxu0 %v285
      %859 = vmatprep.subr.mxu0 %v289
      %860 = vmatpush1.msra.mxu0 %v288
      %861 = vmatprep.subr.mxu0 %v292
      %862 = vmatpush1.msra.mxu0 %v291
      %863 = vmatprep.subr.mxu0 %v295
      %864 = vmatpush1.msra.mxu0 %v294
      %865 = vmatprep.subr.mxu0 %v298
      %866 = vmatpush1.msra.mxu0 %v297
      %867 = vmatprep.subr.mxu0 %v301
      %868 = vmatpush1.msra.mxu0 %v300
      %869 = vmatprep.subr.mxu0 %v304
      %870 = vmatpush1.msra.mxu0 %v303
      %871 = vmatprep.subr.mxu0 0.0
      %872 = vmatpush1.msra.mxu0 0.0
      %873 = vmatprep.subr.mxu0 0.0
      %874 = vmatpush1.msra.mxu0 0.0
      %875 = vmatprep.subr.mxu0 0.0
      %876 = vmatpush1.msra.mxu0 0.0
      %877 = vmatprep.subr.mxu0 0.0
      %878 = vmatpush1.msra.mxu0 0.0
      %879 = vmatprep.subr.mxu0 0.0
      %880 = vmatpush1.msra.mxu0 0.0
      %881 = vmatprep.subr.mxu0 0.0
      %882 = vmatpush1.msra.mxu0 0.0
      %883 = vmatprep.subr.mxu0 0.0
      %884 = vmatpush1.msra.mxu0 0.0
      %885 = vmatprep.subr.mxu0 0.0
      %886 = vmatpush1.msra.mxu0 0.0
      %887 = vmatprep.subr.mxu0 0.0
      %888 = vmatpush1.msra.mxu0 0.0
      %889 = vmatprep.subr.mxu0 0.0
      %890 = vmatpush1.msra.mxu0 0.0
      %891 = vmatprep.subr.mxu0 0.0
      %892 = vmatpush1.msra.mxu0 0.0
      %893 = vmatprep.subr.mxu0 0.0
      %894 = vmatpush1.msra.mxu0 0.0
      %895 = vmatprep.subr.mxu0 0.0
      %896 = vmatpush1.msra.mxu0 0.0
      %897 = vmatprep.subr.mxu0 0.0
      %898 = vmatpush1.msra.mxu0 0.0
      %899 = vmatprep.subr.mxu0 0.0
      %900 = vmatpush1.msra.mxu0 0.0
      %901 = vmatprep.subr.mxu0 0.0
      %902 = vmatpush1.msra.mxu0 0.0
      %903 = vmatprep.mubr.f32.mxu0 0.0
      %904 = vmatmul.mubr.f32.gmra.mrb[0].mxu0 %v661
      %v905 = vpop.f32.mrb[0].mxu0
      %v906 = vadd.f32 %v827, %v905
      %v907 = vpop.f32.mrb[0].mxu0
      %v908 = vadd.f32 %v831, %v907
      %909 = vdwg.mxu0
      %910 = vmatprep.subr.mxu0 0.0
      %911 = vmatpush1.msra.mxu0 %v260
      %912 = vmatprep.subr.mxu0 0.0
      %913 = vmatpush1.msra.mxu0 %v263
      %914 = vmatprep.subr.mxu0 0.0
      %915 = vmatpush1.msra.mxu0 %v266
      %916 = vmatprep.subr.mxu0 0.0
      %917 = vmatpush1.msra.mxu0 %v269
      %918 = vmatprep.subr.mxu0 0.0
      %919 = vmatpush1.msra.mxu0 %v272
      %920 = vmatprep.subr.mxu0 0.0
      %921 = vmatpush1.msra.mxu0 %v275
      %922 = vmatprep.subr.mxu0 0.0
      %923 = vmatpush1.msra.mxu0 %v278
      %924 = vmatprep.subr.mxu0 0.0
      %925 = vmatpush1.msra.mxu0 %v281
      %926 = vmatprep.subr.mxu0 0.0
      %927 = vmatpush1.msra.mxu0 %v284
      %928 = vmatprep.subr.mxu0 0.0
      %929 = vmatpush1.msra.mxu0 %v287
      %930 = vmatprep.subr.mxu0 0.0
      %931 = vmatpush1.msra.mxu0 %v290
      %932 = vmatprep.subr.mxu0 0.0
      %933 = vmatpush1.msra.mxu0 %v293
      %934 = vmatprep.subr.mxu0 0.0
      %935 = vmatpush1.msra.mxu0 %v296
      %936 = vmatprep.subr.mxu0 0.0
      %937 = vmatpush1.msra.mxu0 %v299
      %938 = vmatprep.subr.mxu0 0.0
      %939 = vmatpush1.msra.mxu0 %v302
      %940 = vmatprep.subr.mxu0 0.0
      %941 = vmatpush1.msra.mxu0 %v305
      %942 = vmatprep.subr.mxu0 0.0
      %943 = vmatpush1.msra.mxu0 0.0
      %944 = vmatprep.subr.mxu0 0.0
      %945 = vmatpush1.msra.mxu0 0.0
      %946 = vmatprep.subr.mxu0 0.0
      %947 = vmatpush1.msra.mxu0 0.0
      %948 = vmatprep.subr.mxu0 0.0
      %949 = vmatpush1.msra.mxu0 0.0
      %950 = vmatprep.subr.mxu0 0.0
      %951 = vmatpush1.msra.mxu0 0.0
      %952 = vmatprep.subr.mxu0 0.0
      %953 = vmatpush1.msra.mxu0 0.0
      %954 = vmatprep.subr.mxu0 0.0
      %955 = vmatpush1.msra.mxu0 0.0
      %956 = vmatprep.subr.mxu0 0.0
      %957 = vmatpush1.msra.mxu0 0.0
      %958 = vmatprep.subr.mxu0 0.0
      %959 = vmatpush1.msra.mxu0 0.0
      %960 = vmatprep.subr.mxu0 0.0
      %961 = vmatpush1.msra.mxu0 0.0
      %962 = vmatprep.subr.mxu0 0.0
      %963 = vmatpush1.msra.mxu0 0.0
      %964 = vmatprep.subr.mxu0 0.0
      %965 = vmatpush1.msra.mxu0 0.0
      %966 = vmatprep.subr.mxu0 0.0
      %967 = vmatpush1.msra.mxu0 0.0
      %968 = vmatprep.subr.mxu0 0.0
      %969 = vmatpush1.msra.mxu0 0.0
      %970 = vmatprep.subr.mxu0 0.0
      %971 = vmatpush1.msra.mxu0 0.0
      %972 = vmatprep.subr.mxu0 0.0
      %973 = vmatpush1.msra.mxu0 0.0
      %974 = vmatprep.mubr.f32.mxu0 0.0
      %975 = vmatmul.mubr.f32.gmra.mrb[0].mxu0 %v661
      %v976 = vpop.f32.mrb[0].mxu0
      %v977 = vadd.f32 %v835, %v976
      %v978 = vpop.f32.mrb[0].mxu0
      %979 = vdwg.mxu0
      %v980 = vadd.f32 %v749, %v906
      %v981 = vxor.u32 %v980, 2147483648
      %v982 = vmul.f32 %v981, 1.442695
      %v983 = vpow.pop %v982
      %v984 = vadd.f32 %v983, 1.0
      %v985 = vrcp.pop %v984
      %v986 = vmul.f32 1.0, %v985
      %v987 = vadd.f32 %v751, %v908
      %v988 = vxor.u32 %v987, 2147483648
      %v989 = vmul.f32 %v988, 1.442695
      %v990 = vpow.pop %v989
      %v991 = vadd.f32 %v990, 1.0
      %v992 = vrcp.pop %v991
      %v993 = vmul.f32 1.0, %v992
      %v994 = vmul.f32 %v986, %v977
      %v995 = vadd.f32 %v820, %v994
      %v996 = vtanh.pop %v995
      %v997 = vsub.f32 1.0, %v993
      %v998 = vmul.f32 %v997, %v996
      %v999 = vmul.f32 %v993, %v661
      %v1000 = vadd.f32 %v998, %v999
      %s1001 = scalar_lea.vmem %s13, %s663
      %1002 = vst [vmem:[%s1001] sm:$0xff] %v1000
    $region81: #{forward.2} parent=1 // loop_footer
      %s660 = sadd.s32 1, %s656
    $region82: #{forward.2} parent=1 // loop_footer_branch
      %655 = sbr.rel target = $region78
    $region83: #{forward.2} parent=1 // loop_exit
      _
    %v1003 = vld [vmem:[#allocation7] sm:$0xff]
    %v1004 = vld [vmem:[#allocation7 + $0x8] sm:$0xff]
    %v1005 = vld [vmem:[#allocation7 + $0x10] sm:$0xff]
    %v1006 = vld [vmem:[#allocation7 + $0x18] sm:$0xff]
    %v1007 = vld [vmem:[#allocation7 + $0x20] sm:$0xff]
    %v1008 = vld [vmem:[#allocation7 + $0x28] sm:$0xff]
    %v1009 = vld [vmem:[#allocation7 + $0x30] sm:$0xff]
    %v1010 = vld [vmem:[#allocation7 + $0x38] sm:$0xff]
    %v1011 = vld [vmem:[#allocation7 + $0x40] sm:$0xff]
    %v1012 = vld [vmem:[#allocation7 + $0x48] sm:$0xff]
    %v1013 = vld [vmem:[#allocation7 + $0x50] sm:$0xff]
    %v1014 = vld [vmem:[#allocation7 + $0x58] sm:$0xff]
    %v1015 = vld [vmem:[#allocation7 + $0x60] sm:$0xff]
    %v1016 = vld [vmem:[#allocation7 + $0x68] sm:$0xff]
    %v1017 = vld [vmem:[#allocation7 + $0x70] sm:$0xff]
    %v1018 = vld [vmem:[#allocation7 + $0x78] sm:$0xff]
    %v1019 = vld [vmem:[#allocation9] sm:$0xff]
    %v1020 = vld [vmem:[#allocation9 + $0x8] sm:$0xff]
    %v1021 = vld [vmem:[#allocation9 + $0x10] sm:$0xff]
    %v1022 = vld [vmem:[#allocation9 + $0x18] sm:$0xff]
    %v1023 = vld [vmem:[#allocation9 + $0x20] sm:$0xff]
    %v1024 = vld [vmem:[#allocation9 + $0x28] sm:$0xff]
    %v1025 = vld [vmem:[#allocation9 + $0x30] sm:$0xff]
    %v1026 = vld [vmem:[#allocation9 + $0x38] sm:$0xff]
    %v1027 = vld [vmem:[#allocation9 + $0x40] sm:$0xff]
    %v1028 = vld [vmem:[#allocation9 + $0x48] sm:$0xff]
    %v1029 = vld [vmem:[#allocation9 + $0x50] sm:$0xff]
    %v1030 = vld [vmem:[#allocation9 + $0x58] sm:$0xff]
    %v1031 = vld [vmem:[#allocation9 + $0x60] sm:$0xff]
    %v1032 = vld [vmem:[#allocation9 + $0x68] sm:$0xff]
    %v1033 = vld [vmem:[#allocation9 + $0x70] sm:$0xff]
    %v1034 = vld [vmem:[#allocation9 + $0x78] sm:$0xff]
    %1035 = vmatprep.subr.mxu0 0.0
    %1036 = vmatpush1.msra.mxu0 %v1019
    %1037 = vmatprep.subr.mxu0 0.0
    %1038 = vmatpush1.msra.mxu0 %v1020
    %1039 = vmatprep.subr.mxu0 0.0
    %1040 = vmatpush1.msra.mxu0 %v1021
    %1041 = vmatprep.subr.mxu0 0.0
    %1042 = vmatpush1.msra.mxu0 %v1022
    %1043 = vmatprep.subr.mxu0 0.0
    %1044 = vmatpush1.msra.mxu0 %v1023
    %1045 = vmatprep.subr.mxu0 0.0
    %1046 = vmatpush1.msra.mxu0 %v1024
    %1047 = vmatprep.subr.mxu0 0.0
    %1048 = vmatpush1.msra.mxu0 %v1025
    %1049 = vmatprep.subr.mxu0 0.0
    %1050 = vmatpush1.msra.mxu0 %v1026
    %1051 = vmatprep.subr.mxu0 0.0
    %1052 = vmatpush1.msra.mxu0 %v1027
    %1053 = vmatprep.subr.mxu0 0.0
    %1054 = vmatpush1.msra.mxu0 %v1028
    %1055 = vmatprep.subr.mxu0 0.0
    %1056 = vmatpush1.msra.mxu0 %v1029
    %1057 = vmatprep.subr.mxu0 0.0
    %1058 = vmatpush1.msra.mxu0 %v1030
    %1059 = vmatprep.subr.mxu0 0.0
    %1060 = vmatpush1.msra.mxu0 %v1031
    %1061 = vmatprep.subr.mxu0 0.0
    %1062 = vmatpush1.msra.mxu0 %v1032
    %1063 = vmatprep.subr.mxu0 0.0
    %1064 = vmatpush1.msra.mxu0 %v1033
    %1065 = vmatprep.subr.mxu0 0.0
    %1066 = vmatpush1.msra.mxu0 %v1034
    %1067 = vmatprep.subr.mxu0 0.0
    %1068 = vmatpush1.msra.mxu0 0.0
    %1069 = vmatprep.subr.mxu0 0.0
    %1070 = vmatpush1.msra.mxu0 0.0
    %1071 = vmatprep.subr.mxu0 0.0
    %1072 = vmatpush1.msra.mxu0 0.0
    %1073 = vmatprep.subr.mxu0 0.0
    %1074 = vmatpush1.msra.mxu0 0.0
    %1075 = vmatprep.subr.mxu0 0.0
    %1076 = vmatpush1.msra.mxu0 0.0
    %1077 = vmatprep.subr.mxu0 0.0
    %1078 = vmatpush1.msra.mxu0 0.0
    %1079 = vmatprep.subr.mxu0 0.0
    %1080 = vmatpush1.msra.mxu0 0.0
    %1081 = vmatprep.subr.mxu0 0.0
    %1082 = vmatpush1.msra.mxu0 0.0
    %1083 = vmatprep.subr.mxu0 0.0
    %1084 = vmatpush1.msra.mxu0 0.0
    %1085 = vmatprep.subr.mxu0 0.0
    %1086 = vmatpush1.msra.mxu0 0.0
    %1087 = vmatprep.subr.mxu0 0.0
    %1088 = vmatpush1.msra.mxu0 0.0
    %1089 = vmatprep.subr.mxu0 0.0
    %1090 = vmatpush1.msra.mxu0 0.0
    %1091 = vmatprep.subr.mxu0 0.0
    %1092 = vmatpush1.msra.mxu0 0.0
    %1093 = vmatprep.subr.mxu0 0.0
    %1094 = vmatpush1.msra.mxu0 0.0
    %1095 = vmatprep.subr.mxu0 0.0
    %1096 = vmatpush1.msra.mxu0 0.0
    %1097 = vmatprep.subr.mxu0 0.0
    %1098 = vmatpush1.msra.mxu0 0.0
    %1099 = vmatprep.mubr.f32.mxu0 0.0
    %1100 = vmatmul.mubr.f32.gmra.mrb[0].mxu0 %v661
    %v1101 = vpop.f32.mrb[0].mxu0
    %v1102 = vadd.f32 0.0, %v1101
    %v1103 = vpop.f32.mrb[0].mxu0
    %1104 = vdwg.mxu0
    %1105 = vmatprep.subr.mxu0 0.0
    %1106 = vmatpush1.msra.mxu0 %v1003
    %1107 = vmatprep.subr.mxu0 0.0
    %1108 = vmatpush1.msra.mxu0 %v1004
    %1109 = vmatprep.subr.mxu0 0.0
    %1110 = vmatpush1.msra.mxu0 %v1005
    %1111 = vmatprep.subr.mxu0 0.0
    %1112 = vmatpush1.msra.mxu0 %v1006
    %1113 = vmatprep.subr.mxu0 0.0
    %1114 = vmatpush1.msra.mxu0 %v1007
    %1115 = vmatprep.subr.mxu0 0.0
    %1116 = vmatpush1.msra.mxu0 %v1008
    %1117 = vmatprep.subr.mxu0 0.0
    %1118 = vmatpush1.msra.mxu0 %v1009
    %1119 = vmatprep.subr.mxu0 0.0
    %1120 = vmatpush1.msra.mxu0 %v1010
    %1121 = vmatprep.subr.mxu0 0.0
    %1122 = vmatpush1.msra.mxu0 %v1011
    %1123 = vmatprep.subr.mxu0 0.0
    %1124 = vmatpush1.msra.mxu0 %v1012
    %1125 = vmatprep.subr.mxu0 0.0
    %1126 = vmatpush1.msra.mxu0 %v1013
    %1127 = vmatprep.subr.mxu0 0.0
    %1128 = vmatpush1.msra.mxu0 %v1014
    %1129 = vmatprep.subr.mxu0 0.0
    %1130 = vmatpush1.msra.mxu0 %v1015
    %1131 = vmatprep.subr.mxu0 0.0
    %1132 = vmatpush1.msra.mxu0 %v1016
    %1133 = vmatprep.subr.mxu0 0.0
    %1134 = vmatpush1.msra.mxu0 %v1017
    %1135 = vmatprep.subr.mxu0 0.0
    %1136 = vmatpush1.msra.mxu0 %v1018
    %1137 = vmatprep.subr.mxu0 0.0
    %1138 = vmatpush1.msra.mxu0 0.0
    %1139 = vmatprep.subr.mxu0 0.0
    %1140 = vmatpush1.msra.mxu0 0.0
    %1141 = vmatprep.subr.mxu0 0.0
    %1142 = vmatpush1.msra.mxu0 0.0
    %1143 = vmatprep.subr.mxu0 0.0
    %1144 = vmatpush1.msra.mxu0 0.0
    %1145 = vmatprep.subr.mxu0 0.0
    %1146 = vmatpush1.msra.mxu0 0.0
    %1147 = vmatprep.subr.mxu0 0.0
    %1148 = vmatpush1.msra.mxu0 0.0
    %1149 = vmatprep.subr.mxu0 0.0
    %1150 = vmatpush1.msra.mxu0 0.0
    %1151 = vmatprep.subr.mxu0 0.0
    %1152 = vmatpush1.msra.mxu0 0.0
    %1153 = vmatprep.subr.mxu0 0.0
    %1154 = vmatpush1.msra.mxu0 0.0
    %1155 = vmatprep.subr.mxu0 0.0
    %1156 = vmatpush1.msra.mxu0 0.0
    %1157 = vmatprep.subr.mxu0 0.0
    %1158 = vmatpush1.msra.mxu0 0.0
    %1159 = vmatprep.subr.mxu0 0.0
    %1160 = vmatpush1.msra.mxu0 0.0
    %1161 = vmatprep.subr.mxu0 0.0
    %1162 = vmatpush1.msra.mxu0 0.0
    %1163 = vmatprep.subr.mxu0 0.0
    %1164 = vmatpush1.msra.mxu0 0.0
    %1165 = vmatprep.subr.mxu0 0.0
    %1166 = vmatpush1.msra.mxu0 0.0
    %1167 = vmatprep.subr.mxu0 0.0
    %1168 = vmatpush1.msra.mxu0 0.0
    %1169 = vmatprep.mubr.f32.mxu0 0.0
    %1170 = vmatmul.mubr.f32.gmra.mrb[0].mxu0 %v314
    %v1171 = vpop.f32.mrb[0].mxu0
    %v1172 = vadd.f32 %v1102, %v1171
    %v1173 = vpop.f32.mrb[0].mxu0
    %1174 = vdwg.mxu0
    %v1175 = vld [vmem:[%s11] sm:$0x1]
    %v1177 = vlaneseq
    %v1178 = vshrl.u32 %v1177, 7
    %v1179 = vsub.s32 0, %v1178
    %v1180 = vrot.slane %v1175, %v1179
    %v1182 = vadd.f32 %v1172, %v1180
    %v1183 = vtanh.pop %v1182
    %1184 = vst [vmem:[%s14] sm:$0xff] %v1183
    // Predicated region
    $region84: #{forward.2} parent=1 // pred_check
      _
    $region85: #{forward.2} parent=1 // pred_check_branch
      %1186 = sbr.rel (0) target = $region87
    $region86: #{forward.2} parent=1 // pred_region
      _
    $region87: #{forward.2} parent=1 // pred_fallthru
      _
    // Predicated region
    $region88: #{forward.2} parent=1 // pred_check
      _
    $region89: #{forward.2} parent=1 // pred_check_branch
      %1188 = sbr.rel (0) target = $region91
    $region90: #{forward.2} parent=1 // pred_region
      _
    $region91: #{forward.2} parent=1 // pred_fallthru
      _
    // Predicated region
    $region92: #{forward.2} parent=1 // pred_check
      _
    $region93: #{forward.2} parent=1 // pred_check_branch
      %1190 = sbr.rel (0) target = $region95
    $region94: #{forward.2} parent=1 // pred_region
      _
    $region95: #{forward.2} parent=1 // pred_fallthru
      _
    // Predicated region
    $region96: #{forward.2} parent=1 // pred_check
      _
    $region97: #{forward.2} parent=1 // pred_check_branch
      %1192 = sbr.rel (0) target = $region99
    $region98: #{forward.2} parent=1 // pred_region
      _
    $region99: #{forward.2} parent=1 // pred_fallthru
      _
    // Predicated region
    $region100: #{forward.2} parent=1 // pred_check
      _
    $region101: #{forward.2} parent=1 // pred_check_branch
      %1194 = sbr.rel (0) target = $region103
    $region102: #{forward.2} parent=1 // pred_region
      _
    $region103: #{forward.2} parent=1 // pred_fallthru
      _
    // Predicated region
    $region104: #{forward.2} parent=1 // pred_check
      _
    $region105: #{forward.2} parent=1 // pred_check_branch
      %1196 = sbr.rel (0) target = $region107
    $region106: #{forward.2} parent=1 // pred_region
      _
    $region107: #{forward.2} parent=1 // pred_fallthru
      _
    %1197 = vsyncpa [#allocation3], 1
    %1198 = vsyncpa [#allocation5], 1
    %1199 = vsyncpa [#allocation8], 1

// kernel: forward.3
$region0: #{forward.3}
  #allocation0 [shape = 'u32[]', space=smem, size = 0x4, offset = 0x4, fixed_abs, tag = 'smem constant byte address 0x4 - core index']
  #allocation1 [shape = 'u32[144,128]{1,0:T(1,128)}', space=vmem, size = 0x12000, scoped, tag = 'internal scratch']
  %s0 = inlined_call_operand.vmem [shape: f32[6], index: 0, kind: input, shape index: {}]
  %s1 = inlined_call_operand.vmem [shape: f32[8,128], index: 1, kind: input, shape index: {}]
  %s2 = inlined_call_operand.vmem [shape: f32[8,8,256], index: 2, kind: input, shape index: {}]
  %s3 = inlined_call_operand.vmem [shape: f32[8,8], index: 3, kind: input, shape index: {}]
  %s4 = inlined_call_operand.vmem [shape: f32[6,8,128], index: 4, kind: input, shape index: {}]
  %s5 = inlined_call_operand.vmem [shape: f32[128,128], index: 5, kind: input, shape index: {}]
  %s6 = inlined_call_operand.vmem [shape: f32[128,128], index: 6, kind: input, shape index: {}]
  %s7 = inlined_call_operand.vmem [shape: f32[256,128], index: 7, kind: input, shape index: {}]
  %s8 = inlined_call_operand.vmem [shape: f32[1,128], index: 8, kind: input, shape index: {}]
  %s9 = inlined_call_operand.vmem [shape: f32[1,128], index: 9, kind: input, shape index: {}]
  %s10 = inlined_call_operand.vmem [shape: f32[128,384], index: 10, kind: input, shape index: {}]
  %s11 = inlined_call_operand.vmem [shape: f32[256,384], index: 11, kind: input, shape index: {}]
  %s12 = inlined_call_operand.vmem [shape: f32[128,384], index: 12, kind: input, shape index: {}]
  %s13 = inlined_call_operand.vmem [shape: f32[1,384], index: 13, kind: input, shape index: {}]
  %s14 = inlined_call_operand.vmem [shape: f32[1,384], index: 14, kind: input, shape index: {}]
  %s15 = inlined_call_operand.vmem [shape: f32[128,128], index: 15, kind: input, shape index: {}]
  %s16 = inlined_call_operand.vmem [shape: f32[256,128], index: 16, kind: input, shape index: {}]
  %s17 = inlined_call_operand.hbm [shape: f32[128,128], index: 17, kind: input, shape index: {}]
  %s18 = inlined_call_operand.vmem [shape: f32[1,128], index: 18, kind: input, shape index: {}]
  %s19 = inlined_call_operand.vmem [shape: f32[6,8,128], index: 19, kind: output, shape index: {}]
  %s20 = sld [smem:[#allocation0]]
  $region101: #{forward.3} parent=0
    _
  %s22 = ssub.s32 1, %s20
  %s23 = scalar_select 0, %s22, %s20
  $region1: #{forward.3} parent=0
    #allocation2 [shape = 'u8[512]{0}', space=smem, size = 0x200, scoped, tag = 'input window, operand 0, single buffered']
    #allocation3 [shape = 's32[1]{0}', space=sflag, size = 0x4, scoped, tag = 'scoped memory for forward.3']
    #allocation4 [shape = 's32[1]{0}', space=sflag, size = 0x4, scoped, tag = 'scoped memory for forward.3']
    #allocation5 [shape = 'u8[65536]{0}', space=vmem, size = 0x10000, scoped, tag = 'input window, operand 17, single buffered']
    %24 = vsyncpa [#allocation4], 0
    %25 = vsyncpa [#allocation3], 0
    // Predicated region
    $region2: #{forward.3} parent=1 // pred_check
      _
    $region3: #{forward.3} parent=1 // pred_check_branch
      %27 = sbr.rel (0) target = $region5
    $region4: #{forward.3} parent=1 // pred_region
      %s29 = ssub.s32 16, 16
      %30 = vsyncadd [#allocation4], %s29
      %s32 = sshll.u32 %s0, 4
      %s33 = int_to_ptr.vmem [resolvable:$true] %s32
      %35 = dma.vmem_to_smem %s33, 16, [#allocation2], [#allocation4]
    $region5: #{forward.3} parent=1 // pred_fallthru
      _
    // Predicated region
    $region6: #{forward.3} parent=1 // pred_check
      _
    $region7: #{forward.3} parent=1 // pred_check_branch
      %37 = sbr.rel (0) target = $region9
    $region8: #{forward.3} parent=1 // pred_region
      _
    $region9: #{forward.3} parent=1 // pred_fallthru
      _
    // Predicated region
    $region10: #{forward.3} parent=1 // pred_check
      _
    $region11: #{forward.3} parent=1 // pred_check_branch
      %39 = sbr.rel (0) target = $region13
    $region12: #{forward.3} parent=1 // pred_region
      _
    $region13: #{forward.3} parent=1 // pred_fallthru
      _
    // Predicated region
    $region14: #{forward.3} parent=1 // pred_check
      _
    $region15: #{forward.3} parent=1 // pred_check_branch
      %41 = sbr.rel (0) target = $region17
    $region16: #{forward.3} parent=1 // pred_region
      _
    $region17: #{forward.3} parent=1 // pred_fallthru
      _
    // Predicated region
    $region18: #{forward.3} parent=1 // pred_check
      _
    $region19: #{forward.3} parent=1 // pred_check_branch
      %43 = sbr.rel (0) target = $region21
    $region20: #{forward.3} parent=1 // pred_region
      _
    $region21: #{forward.3} parent=1 // pred_fallthru
      _
    // Predicated region
    $region22: #{forward.3} parent=1 // pred_check
      _
    $region23: #{forward.3} parent=1 // pred_check_branch
      %45 = sbr.rel (0) target = $region25
    $region24: #{forward.3} parent=1 // pred_region
      _
    $region25: #{forward.3} parent=1 // pred_fallthru
      _
    // Predicated region
    $region26: #{forward.3} parent=1 // pred_check
      _
    $region27: #{forward.3} parent=1 // pred_check_branch
      %47 = sbr.rel (0) target = $region29
    $region28: #{forward.3} parent=1 // pred_region
      _
    $region29: #{forward.3} parent=1 // pred_fallthru
      _
    // Predicated region
    $region30: #{forward.3} parent=1 // pred_check
      _
    $region31: #{forward.3} parent=1 // pred_check_branch
      %49 = sbr.rel (0) target = $region33
    $region32: #{forward.3} parent=1 // pred_region
      _
    $region33: #{forward.3} parent=1 // pred_fallthru
      _
    // Predicated region
    $region34: #{forward.3} parent=1 // pred_check
      _
    $region35: #{forward.3} parent=1 // pred_check_branch
      %51 = sbr.rel (0) target = $region37
    $region36: #{forward.3} parent=1 // pred_region
      _
    $region37: #{forward.3} parent=1 // pred_fallthru
      _
    // Predicated region
    $region38: #{forward.3} parent=1 // pred_check
      _
    $region39: #{forward.3} parent=1 // pred_check_branch
      %53 = sbr.rel (0) target = $region41
    $region40: #{forward.3} parent=1 // pred_region
      _
    $region41: #{forward.3} parent=1 // pred_fallthru
      _
    // Predicated region
    $region42: #{forward.3} parent=1 // pred_check
      _
    $region43: #{forward.3} parent=1 // pred_check_branch
      %55 = sbr.rel (0) target = $region45
    $region44: #{forward.3} parent=1 // pred_region
      _
    $region45: #{forward.3} parent=1 // pred_fallthru
      _
    // Predicated region
    $region46: #{forward.3} parent=1 // pred_check
      _
    $region47: #{forward.3} parent=1 // pred_check_branch
      %57 = sbr.rel (0) target = $region49
    $region48: #{forward.3} parent=1 // pred_region
      _
    $region49: #{forward.3} parent=1 // pred_fallthru
      _
    // Predicated region
    $region50: #{forward.3} parent=1 // pred_check
      _
    $region51: #{forward.3} parent=1 // pred_check_branch
      %59 = sbr.rel (0) target = $region53
    $region52: #{forward.3} parent=1 // pred_region
      _
    $region53: #{forward.3} parent=1 // pred_fallthru
      _
    // Predicated region
    $region54: #{forward.3} parent=1 // pred_check
      _
    $region55: #{forward.3} parent=1 // pred_check_branch
      %61 = sbr.rel (0) target = $region57
    $region56: #{forward.3} parent=1 // pred_region
      _
    $region57: #{forward.3} parent=1 // pred_fallthru
      _
    // Predicated region
    $region58: #{forward.3} parent=1 // pred_check
      _
    $region59: #{forward.3} parent=1 // pred_check_branch
      %63 = sbr.rel (0) target = $region61
    $region60: #{forward.3} parent=1 // pred_region
      _
    $region61: #{forward.3} parent=1 // pred_fallthru
      _
    // Predicated region
    $region62: #{forward.3} parent=1 // pred_check
      _
    $region63: #{forward.3} parent=1 // pred_check_branch
      %65 = sbr.rel (0) target = $region65
    $region64: #{forward.3} parent=1 // pred_region
      _
    $region65: #{forward.3} parent=1 // pred_fallthru
      _
    // Predicated region
    $region66: #{forward.3} parent=1 // pred_check
      _
    $region67: #{forward.3} parent=1 // pred_check_branch
      %67 = sbr.rel (0) target = $region69
    $region68: #{forward.3} parent=1 // pred_region
      _
    $region69: #{forward.3} parent=1 // pred_fallthru
      _
    // Predicated region
    $region70: #{forward.3} parent=1 // pred_check
      _
    $region71: #{forward.3} parent=1 // pred_check_branch
      %69 = sbr.rel (0) target = $region73
    $region72: #{forward.3} parent=1 // pred_region
      %s71 = ssub.s32 2048, 2048
      %72 = vsyncadd [#allocation3], %s71
      %s73 = sshll.u32 [#allocation5], 4
      %s74 = int_to_ptr.vmem [resolvable:$true] %s73
      %79 = dma.hbm_to_vmem [thread:$0]  %s17, 2048, %s74, [#allocation3], 128, 128, 8
    $region73: #{forward.3} parent=1 // pred_fallthru
      _
    // Predicated region
    $region74: #{forward.3} parent=1 // pred_check
      _
    $region75: #{forward.3} parent=1 // pred_check_branch
      %81 = sbr.rel (0) target = $region77
    $region76: #{forward.3} parent=1 // pred_region
      _
    $region77: #{forward.3} parent=1 // pred_fallthru
      _
    // Predicated region
    $region78: #{forward.3} parent=1 // pred_check
      _
    $region79: #{forward.3} parent=1 // pred_check_branch
      %83 = sbr.rel (0) target = $region81
    $region80: #{forward.3} parent=1 // pred_region
      %84 = dma.done [#allocation4], 16
    $region81: #{forward.3} parent=1 // pred_fallthru
      _
    // Predicated region
    $region82: #{forward.3} parent=1 // pred_check
      _
    $region83: #{forward.3} parent=1 // pred_check_branch
      %86 = sbr.rel (0) target = $region85
    $region84: #{forward.3} parent=1 // pred_region
      %87 = dma.done [#allocation3], 2048
    $region85: #{forward.3} parent=1 // pred_fallthru
      _
    %88 = sfence
    %v89 = vld [vmem:[%s2] sm:$0xff]
    %v90 = vld [vmem:[%s2 + $0x8] sm:$0xff]
    %v91 = vld [vmem:[%s2 + $0x10] sm:$0xff]
    %v92 = vld [vmem:[%s2 + $0x18] sm:$0xff]
    %v93 = vld [vmem:[%s2 + $0x20] sm:$0xff]
    %v94 = vld [vmem:[%s2 + $0x28] sm:$0xff]
    %v95 = vld [vmem:[%s2 + $0x30] sm:$0xff]
    %v96 = vld [vmem:[%s2 + $0x38] sm:$0xff]
    %v97 = vld [vmem:[%s2 + $0x40] sm:$0xff]
    %v98 = vld [vmem:[%s2 + $0x48] sm:$0xff]
    %v99 = vld [vmem:[%s2 + $0x50] sm:$0xff]
    %v100 = vld [vmem:[%s2 + $0x58] sm:$0xff]
    %v101 = vld [vmem:[%s2 + $0x60] sm:$0xff]
    %v102 = vld [vmem:[%s2 + $0x68] sm:$0xff]
    %v103 = vld [vmem:[%s2 + $0x70] sm:$0xff]
    %v104 = vld [vmem:[%s2 + $0x78] sm:$0xff]
    %v105 = vld [vmem:[%s3] sm:$0xff]
    %v106 = vld [vmem:[%s5] sm:$0xff]
    %v107 = vld [vmem:[%s5 + $0x8] sm:$0xff]
    %v108 = vld [vmem:[%s5 + $0x10] sm:$0xff]
    %v109 = vld [vmem:[%s5 + $0x18] sm:$0xff]
    %v110 = vld [vmem:[%s5 + $0x20] sm:$0xff]
    %v111 = vld [vmem:[%s5 + $0x28] sm:$0xff]
    %v112 = vld [vmem:[%s5 + $0x30] sm:$0xff]
    %v113 = vld [vmem:[%s5 + $0x38] sm:$0xff]
    %v114 = vld [vmem:[%s5 + $0x40] sm:$0xff]
    %v115 = vld [vmem:[%s5 + $0x48] sm:$0xff]
    %v116 = vld [vmem:[%s5 + $0x50] sm:$0xff]
    %v117 = vld [vmem:[%s5 + $0x58] sm:$0xff]
    %v118 = vld [vmem:[%s5 + $0x60] sm:$0xff]
    %v119 = vld [vmem:[%s5 + $0x68] sm:$0xff]
    %v120 = vld [vmem:[%s5 + $0x70] sm:$0xff]
    %v121 = vld [vmem:[%s5 + $0x78] sm:$0xff]
    %v122 = vld [vmem:[%s6] sm:$0xff]
    %v123 = vld [vmem:[%s6 + $0x8] sm:$0xff]
    %v124 = vld [vmem:[%s6 + $0x10] sm:$0xff]
    %v125 = vld [vmem:[%s6 + $0x18] sm:$0xff]
    %v126 = vld [vmem:[%s6 + $0x20] sm:$0xff]
    %v127 = vld [vmem:[%s6 + $0x28] sm:$0xff]
    %v128 = vld [vmem:[%s6 + $0x30] sm:$0xff]
    %v129 = vld [vmem:[%s6 + $0x38] sm:$0xff]
    %v130 = vld [vmem:[%s6 + $0x40] sm:$0xff]
    %v131 = vld [vmem:[%s6 + $0x48] sm:$0xff]
    %v132 = vld [vmem:[%s6 + $0x50] sm:$0xff]
    %v133 = vld [vmem:[%s6 + $0x58] sm:$0xff]
    %v134 = vld [vmem:[%s6 + $0x60] sm:$0xff]
    %v135 = vld [vmem:[%s6 + $0x68] sm:$0xff]
    %v136 = vld [vmem:[%s6 + $0x70] sm:$0xff]
    %v137 = vld [vmem:[%s6 + $0x78] sm:$0xff]
    %v138 = vld [vmem:[%s9] sm:$0x1]
    %v139 = vld [vmem:[%s10] sm:$0xff]
    %v140 = vld [vmem:[%s10 + $0x8] sm:$0xff]
    %v141 = vld [vmem:[%s10 + $0x10] sm:$0xff]
    %v142 = vld [vmem:[%s10 + $0x18] sm:$0xff]
    %v143 = vld [vmem:[%s10 + $0x20] sm:$0xff]
    %v144 = vld [vmem:[%s10 + $0x28] sm:$0xff]
    %v145 = vld [vmem:[%s10 + $0x30] sm:$0xff]
    %v146 = vld [vmem:[%s10 + $0x38] sm:$0xff]
    %v147 = vld [vmem:[%s10 + $0x40] sm:$0xff]
    %v148 = vld [vmem:[%s10 + $0x48] sm:$0xff]
    %v149 = vld [vmem:[%s10 + $0x50] sm:$0xff]
    %v150 = vld [vmem:[%s10 + $0x58] sm:$0xff]
    %v151 = vld [vmem:[%s10 + $0x60] sm:$0xff]
    %v152 = vld [vmem:[%s10 + $0x68] sm:$0xff]
    %v153 = vld [vmem:[%s10 + $0x70] sm:$0xff]
    %v154 = vld [vmem:[%s10 + $0x78] sm:$0xff]
    %v155 = vld [vmem:[%s10 + $0x80] sm:$0xff]
    %v156 = vld [vmem:[%s10 + $0x88] sm:$0xff]
    %v157 = vld [vmem:[%s10 + $0x90] sm:$0xff]
    %v158 = vld [vmem:[%s10 + $0x98] sm:$0xff]
    %v159 = vld [vmem:[%s10 + $0xa0] sm:$0xff]
    %v160 = vld [vmem:[%s10 + $0xa8] sm:$0xff]
    %v161 = vld [vmem:[%s10 + $0xb0] sm:$0xff]
    %v162 = vld [vmem:[%s10 + $0xb8] sm:$0xff]
    %v163 = vld [vmem:[%s10 + $0xc0] sm:$0xff]
    %v164 = vld [vmem:[%s10 + $0xc8] sm:$0xff]
    %v165 = vld [vmem:[%s10 + $0xd0] sm:$0xff]
    %v166 = vld [vmem:[%s10 + $0xd8] sm:$0xff]
    %v167 = vld [vmem:[%s10 + $0xe0] sm:$0xff]
    %v168 = vld [vmem:[%s10 + $0xe8] sm:$0xff]
    %v169 = vld [vmem:[%s10 + $0xf0] sm:$0xff]
    %v170 = vld [vmem:[%s10 + $0xf8] sm:$0xff]
    %v171 = vld [vmem:[%s10 + $0x100] sm:$0xff]
    %v172 = vld [vmem:[%s10 + $0x108] sm:$0xff]
    %v173 = vld [vmem:[%s10 + $0x110] sm:$0xff]
    %v174 = vld [vmem:[%s10 + $0x118] sm:$0xff]
    %v175 = vld [vmem:[%s10 + $0x120] sm:$0xff]
    %v176 = vld [vmem:[%s10 + $0x128] sm:$0xff]
    %v177 = vld [vmem:[%s10 + $0x130] sm:$0xff]
    %v178 = vld [vmem:[%s10 + $0x138] sm:$0xff]
    %v179 = vld [vmem:[%s10 + $0x140] sm:$0xff]
    %v180 = vld [vmem:[%s10 + $0x148] sm:$0xff]
    %v181 = vld [vmem:[%s10 + $0x150] sm:$0xff]
    %v182 = vld [vmem:[%s10 + $0x158] sm:$0xff]
    %v183 = vld [vmem:[%s10 + $0x160] sm:$0xff]
    %v184 = vld [vmem:[%s10 + $0x168] sm:$0xff]
    %v185 = vld [vmem:[%s10 + $0x170] sm:$0xff]
    %v186 = vld [vmem:[%s10 + $0x178] sm:$0xff]
    %v187 = vld [vmem:[%s11] sm:$0xff]
    %v188 = vld [vmem:[%s11 + $0x8] sm:$0xff]
    %v189 = vld [vmem:[%s11 + $0x10] sm:$0xff]
    %v190 = vld [vmem:[%s11 + $0x18] sm:$0xff]
    %v191 = vld [vmem:[%s11 + $0x20] sm:$0xff]
    %v192 = vld [vmem:[%s11 + $0x28] sm:$0xff]
    %v193 = vld [vmem:[%s11 + $0x30] sm:$0xff]
    %v194 = vld [vmem:[%s11 + $0x38] sm:$0xff]
    %v195 = vld [vmem:[%s11 + $0x40] sm:$0xff]
    %v196 = vld [vmem:[%s11 + $0x48] sm:$0xff]
    %v197 = vld [vmem:[%s11 + $0x50] sm:$0xff]
    %v198 = vld [vmem:[%s11 + $0x58] sm:$0xff]
    %v199 = vld [vmem:[%s11 + $0x60] sm:$0xff]
    %v200 = vld [vmem:[%s11 + $0x68] sm:$0xff]
    %v201 = vld [vmem:[%s11 + $0x70] sm:$0xff]
    %v202 = vld [vmem:[%s11 + $0x78] sm:$0xff]
    %v203 = vld [vmem:[%s11 + $0x80] sm:$0xff]
    %v204 = vld [vmem:[%s11 + $0x88] sm:$0xff]
    %v205 = vld [vmem:[%s11 + $0x90] sm:$0xff]
    %v206 = vld [vmem:[%s11 + $0x98] sm:$0xff]
    %v207 = vld [vmem:[%s11 + $0xa0] sm:$0xff]
    %v208 = vld [vmem:[%s11 + $0xa8] sm:$0xff]
    %v209 = vld [vmem:[%s11 + $0xb0] sm:$0xff]
    %v210 = vld [vmem:[%s11 + $0xb8] sm:$0xff]
    %v211 = vld [vmem:[%s11 + $0xc0] sm:$0xff]
    %v212 = vld [vmem:[%s11 + $0xc8] sm:$0xff]
    %v213 = vld [vmem:[%s11 + $0xd0] sm:$0xff]
    %v214 = vld [vmem:[%s11 + $0xd8] sm:$0xff]
    %v215 = vld [vmem:[%s11 + $0xe0] sm:$0xff]
    %v216 = vld [vmem:[%s11 + $0xe8] sm:$0xff]
    %v217 = vld [vmem:[%s11 + $0xf0] sm:$0xff]
    %v218 = vld [vmem:[%s11 + $0xf8] sm:$0xff]
    %v219 = vld [vmem:[%s11 + $0x100] sm:$0xff]
    %v220 = vld [vmem:[%s11 + $0x108] sm:$0xff]
    %v221 = vld [vmem:[%s11 + $0x110] sm:$0xff]
    %v222 = vld [vmem:[%s11 + $0x118] sm:$0xff]
    %v223 = vld [vmem:[%s11 + $0x120] sm:$0xff]
    %v224 = vld [vmem:[%s11 + $0x128] sm:$0xff]
    %v225 = vld [vmem:[%s11 + $0x130] sm:$0xff]
    %v226 = vld [vmem:[%s11 + $0x138] sm:$0xff]
    %v227 = vld [vmem:[%s11 + $0x140] sm:$0xff]
    %v228 = vld [vmem:[%s11 + $0x148] sm:$0xff]
    %v229 = vld [vmem:[%s11 + $0x150] sm:$0xff]
    %v230 = vld [vmem:[%s11 + $0x158] sm:$0xff]
    %v231 = vld [vmem:[%s11 + $0x160] sm:$0xff]
    %v232 = vld [vmem:[%s11 + $0x168] sm:$0xff]
    %v233 = vld [vmem:[%s11 + $0x170] sm:$0xff]
    %v234 = vld [vmem:[%s11 + $0x178] sm:$0xff]
    %v235 = vld [vmem:[%s11 + $0x180] sm:$0xff]
    %v236 = vld [vmem:[%s11 + $0x188] sm:$0xff]
    %v237 = vld [vmem:[%s11 + $0x190] sm:$0xff]
    %v238 = vld [vmem:[%s11 + $0x198] sm:$0xff]
    %v239 = vld [vmem:[%s11 + $0x1a0] sm:$0xff]
    %v240 = vld [vmem:[%s11 + $0x1a8] sm:$0xff]
    %v241 = vld [vmem:[%s11 + $0x1b0] sm:$0xff]
    %v242 = vld [vmem:[%s11 + $0x1b8] sm:$0xff]
    %v243 = vld [vmem:[%s11 + $0x1c0] sm:$0xff]
    %v244 = vld [vmem:[%s11 + $0x1c8] sm:$0xff]
    %v245 = vld [vmem:[%s11 + $0x1d0] sm:$0xff]
    %v246 = vld [vmem:[%s11 + $0x1d8] sm:$0xff]
    %v247 = vld [vmem:[%s11 + $0x1e0] sm:$0xff]
    %v248 = vld [vmem:[%s11 + $0x1e8] sm:$0xff]
    %v249 = vld [vmem:[%s11 + $0x1f0] sm:$0xff]
    %v250 = vld [vmem:[%s11 + $0x1f8] sm:$0xff]
    %v251 = vld [vmem:[%s11 + $0x200] sm:$0xff]
    %v252 = vld [vmem:[%s11 + $0x208] sm:$0xff]
    %v253 = vld [vmem:[%s11 + $0x210] sm:$0xff]
    %v254 = vld [vmem:[%s11 + $0x218] sm:$0xff]
    %v255 = vld [vmem:[%s11 + $0x220] sm:$0xff]
    %v256 = vld [vmem:[%s11 + $0x228] sm:$0xff]
    %v257 = vld [vmem:[%s11 + $0x230] sm:$0xff]
    %v258 = vld [vmem:[%s11 + $0x238] sm:$0xff]
    %v259 = vld [vmem:[%s11 + $0x240] sm:$0xff]
    %v260 = vld [vmem:[%s11 + $0x248] sm:$0xff]
    %v261 = vld [vmem:[%s11 + $0x250] sm:$0xff]
    %v262 = vld [vmem:[%s11 + $0x258] sm:$0xff]
    %v263 = vld [vmem:[%s11 + $0x260] sm:$0xff]
    %v264 = vld [vmem:[%s11 + $0x268] sm:$0xff]
    %v265 = vld [vmem:[%s11 + $0x270] sm:$0xff]
    %v266 = vld [vmem:[%s11 + $0x278] sm:$0xff]
    %v267 = vld [vmem:[%s11 + $0x280] sm:$0xff]
    %v268 = vld [vmem:[%s11 + $0x288] sm:$0xff]
    %v269 = vld [vmem:[%s11 + $0x290] sm:$0xff]
    %v270 = vld [vmem:[%s11 + $0x298] sm:$0xff]
    %v271 = vld [vmem:[%s11 + $0x2a0] sm:$0xff]
    %v272 = vld [vmem:[%s11 + $0x2a8] sm:$0xff]
    %v273 = vld [vmem:[%s11 + $0x2b0] sm:$0xff]
    %v274 = vld [vmem:[%s11 + $0x2b8] sm:$0xff]
    %v275 = vld [vmem:[%s11 + $0x2c0] sm:$0xff]
    %v276 = vld [vmem:[%s11 + $0x2c8] sm:$0xff]
    %v277 = vld [vmem:[%s11 + $0x2d0] sm:$0xff]
    %v278 = vld [vmem:[%s11 + $0x2d8] sm:$0xff]
    %v279 = vld [vmem:[%s11 + $0x2e0] sm:$0xff]
    %v280 = vld [vmem:[%s11 + $0x2e8] sm:$0xff]
    %v281 = vld [vmem:[%s11 + $0x2f0] sm:$0xff]
    %v282 = vld [vmem:[%s11 + $0x2f8] sm:$0xff]
    %v283 = vld [vmem:[%s12] sm:$0xff]
    %v284 = vld [vmem:[%s12 + $0x8] sm:$0xff]
    %v285 = vld [vmem:[%s12 + $0x10] sm:$0xff]
    %v286 = vld [vmem:[%s12 + $0x18] sm:$0xff]
    %v287 = vld [vmem:[%s12 + $0x20] sm:$0xff]
    %v288 = vld [vmem:[%s12 + $0x28] sm:$0xff]
    %v289 = vld [vmem:[%s12 + $0x30] sm:$0xff]
    %v290 = vld [vmem:[%s12 + $0x38] sm:$0xff]
    %v291 = vld [vmem:[%s12 + $0x40] sm:$0xff]
    %v292 = vld [vmem:[%s12 + $0x48] sm:$0xff]
    %v293 = vld [vmem:[%s12 + $0x50] sm:$0xff]
    %v294 = vld [vmem:[%s12 + $0x58] sm:$0xff]
    %v295 = vld [vmem:[%s12 + $0x60] sm:$0xff]
    %v296 = vld [vmem:[%s12 + $0x68] sm:$0xff]
    %v297 = vld [vmem:[%s12 + $0x70] sm:$0xff]
    %v298 = vld [vmem:[%s12 + $0x78] sm:$0xff]
    %v299 = vld [vmem:[%s12 + $0x80] sm:$0xff]
    %v300 = vld [vmem:[%s12 + $0x88] sm:$0xff]
    %v301 = vld [vmem:[%s12 + $0x90] sm:$0xff]
    %v302 = vld [vmem:[%s12 + $0x98] sm:$0xff]
    %v303 = vld [vmem:[%s12 + $0xa0] sm:$0xff]
    %v304 = vld [vmem:[%s12 + $0xa8] sm:$0xff]
    %v305 = vld [vmem:[%s12 + $0xb0] sm:$0xff]
    %v306 = vld [vmem:[%s12 + $0xb8] sm:$0xff]
    %v307 = vld [vmem:[%s12 + $0xc0] sm:$0xff]
    %v308 = vld [vmem:[%s12 + $0xc8] sm:$0xff]
    %v309 = vld [vmem:[%s12 + $0xd0] sm:$0xff]
    %v310 = vld [vmem:[%s12 + $0xd8] sm:$0xff]
    %v311 = vld [vmem:[%s12 + $0xe0] sm:$0xff]
    %v312 = vld [vmem:[%s12 + $0xe8] sm:$0xff]
    %v313 = vld [vmem:[%s12 + $0xf0] sm:$0xff]
    %v314 = vld [vmem:[%s12 + $0xf8] sm:$0xff]
    %v315 = vld [vmem:[%s12 + $0x100] sm:$0xff]
    %v316 = vld [vmem:[%s12 + $0x108] sm:$0xff]
    %v317 = vld [vmem:[%s12 + $0x110] sm:$0xff]
    %v318 = vld [vmem:[%s12 + $0x118] sm:$0xff]
    %v319 = vld [vmem:[%s12 + $0x120] sm:$0xff]
    %v320 = vld [vmem:[%s12 + $0x128] sm:$0xff]
    %v321 = vld [vmem:[%s12 + $0x130] sm:$0xff]
    %v322 = vld [vmem:[%s12 + $0x138] sm:$0xff]
    %v323 = vld [vmem:[%s12 + $0x140] sm:$0xff]
    %v324 = vld [vmem:[%s12 + $0x148] sm:$0xff]
    %v325 = vld [vmem:[%s12 + $0x150] sm:$0xff]
    %v326 = vld [vmem:[%s12 + $0x158] sm:$0xff]
    %v327 = vld [vmem:[%s12 + $0x160] sm:$0xff]
    %v328 = vld [vmem:[%s12 + $0x168] sm:$0xff]
    %v329 = vld [vmem:[%s12 + $0x170] sm:$0xff]
    %v330 = vld [vmem:[%s12 + $0x178] sm:$0xff]
    %v331 = vld [vmem:[%s13] sm:$0x7]
    %v332 = vld [vmem:[%s14] sm:$0x7]
    %v333 = vld [vmem:[%s15] sm:$0xff]
    %v334 = vld [vmem:[%s15 + $0x8] sm:$0xff]
    %v335 = vld [vmem:[%s15 + $0x10] sm:$0xff]
    %v336 = vld [vmem:[%s15 + $0x18] sm:$0xff]
    %v337 = vld [vmem:[%s15 + $0x20] sm:$0xff]
    %v338 = vld [vmem:[%s15 + $0x28] sm:$0xff]
    %v339 = vld [vmem:[%s15 + $0x30] sm:$0xff]
    %v340 = vld [vmem:[%s15 + $0x38] sm:$0xff]
    %v341 = vld [vmem:[%s15 + $0x40] sm:$0xff]
    %v342 = vld [vmem:[%s15 + $0x48] sm:$0xff]
    %v343 = vld [vmem:[%s15 + $0x50] sm:$0xff]
    %v344 = vld [vmem:[%s15 + $0x58] sm:$0xff]
    %v345 = vld [vmem:[%s15 + $0x60] sm:$0xff]
    %v346 = vld [vmem:[%s15 + $0x68] sm:$0xff]
    %v347 = vld [vmem:[%s15 + $0x70] sm:$0xff]
    %v348 = vld [vmem:[%s15 + $0x78] sm:$0xff]
    %v349 = vld [vmem:[%s16] sm:$0xff]
    %v350 = vld [vmem:[%s16 + $0x8] sm:$0xff]
    %v351 = vld [vmem:[%s16 + $0x10] sm:$0xff]
    %v352 = vld [vmem:[%s16 + $0x18] sm:$0xff]
    %v353 = vld [vmem:[%s16 + $0x20] sm:$0xff]
    %v354 = vld [vmem:[%s16 + $0x28] sm:$0xff]
    %v355 = vld [vmem:[%s16 + $0x30] sm:$0xff]
    %v356 = vld [vmem:[%s16 + $0x38] sm:$0xff]
    %v357 = vld [vmem:[%s16 + $0x40] sm:$0xff]
    %v358 = vld [vmem:[%s16 + $0x48] sm:$0xff]
    %v359 = vld [vmem:[%s16 + $0x50] sm:$0xff]
    %v360 = vld [vmem:[%s16 + $0x58] sm:$0xff]
    %v361 = vld [vmem:[%s16 + $0x60] sm:$0xff]
    %v362 = vld [vmem:[%s16 + $0x68] sm:$0xff]
    %v363 = vld [vmem:[%s16 + $0x70] sm:$0xff]
    %v364 = vld [vmem:[%s16 + $0x78] sm:$0xff]
    %v365 = vld [vmem:[%s16 + $0x80] sm:$0xff]
    %v366 = vld [vmem:[%s16 + $0x88] sm:$0xff]
    %v367 = vld [vmem:[%s16 + $0x90] sm:$0xff]
    %v368 = vld [vmem:[%s16 + $0x98] sm:$0xff]
    %v369 = vld [vmem:[%s16 + $0xa0] sm:$0xff]
    %v370 = vld [vmem:[%s16 + $0xa8] sm:$0xff]
    %v371 = vld [vmem:[%s16 + $0xb0] sm:$0xff]
    %v372 = vld [vmem:[%s16 + $0xb8] sm:$0xff]
    %v373 = vld [vmem:[%s16 + $0xc0] sm:$0xff]
    %v374 = vld [vmem:[%s16 + $0xc8] sm:$0xff]
    %v375 = vld [vmem:[%s16 + $0xd0] sm:$0xff]
    %v376 = vld [vmem:[%s16 + $0xd8] sm:$0xff]
    %v377 = vld [vmem:[%s16 + $0xe0] sm:$0xff]
    %v378 = vld [vmem:[%s16 + $0xe8] sm:$0xff]
    %v379 = vld [vmem:[%s16 + $0xf0] sm:$0xff]
    %v380 = vld [vmem:[%s16 + $0xf8] sm:$0xff]
    %v381 = vld [vmem:[#allocation5] sm:$0xff]
    %v382 = vld [vmem:[#allocation5 + $0x8] sm:$0xff]
    %v383 = vld [vmem:[#allocation5 + $0x10] sm:$0xff]
    %v384 = vld [vmem:[#allocation5 + $0x18] sm:$0xff]
    %v385 = vld [vmem:[#allocation5 + $0x20] sm:$0xff]
    %v386 = vld [vmem:[#allocation5 + $0x28] sm:$0xff]
    %v387 = vld [vmem:[#allocation5 + $0x30] sm:$0xff]
    %v388 = vld [vmem:[#allocation5 + $0x38] sm:$0xff]
    %v389 = vld [vmem:[#allocation5 + $0x40] sm:$0xff]
    %v390 = vld [vmem:[#allocation5 + $0x48] sm:$0xff]
    %v391 = vld [vmem:[#allocation5 + $0x50] sm:$0xff]
    %v392 = vld [vmem:[#allocation5 + $0x58] sm:$0xff]
    %v393 = vld [vmem:[#allocation5 + $0x60] sm:$0xff]
    %v394 = vld [vmem:[#allocation5 + $0x68] sm:$0xff]
    %v395 = vld [vmem:[#allocation5 + $0x70] sm:$0xff]
    %v396 = vld [vmem:[#allocation5 + $0x78] sm:$0xff]
    %v397 = vld [vmem:[%s18] sm:$0x1]
    %v398 = vld [vmem:[%s7] sm:$0xff]
    %v399 = vld [vmem:[%s7 + $0x8] sm:$0xff]
    %v400 = vld [vmem:[%s7 + $0x10] sm:$0xff]
    %v401 = vld [vmem:[%s7 + $0x18] sm:$0xff]
    %v402 = vld [vmem:[%s7 + $0x20] sm:$0xff]
    %v403 = vld [vmem:[%s7 + $0x28] sm:$0xff]
    %v404 = vld [vmem:[%s7 + $0x30] sm:$0xff]
    %v405 = vld [vmem:[%s7 + $0x38] sm:$0xff]
    %v406 = vld [vmem:[%s7 + $0x40] sm:$0xff]
    %v407 = vld [vmem:[%s7 + $0x48] sm:$0xff]
    %v408 = vld [vmem:[%s7 + $0x50] sm:$0xff]
    %v409 = vld [vmem:[%s7 + $0x58] sm:$0xff]
    %v410 = vld [vmem:[%s7 + $0x60] sm:$0xff]
    %v411 = vld [vmem:[%s7 + $0x68] sm:$0xff]
    %v412 = vld [vmem:[%s7 + $0x70] sm:$0xff]
    %v413 = vld [vmem:[%s7 + $0x78] sm:$0xff]
    %v414 = vld [vmem:[%s7 + $0x80] sm:$0xff]
    %v415 = vld [vmem:[%s7 + $0x88] sm:$0xff]
    %v416 = vld [vmem:[%s7 + $0x90] sm:$0xff]
    %v417 = vld [vmem:[%s7 + $0x98] sm:$0xff]
    %v418 = vld [vmem:[%s7 + $0xa0] sm:$0xff]
    %v419 = vld [vmem:[%s7 + $0xa8] sm:$0xff]
    %v420 = vld [vmem:[%s7 + $0xb0] sm:$0xff]
    %v421 = vld [vmem:[%s7 + $0xb8] sm:$0xff]
    %v422 = vld [vmem:[%s7 + $0xc0] sm:$0xff]
    %v423 = vld [vmem:[%s7 + $0xc8] sm:$0xff]
    %v424 = vld [vmem:[%s7 + $0xd0] sm:$0xff]
    %v425 = vld [vmem:[%s7 + $0xd8] sm:$0xff]
    %v426 = vld [vmem:[%s7 + $0xe0] sm:$0xff]
    %v427 = vld [vmem:[%s7 + $0xe8] sm:$0xff]
    %v428 = vld [vmem:[%s7 + $0xf0] sm:$0xff]
    %v429 = vld [vmem:[%s7 + $0xf8] sm:$0xff]
    %v430 = vld [vmem:[%s8] sm:$0x1]
    %v432 = vlaneseq
    %v433 = vshrl.u32 %v432, 7
    %v434 = vsub.s32 0, %v433
    %v435 = vrot.slane %v430, %v434
    %437 = vmatprep.subr.mxu0 0.0
    %438 = vmatpush1.msra.mxu0 %v398
    %439 = vmatprep.subr.mxu0 0.0
    %440 = vmatpush1.msra.mxu0 %v399
    %441 = vmatprep.subr.mxu0 0.0
    %442 = vmatpush1.msra.mxu0 %v400
    %443 = vmatprep.subr.mxu0 0.0
    %444 = vmatpush1.msra.mxu0 %v401
    %445 = vmatprep.subr.mxu0 0.0
    %446 = vmatpush1.msra.mxu0 %v402
    %447 = vmatprep.subr.mxu0 0.0
    %448 = vmatpush1.msra.mxu0 %v403
    %449 = vmatprep.subr.mxu0 0.0
    %450 = vmatpush1.msra.mxu0 %v404
    %451 = vmatprep.subr.mxu0 0.0
    %452 = vmatpush1.msra.mxu0 %v405
    %453 = vmatprep.subr.mxu0 0.0
    %454 = vmatpush1.msra.mxu0 %v406
    %455 = vmatprep.subr.mxu0 0.0
    %456 = vmatpush1.msra.mxu0 %v407
    %457 = vmatprep.subr.mxu0 0.0
    %458 = vmatpush1.msra.mxu0 %v408
    %459 = vmatprep.subr.mxu0 0.0
    %460 = vmatpush1.msra.mxu0 %v409
    %461 = vmatprep.subr.mxu0 0.0
    %462 = vmatpush1.msra.mxu0 %v410
    %463 = vmatprep.subr.mxu0 0.0
    %464 = vmatpush1.msra.mxu0 %v411
    %465 = vmatprep.subr.mxu0 0.0
    %466 = vmatpush1.msra.mxu0 %v412
    %467 = vmatprep.subr.mxu0 0.0
    %468 = vmatpush1.msra.mxu0 %v413
    %469 = vmatprep.subr.mxu0 0.0
    %470 = vmatpush1.msra.mxu0 %v414
    %471 = vmatprep.subr.mxu0 0.0
    %472 = vmatpush1.msra.mxu0 %v415
    %473 = vmatprep.subr.mxu0 0.0
    %474 = vmatpush1.msra.mxu0 %v416
    %475 = vmatprep.subr.mxu0 0.0
    %476 = vmatpush1.msra.mxu0 %v417
    %477 = vmatprep.subr.mxu0 0.0
    %478 = vmatpush1.msra.mxu0 %v418
    %479 = vmatprep.subr.mxu0 0.0
    %480 = vmatpush1.msra.mxu0 %v419
    %481 = vmatprep.subr.mxu0 0.0
    %482 = vmatpush1.msra.mxu0 %v420
    %483 = vmatprep.subr.mxu0 0.0
    %484 = vmatpush1.msra.mxu0 %v421
    %485 = vmatprep.subr.mxu0 0.0
    %486 = vmatpush1.msra.mxu0 %v422
    %487 = vmatprep.subr.mxu0 0.0
    %488 = vmatpush1.msra.mxu0 %v423
    %489 = vmatprep.subr.mxu0 0.0
    %490 = vmatpush1.msra.mxu0 %v424
    %491 = vmatprep.subr.mxu0 0.0
    %492 = vmatpush1.msra.mxu0 %v425
    %493 = vmatprep.subr.mxu0 0.0
    %494 = vmatpush1.msra.mxu0 %v426
    %495 = vmatprep.subr.mxu0 0.0
    %496 = vmatpush1.msra.mxu0 %v427
    %497 = vmatprep.subr.mxu0 0.0
    %498 = vmatpush1.msra.mxu0 %v428
    %499 = vmatprep.subr.mxu0 0.0
    %500 = vmatpush1.msra.mxu0 %v429
    %501 = vmatprep.mubr.f32.mxu0 %v90
    %502 = vmatmul.mubr.f32.gmra.mrb[0].mxu0 %v89
    %v503 = vpop.f32.mrb[0].mxu0
    %v504 = vadd.f32 %v435, %v503
    %v505 = vpop.f32.mrb[0].mxu0
    %506 = vmatprep.mubr.f32.mxu0 %v92
    %507 = vmatmul.mubr.f32.gmra.mrb[0].mxu0 %v91
    %v508 = vpop.f32.mrb[0].mxu0
    %v509 = vadd.f32 %v435, %v508
    %v510 = vpop.f32.mrb[0].mxu0
    %511 = vmatprep.mubr.f32.mxu0 %v94
    %512 = vmatmul.mubr.f32.gmra.mrb[0].mxu0 %v93
    %v513 = vpop.f32.mrb[0].mxu0
    %v514 = vadd.f32 %v435, %v513
    %v515 = vpop.f32.mrb[0].mxu0
    %516 = vmatprep.mubr.f32.mxu0 %v96
    %517 = vmatmul.mubr.f32.gmra.mrb[0].mxu0 %v95
    %v518 = vpop.f32.mrb[0].mxu0
    %v519 = vadd.f32 %v435, %v518
    %v520 = vpop.f32.mrb[0].mxu0
    %521 = vmatprep.mubr.f32.mxu0 %v98
    %522 = vmatmul.mubr.f32.gmra.mrb[0].mxu0 %v97
    %v523 = vpop.f32.mrb[0].mxu0
    %v524 = vadd.f32 %v435, %v523
    %v525 = vpop.f32.mrb[0].mxu0
    %526 = vmatprep.mubr.f32.mxu0 %v100
    %527 = vmatmul.mubr.f32.gmra.mrb[0].mxu0 %v99
    %v528 = vpop.f32.mrb[0].mxu0
    %v529 = vadd.f32 %v435, %v528
    %v530 = vpop.f32.mrb[0].mxu0
    %531 = vmatprep.mubr.f32.mxu0 %v102
    %532 = vmatmul.mubr.f32.gmra.mrb[0].mxu0 %v101
    %v533 = vpop.f32.mrb[0].mxu0
    %v534 = vadd.f32 %v435, %v533
    %v535 = vpop.f32.mrb[0].mxu0
    %536 = vmatprep.mubr.f32.mxu0 %v104
    %537 = vmatmul.mubr.f32.gmra.mrb[0].mxu0 %v103
    %v538 = vpop.f32.mrb[0].mxu0
    %v539 = vadd.f32 %v435, %v538
    %v540 = vpop.f32.mrb[0].mxu0
    %541 = vdwg.mxu0
    %v542 = vlaneseq
    %v543 = vand.u32 %v542, 127
    %544 = vst [vmem:[%s19] sm:$0xff] 0.0
    %v545 = vld [vmem:[%s1] sm:$0xff]
    %v546 = vld [vmem:[%s4] sm:$0xff]
    loop: start=0, step=1, limit=5
    $region86: #{forward.3} parent=1 // loop_pre_header
      _
    $region87: #{forward.3} parent=1 // loop_header
      %s548 = sphi 0, %s552
      %p549 = scmp.ge.s32.totalorder %s548, 5
      %v553 = vphi %v545, %v1840
      %v554 = vphi %v546, %v2093
    $region88: #{forward.3} parent=1 // loop_header_branch
      %551 = sbr.rel (%p549) target = $region92
    $region89: #{forward.3} parent=1 // loop_body
      %s555 = sadd.s32 %s548, 1
      %556 = vmatprep.subr.mxu0 0.0
      %557 = vmatpush1.msra.mxu0 %v106
      %558 = vmatprep.subr.mxu0 0.0
      %559 = vmatpush1.msra.mxu0 %v107
      %560 = vmatprep.subr.mxu0 0.0
      %561 = vmatpush1.msra.mxu0 %v108
      %562 = vmatprep.subr.mxu0 0.0
      %563 = vmatpush1.msra.mxu0 %v109
      %564 = vmatprep.subr.mxu0 0.0
      %565 = vmatpush1.msra.mxu0 %v110
      %566 = vmatprep.subr.mxu0 0.0
      %567 = vmatpush1.msra.mxu0 %v111
      %568 = vmatprep.subr.mxu0 0.0
      %569 = vmatpush1.msra.mxu0 %v112
      %570 = vmatprep.subr.mxu0 0.0
      %571 = vmatpush1.msra.mxu0 %v113
      %572 = vmatprep.subr.mxu0 0.0
      %573 = vmatpush1.msra.mxu0 %v114
      %574 = vmatprep.subr.mxu0 0.0
      %575 = vmatpush1.msra.mxu0 %v115
      %576 = vmatprep.subr.mxu0 0.0
      %577 = vmatpush1.msra.mxu0 %v116
      %578 = vmatprep.subr.mxu0 0.0
      %579 = vmatpush1.msra.mxu0 %v117
      %580 = vmatprep.subr.mxu0 0.0
      %581 = vmatpush1.msra.mxu0 %v118
      %582 = vmatprep.subr.mxu0 0.0
      %583 = vmatpush1.msra.mxu0 %v119
      %584 = vmatprep.subr.mxu0 0.0
      %585 = vmatpush1.msra.mxu0 %v120
      %586 = vmatprep.subr.mxu0 0.0
      %587 = vmatpush1.msra.mxu0 %v121
      %588 = vmatprep.subr.mxu0 0.0
      %589 = vmatpush1.msra.mxu0 0.0
      %590 = vmatprep.subr.mxu0 0.0
      %591 = vmatpush1.msra.mxu0 0.0
      %592 = vmatprep.subr.mxu0 0.0
      %593 = vmatpush1.msra.mxu0 0.0
      %594 = vmatprep.subr.mxu0 0.0
      %595 = vmatpush1.msra.mxu0 0.0
      %596 = vmatprep.subr.mxu0 0.0
      %597 = vmatpush1.msra.mxu0 0.0
      %598 = vmatprep.subr.mxu0 0.0
      %599 = vmatpush1.msra.mxu0 0.0
      %600 = vmatprep.subr.mxu0 0.0
      %601 = vmatpush1.msra.mxu0 0.0
      %602 = vmatprep.subr.mxu0 0.0
      %603 = vmatpush1.msra.mxu0 0.0
      %604 = vmatprep.subr.mxu0 0.0
      %605 = vmatpush1.msra.mxu0 0.0
      %606 = vmatprep.subr.mxu0 0.0
      %607 = vmatpush1.msra.mxu0 0.0
      %608 = vmatprep.subr.mxu0 0.0
      %609 = vmatpush1.msra.mxu0 0.0
      %610 = vmatprep.subr.mxu0 0.0
      %611 = vmatpush1.msra.mxu0 0.0
      %612 = vmatprep.subr.mxu0 0.0
      %613 = vmatpush1.msra.mxu0 0.0
      %614 = vmatprep.subr.mxu0 0.0
      %615 = vmatpush1.msra.mxu0 0.0
      %616 = vmatprep.subr.mxu0 0.0
      %617 = vmatpush1.msra.mxu0 0.0
      %618 = vmatprep.subr.mxu0 0.0
      %619 = vmatpush1.msra.mxu0 0.0
      %620 = vmatprep.mubr.f32.mxu0 0.0
      %621 = vmatmul.mubr.f32.gmra.mrb[0].mxu0 %v554
      %v622 = vpop.f32.mrb[0].mxu0
      %v623 = vadd.f32 0.0, %v622
      %v624 = vpop.f32.mrb[0].mxu0
      %625 = vdwg.mxu0
      %626 = vmatprep.subr.mxu0 0.0
      %627 = vmatpush1.msra.mxu0 %v122
      %628 = vmatprep.subr.mxu0 0.0
      %629 = vmatpush1.msra.mxu0 %v123
      %630 = vmatprep.subr.mxu0 0.0
      %631 = vmatpush1.msra.mxu0 %v124
      %632 = vmatprep.subr.mxu0 0.0
      %633 = vmatpush1.msra.mxu0 %v125
      %634 = vmatprep.subr.mxu0 0.0
      %635 = vmatpush1.msra.mxu0 %v126
      %636 = vmatprep.subr.mxu0 0.0
      %637 = vmatpush1.msra.mxu0 %v127
      %638 = vmatprep.subr.mxu0 0.0
      %639 = vmatpush1.msra.mxu0 %v128
      %640 = vmatprep.subr.mxu0 0.0
      %641 = vmatpush1.msra.mxu0 %v129
      %642 = vmatprep.subr.mxu0 0.0
      %643 = vmatpush1.msra.mxu0 %v130
      %644 = vmatprep.subr.mxu0 0.0
      %645 = vmatpush1.msra.mxu0 %v131
      %646 = vmatprep.subr.mxu0 0.0
      %647 = vmatpush1.msra.mxu0 %v132
      %648 = vmatprep.subr.mxu0 0.0
      %649 = vmatpush1.msra.mxu0 %v133
      %650 = vmatprep.subr.mxu0 0.0
      %651 = vmatpush1.msra.mxu0 %v134
      %652 = vmatprep.subr.mxu0 0.0
      %653 = vmatpush1.msra.mxu0 %v135
      %654 = vmatprep.subr.mxu0 0.0
      %655 = vmatpush1.msra.mxu0 %v136
      %656 = vmatprep.subr.mxu0 0.0
      %657 = vmatpush1.msra.mxu0 %v137
      %658 = vmatprep.subr.mxu0 0.0
      %659 = vmatpush1.msra.mxu0 0.0
      %660 = vmatprep.subr.mxu0 0.0
      %661 = vmatpush1.msra.mxu0 0.0
      %662 = vmatprep.subr.mxu0 0.0
      %663 = vmatpush1.msra.mxu0 0.0
      %664 = vmatprep.subr.mxu0 0.0
      %665 = vmatpush1.msra.mxu0 0.0
      %666 = vmatprep.subr.mxu0 0.0
      %667 = vmatpush1.msra.mxu0 0.0
      %668 = vmatprep.subr.mxu0 0.0
      %669 = vmatpush1.msra.mxu0 0.0
      %670 = vmatprep.subr.mxu0 0.0
      %671 = vmatpush1.msra.mxu0 0.0
      %672 = vmatprep.subr.mxu0 0.0
      %673 = vmatpush1.msra.mxu0 0.0
      %674 = vmatprep.subr.mxu0 0.0
      %675 = vmatpush1.msra.mxu0 0.0
      %676 = vmatprep.subr.mxu0 0.0
      %677 = vmatpush1.msra.mxu0 0.0
      %678 = vmatprep.subr.mxu0 0.0
      %679 = vmatpush1.msra.mxu0 0.0
      %680 = vmatprep.subr.mxu0 0.0
      %681 = vmatpush1.msra.mxu0 0.0
      %682 = vmatprep.subr.mxu0 0.0
      %683 = vmatpush1.msra.mxu0 0.0
      %684 = vmatprep.subr.mxu0 0.0
      %685 = vmatpush1.msra.mxu0 0.0
      %686 = vmatprep.subr.mxu0 0.0
      %687 = vmatpush1.msra.mxu0 0.0
      %688 = vmatprep.subr.mxu0 0.0
      %689 = vmatpush1.msra.mxu0 0.0
      %690 = vmatprep.mubr.f32.mxu0 0.0
      %691 = vmatmul.mubr.f32.gmra.mrb[0].mxu0 %v553
      %v692 = vpop.f32.mrb[0].mxu0
      %v693 = vadd.f32 0.0, %v692
      %v694 = vpop.f32.mrb[0].mxu0
      %695 = vdwg.mxu0
      %v697 = vcombine.high %v693, %v693
      %v699 = vunpack.c.l.s4 1966171168
      %v700 = vunpack.c.0.s8 %v699
      %v701 = vlaneseq
      %v702 = vshrl.u32 %v701, 7
      %v703 = vsub.s32 %v700, %v702
      %v704 = vrot.slane %v693, %v703
      %v706 = vunpack.c.l.s4 1966171168
      %v707 = vunpack.c.0.s8 %v706
      %v708 = vlaneseq
      %v709 = vshrl.u32 %v708, 7
      %v710 = vsub.s32 %v707, %v709
      %v711 = vrot.slane %v697, %v710
      %v712 = vcombine.high %v704, %v704
      %v713 = vcombine.high %v711, %v711
      %v715 = vunpack.c.l.s4 1966171168
      %v716 = vunpack.c.0.s8 %v715
      %v717 = vlaneseq
      %v718 = vshrl.u32 %v717, 7
      %v719 = vsub.s32 %v716, %v718
      %v720 = vrot.slane %v704, %v719
      %v722 = vunpack.c.l.s4 1966171168
      %v723 = vunpack.c.0.s8 %v722
      %v724 = vlaneseq
      %v725 = vshrl.u32 %v724, 7
      %v726 = vsub.s32 %v723, %v725
      %v727 = vrot.slane %v711, %v726
      %v729 = vunpack.c.l.s4 1966171168
      %v730 = vunpack.c.0.s8 %v729
      %v731 = vlaneseq
      %v732 = vshrl.u32 %v731, 7
      %v733 = vsub.s32 %v730, %v732
      %v734 = vrot.slane %v712, %v733
      %v736 = vunpack.c.l.s4 1966171168
      %v737 = vunpack.c.0.s8 %v736
      %v738 = vlaneseq
      %v739 = vshrl.u32 %v738, 7
      %v740 = vsub.s32 %v737, %v739
      %v741 = vrot.slane %v713, %v740
      %v742 = vcombine.high %v720, %v720
      %v743 = vcombine.high %v727, %v727
      %v744 = vcombine.high %v734, %v734
      %v745 = vcombine.high %v741, %v741
      %v746 = vlaneseq
      %v747 = vshrl.u32 %v746, 7
      %v748 = vsub.s32 0, %v747
      %v749 = vrot.slane %v720, %v748
      %v750 = vlaneseq
      %v751 = vshrl.u32 %v750, 7
      %v752 = vsub.s32 0, %v751
      %v753 = vrot.slane %v734, %v752
      %v754 = vlaneseq
      %v755 = vshrl.u32 %v754, 7
      %v756 = vsub.s32 0, %v755
      %v757 = vrot.slane %v742, %v756
      %v758 = vlaneseq
      %v759 = vshrl.u32 %v758, 7
      %v760 = vsub.s32 0, %v759
      %v761 = vrot.slane %v744, %v760
      %v762 = vlaneseq
      %v763 = vshrl.u32 %v762, 7
      %v764 = vsub.s32 0, %v763
      %v765 = vrot.slane %v727, %v764
      %v766 = vlaneseq
      %v767 = vshrl.u32 %v766, 7
      %v768 = vsub.s32 0, %v767
      %v769 = vrot.slane %v741, %v768
      %v770 = vlaneseq
      %v771 = vshrl.u32 %v770, 7
      %v772 = vsub.s32 0, %v771
      %v773 = vrot.slane %v743, %v772
      %v774 = vlaneseq
      %v775 = vshrl.u32 %v774, 7
      %v776 = vsub.s32 0, %v775
      %v777 = vrot.slane %v745, %v776
      %v786 = vadd.f32 %v749, %v504
      %v787 = vadd.f32 %v753, %v509
      %v788 = vadd.f32 %v757, %v514
      %v789 = vadd.f32 %v761, %v519
      %v790 = vadd.f32 %v765, %v524
      %v791 = vadd.f32 %v769, %v529
      %v792 = vadd.f32 %v773, %v534
      %v793 = vadd.f32 %v777, %v539
      %v794 = vtanh.pop %v786
      %v795 = vtanh.pop %v787
      %v796 = vtanh.pop %v788
      %v797 = vtanh.pop %v789
      %v798 = vtanh.pop %v790
      %v799 = vtanh.pop %v791
      %v800 = vtanh.pop %v792
      %v801 = vtanh.pop %v793
      %v803 = vlaneseq
      %v804 = vshrl.u32 %v803, 7
      %v805 = vsub.s32 0, %v804
      %v806 = vrot.slane %v138, %v805
      %v808 = vmul.f32 %v794, %v806
      %v809 = vmul.f32 %v795, %v806
      %v810 = vmul.f32 %v796, %v806
      %v811 = vmul.f32 %v797, %v806
      %v812 = vmul.f32 %v798, %v806
      %v813 = vmul.f32 %v799, %v806
      %v814 = vmul.f32 %v800, %v806
      %v815 = vmul.f32 %v801, %v806
      %816 = vadd.xlane.f32.xlu0 %v808
      %v817 = vpop.xlane.xlu0 %816
      %818 = vadd.xlane.f32.xlu0 %v809
      %v819 = vpop.xlane.xlu0 %818
      %820 = vadd.xlane.f32.xlu0 %v810
      %v821 = vpop.xlane.xlu0 %820
      %822 = vadd.xlane.f32.xlu0 %v811
      %v823 = vpop.xlane.xlu0 %822
      %824 = vadd.xlane.f32.xlu0 %v812
      %v825 = vpop.xlane.xlu0 %824
      %826 = vadd.xlane.f32.xlu0 %v813
      %v827 = vpop.xlane.xlu0 %826
      %828 = vadd.xlane.f32.xlu0 %v814
      %v829 = vpop.xlane.xlu0 %828
      %830 = vadd.xlane.f32.xlu0 %v815
      %v831 = vpop.xlane.xlu0 %830
      %v833 = vlaneseq
      %v834 = vshrl.u32 %v833, 7
      %v835 = vsub.s32 0, %v834
      %v836 = vrot.slane %v105, %v835
      %838 = vbcast.lane.b32.xlu0 %v836, 256
      %v839 = vpop.permute.xlu0 %838
      %v840 = vlaneseq
      %v841 = vshrl.u32 %v840, 7
      %v842 = vsub.s32 1, %v841
      %v843 = vrot.slane %v105, %v842
      %845 = vbcast.lane.b32.xlu0 %v843, 256
      %v846 = vpop.permute.xlu0 %845
      %v847 = vlaneseq
      %v848 = vshrl.u32 %v847, 7
      %v849 = vsub.s32 2, %v848
      %v850 = vrot.slane %v105, %v849
      %852 = vbcast.lane.b32.xlu0 %v850, 256
      %v853 = vpop.permute.xlu0 %852
      %v854 = vlaneseq
      %v855 = vshrl.u32 %v854, 7
      %v856 = vsub.s32 3, %v855
      %v857 = vrot.slane %v105, %v856
      %859 = vbcast.lane.b32.xlu0 %v857, 256
      %v860 = vpop.permute.xlu0 %859
      %v861 = vlaneseq
      %v862 = vshrl.u32 %v861, 7
      %v863 = vsub.s32 4, %v862
      %v864 = vrot.slane %v105, %v863
      %866 = vbcast.lane.b32.xlu0 %v864, 256
      %v867 = vpop.permute.xlu0 %866
      %v868 = vlaneseq
      %v869 = vshrl.u32 %v868, 7
      %v870 = vsub.s32 5, %v869
      %v871 = vrot.slane %v105, %v870
      %873 = vbcast.lane.b32.xlu0 %v871, 256
      %v874 = vpop.permute.xlu0 %873
      %v875 = vlaneseq
      %v876 = vshrl.u32 %v875, 7
      %v877 = vsub.s32 6, %v876
      %v878 = vrot.slane %v105, %v877
      %880 = vbcast.lane.b32.xlu0 %v878, 256
      %v881 = vpop.permute.xlu0 %880
      %v882 = vlaneseq
      %v883 = vshrl.u32 %v882, 7
      %v884 = vsub.s32 7, %v883
      %v885 = vrot.slane %v105, %v884
      %887 = vbcast.lane.b32.xlu0 %v885, 256
      %v888 = vpop.permute.xlu0 %887
      %v897 = vadd.f32 %v817, %v839
      %v898 = vadd.f32 %v819, %v846
      %v899 = vadd.f32 %v821, %v853
      %v900 = vadd.f32 %v823, %v860
      %v901 = vadd.f32 %v825, %v867
      %v902 = vadd.f32 %v827, %v874
      %v903 = vadd.f32 %v829, %v881
      %v904 = vadd.f32 %v831, %v888
      %913 = vset.pattern.permute.xlu0 0
      %914 = vperm.xlu0 %913, %v897
      %v915 = vpop.permute.xlu0 %914
      %916 = vset.pattern.permute.xlu0 0
      %917 = vperm.xlu0 %916, %v898
      %v918 = vpop.permute.xlu0 %917
      %919 = vset.pattern.permute.xlu0 0
      %920 = vperm.xlu0 %919, %v899
      %v921 = vpop.permute.xlu0 %920
      %922 = vset.pattern.permute.xlu0 0
      %923 = vperm.xlu0 %922, %v900
      %v924 = vpop.permute.xlu0 %923
      %925 = vset.pattern.permute.xlu0 0
      %926 = vperm.xlu0 %925, %v901
      %v927 = vpop.permute.xlu0 %926
      %928 = vset.pattern.permute.xlu0 0
      %929 = vperm.xlu0 %928, %v902
      %v930 = vpop.permute.xlu0 %929
      %931 = vset.pattern.permute.xlu0 0
      %932 = vperm.xlu0 %931, %v903
      %v933 = vpop.permute.xlu0 %932
      %934 = vset.pattern.permute.xlu0 0
      %935 = vperm.xlu0 %934, %v904
      %v936 = vpop.permute.xlu0 %935
      %v937 = vlaneseq
      %v938 = vshrl.u32 %v937, 7
      %v939 = vsub.s32 %v543, %v938
      %v940 = vrot.slane %v915, %v939
      %v941 = vlaneseq
      %v942 = vshrl.u32 %v941, 7
      %v943 = vsub.s32 %v543, %v942
      %v944 = vrot.slane %v918, %v943
      %v945 = vlaneseq
      %v946 = vshrl.u32 %v945, 7
      %v947 = vsub.s32 %v543, %v946
      %v948 = vrot.slane %v921, %v947
      %v949 = vlaneseq
      %v950 = vshrl.u32 %v949, 7
      %v951 = vsub.s32 %v543, %v950
      %v952 = vrot.slane %v924, %v951
      %v953 = vlaneseq
      %v954 = vshrl.u32 %v953, 7
      %v955 = vsub.s32 %v543, %v954
      %v956 = vrot.slane %v927, %v955
      %v957 = vlaneseq
      %v958 = vshrl.u32 %v957, 7
      %v959 = vsub.s32 %v543, %v958
      %v960 = vrot.slane %v930, %v959
      %v961 = vlaneseq
      %v962 = vshrl.u32 %v961, 7
      %v963 = vsub.s32 %v543, %v962
      %v964 = vrot.slane %v933, %v963
      %v965 = vlaneseq
      %v966 = vshrl.u32 %v965, 7
      %v967 = vsub.s32 %v543, %v966
      %v968 = vrot.slane %v936, %v967
      %vm969 = vcmask 1041409
      %v970 = vsel %vm969, %v944, %v940
      %vm971 = vcmask 1042434
      %v972 = vsel %vm971, %v948, %v970
      %vm973 = vcmask 1043459
      %v974 = vsel %vm973, %v952, %v972
      %vm975 = vcmask 1044484
      %v976 = vsel %vm975, %v956, %v974
      %vm977 = vcmask 1045509
      %v978 = vsel %vm977, %v960, %v976
      %vm979 = vcmask 1046534
      %v980 = vsel %vm979, %v964, %v978
      %vm981 = vcmask 1047559
      %v982 = vsel %vm981, %v968, %v980
      %vm984 = vcmask 64512
      %v985 = vsel %vm984, %v982, -inf
      %986 = vmax.xlane.f32.xlu0 %v985
      %v987 = vpop.xlane.xlu0 %986
      %v989 = vlaneseq
      %v990 = vshrl.u32 %v989, 7
      %v991 = vsub.s32 0, %v990
      %v992 = vrot.slane %v987, %v991
      %v993 = vlaneseq
      %v994 = vshrl.u32 %v993, 7
      %v995 = vsub.s32 1, %v994
      %v996 = vrot.slane %v987, %v995
      %v997 = vlaneseq
      %v998 = vshrl.u32 %v997, 7
      %v999 = vsub.s32 2, %v998
      %v1000 = vrot.slane %v987, %v999
      %v1001 = vlaneseq
      %v1002 = vshrl.u32 %v1001, 7
      %v1003 = vsub.s32 3, %v1002
      %v1004 = vrot.slane %v987, %v1003
      %v1005 = vlaneseq
      %v1006 = vshrl.u32 %v1005, 7
      %v1007 = vsub.s32 4, %v1006
      %v1008 = vrot.slane %v987, %v1007
      %v1009 = vlaneseq
      %v1010 = vshrl.u32 %v1009, 7
      %v1011 = vsub.s32 5, %v1010
      %v1012 = vrot.slane %v987, %v1011
      %v1013 = vlaneseq
      %v1014 = vshrl.u32 %v1013, 7
      %v1015 = vsub.s32 6, %v1014
      %v1016 = vrot.slane %v987, %v1015
      %v1017 = vlaneseq
      %v1018 = vshrl.u32 %v1017, 7
      %v1019 = vsub.s32 7, %v1018
      %v1020 = vrot.slane %v987, %v1019
      %v1029 = vsub.f32 %v897, %v992
      %v1030 = vsub.f32 %v898, %v996
      %v1031 = vsub.f32 %v899, %v1000
      %v1032 = vsub.f32 %v900, %v1004
      %v1033 = vsub.f32 %v901, %v1008
      %v1034 = vsub.f32 %v902, %v1012
      %v1035 = vsub.f32 %v903, %v1016
      %v1036 = vsub.f32 %v904, %v1020
      %v1037 = vmul.f32 %v1029, 1.442695
      %v1038 = vpow.pop %v1037
      %v1039 = vmul.f32 %v1030, 1.442695
      %v1040 = vpow.pop %v1039
      %v1041 = vmul.f32 %v1031, 1.442695
      %v1042 = vpow.pop %v1041
      %v1043 = vmul.f32 %v1032, 1.442695
      %v1044 = vpow.pop %v1043
      %v1045 = vmul.f32 %v1033, 1.442695
      %v1046 = vpow.pop %v1045
      %v1047 = vmul.f32 %v1034, 1.442695
      %v1048 = vpow.pop %v1047
      %v1049 = vmul.f32 %v1035, 1.442695
      %v1050 = vpow.pop %v1049
      %v1051 = vmul.f32 %v1036, 1.442695
      %v1052 = vpow.pop %v1051
      %1061 = vset.pattern.permute.xlu0 0
      %1062 = vperm.xlu0 %1061, %v1038
      %v1063 = vpop.permute.xlu0 %1062
      %1064 = vset.pattern.permute.xlu0 0
      %1065 = vperm.xlu0 %1064, %v1040
      %v1066 = vpop.permute.xlu0 %1065
      %1067 = vset.pattern.permute.xlu0 0
      %1068 = vperm.xlu0 %1067, %v1042
      %v1069 = vpop.permute.xlu0 %1068
      %1070 = vset.pattern.permute.xlu0 0
      %1071 = vperm.xlu0 %1070, %v1044
      %v1072 = vpop.permute.xlu0 %1071
      %1073 = vset.pattern.permute.xlu0 0
      %1074 = vperm.xlu0 %1073, %v1046
      %v1075 = vpop.permute.xlu0 %1074
      %1076 = vset.pattern.permute.xlu0 0
      %1077 = vperm.xlu0 %1076, %v1048
      %v1078 = vpop.permute.xlu0 %1077
      %1079 = vset.pattern.permute.xlu0 0
      %1080 = vperm.xlu0 %1079, %v1050
      %v1081 = vpop.permute.xlu0 %1080
      %1082 = vset.pattern.permute.xlu0 0
      %1083 = vperm.xlu0 %1082, %v1052
      %v1084 = vpop.permute.xlu0 %1083
      %v1085 = vlaneseq
      %v1086 = vshrl.u32 %v1085, 7
      %v1087 = vsub.s32 %v543, %v1086
      %v1088 = vrot.slane %v1063, %v1087
      %v1089 = vlaneseq
      %v1090 = vshrl.u32 %v1089, 7
      %v1091 = vsub.s32 %v543, %v1090
      %v1092 = vrot.slane %v1066, %v1091
      %v1093 = vlaneseq
      %v1094 = vshrl.u32 %v1093, 7
      %v1095 = vsub.s32 %v543, %v1094
      %v1096 = vrot.slane %v1069, %v1095
      %v1097 = vlaneseq
      %v1098 = vshrl.u32 %v1097, 7
      %v1099 = vsub.s32 %v543, %v1098
      %v1100 = vrot.slane %v1072, %v1099
      %v1101 = vlaneseq
      %v1102 = vshrl.u32 %v1101, 7
      %v1103 = vsub.s32 %v543, %v1102
      %v1104 = vrot.slane %v1075, %v1103
      %v1105 = vlaneseq
      %v1106 = vshrl.u32 %v1105, 7
      %v1107 = vsub.s32 %v543, %v1106
      %v1108 = vrot.slane %v1078, %v1107
      %v1109 = vlaneseq
      %v1110 = vshrl.u32 %v1109, 7
      %v1111 = vsub.s32 %v543, %v1110
      %v1112 = vrot.slane %v1081, %v1111
      %v1113 = vlaneseq
      %v1114 = vshrl.u32 %v1113, 7
      %v1115 = vsub.s32 %v543, %v1114
      %v1116 = vrot.slane %v1084, %v1115
      %v1117 = vsel %vm969, %v1092, %v1088
      %v1118 = vsel %vm971, %v1096, %v1117
      %v1119 = vsel %vm973, %v1100, %v1118
      %v1120 = vsel %vm975, %v1104, %v1119
      %v1121 = vsel %vm977, %v1108, %v1120
      %v1122 = vsel %vm979, %v1112, %v1121
      %v1123 = vsel %vm981, %v1116, %v1122
      %v1125 = vsel %vm984, %v1123, 0.0
      %1126 = vadd.xlane.f32.xlu0 %v1125
      %v1127 = vpop.xlane.xlu0 %1126
      %v1128 = vrcp.pop %v1127
      %v1130 = vlaneseq
      %v1131 = vshrl.u32 %v1130, 7
      %v1132 = vsub.s32 0, %v1131
      %v1133 = vrot.slane %v1128, %v1132
      %v1134 = vlaneseq
      %v1135 = vshrl.u32 %v1134, 7
      %v1136 = vsub.s32 1, %v1135
      %v1137 = vrot.slane %v1128, %v1136
      %v1138 = vlaneseq
      %v1139 = vshrl.u32 %v1138, 7
      %v1140 = vsub.s32 2, %v1139
      %v1141 = vrot.slane %v1128, %v1140
      %v1142 = vlaneseq
      %v1143 = vshrl.u32 %v1142, 7
      %v1144 = vsub.s32 3, %v1143
      %v1145 = vrot.slane %v1128, %v1144
      %v1146 = vlaneseq
      %v1147 = vshrl.u32 %v1146, 7
      %v1148 = vsub.s32 4, %v1147
      %v1149 = vrot.slane %v1128, %v1148
      %v1150 = vlaneseq
      %v1151 = vshrl.u32 %v1150, 7
      %v1152 = vsub.s32 5, %v1151
      %v1153 = vrot.slane %v1128, %v1152
      %v1154 = vlaneseq
      %v1155 = vshrl.u32 %v1154, 7
      %v1156 = vsub.s32 6, %v1155
      %v1157 = vrot.slane %v1128, %v1156
      %v1158 = vlaneseq
      %v1159 = vshrl.u32 %v1158, 7
      %v1160 = vsub.s32 7, %v1159
      %v1161 = vrot.slane %v1128, %v1160
      %v1170 = vmul.f32 %v1038, %v1133
      %v1171 = vmul.f32 %v1040, %v1137
      %v1172 = vmul.f32 %v1042, %v1141
      %v1173 = vmul.f32 %v1044, %v1145
      %v1174 = vmul.f32 %v1046, %v1149
      %v1175 = vmul.f32 %v1048, %v1153
      %v1176 = vmul.f32 %v1050, %v1157
      %v1177 = vmul.f32 %v1052, %v1161
      %1179 = vset.pattern.permute.xlu0 0
      %1180 = vperm.xlu0 %1179, %v1170
      %v1181 = vpop.permute.xlu0 %1180
      %1184 = vset.pattern.permute.xlu0 0
      %1185 = vperm.xlu0 %1184, %v1171
      %v1186 = vpop.permute.xlu0 %1185
      %1189 = vset.pattern.permute.xlu0 0
      %1190 = vperm.xlu0 %1189, %v1172
      %v1191 = vpop.permute.xlu0 %1190
      %1194 = vset.pattern.permute.xlu0 0
      %1195 = vperm.xlu0 %1194, %v1173
      %v1196 = vpop.permute.xlu0 %1195
      %1199 = vset.pattern.permute.xlu0 0
      %1200 = vperm.xlu0 %1199, %v1174
      %v1201 = vpop.permute.xlu0 %1200
      %1204 = vset.pattern.permute.xlu0 0
      %1205 = vperm.xlu0 %1204, %v1175
      %v1206 = vpop.permute.xlu0 %1205
      %1209 = vset.pattern.permute.xlu0 0
      %1210 = vperm.xlu0 %1209, %v1176
      %v1211 = vpop.permute.xlu0 %1210
      %1214 = vset.pattern.permute.xlu0 0
      %1215 = vperm.xlu0 %1214, %v1177
      %v1216 = vpop.permute.xlu0 %1215
      %v1218 = vmul.f32 %v1181, %v89
      %v1219 = vmul.f32 %v1181, %v90
      %v1220 = vmul.f32 %v1186, %v91
      %v1221 = vmul.f32 %v1186, %v92
      %v1222 = vmul.f32 %v1191, %v93
      %v1223 = vmul.f32 %v1191, %v94
      %v1224 = vmul.f32 %v1196, %v95
      %v1225 = vmul.f32 %v1196, %v96
      %v1226 = vmul.f32 %v1201, %v97
      %v1227 = vmul.f32 %v1201, %v98
      %v1228 = vmul.f32 %v1206, %v99
      %v1229 = vmul.f32 %v1206, %v100
      %v1230 = vmul.f32 %v1211, %v101
      %v1231 = vmul.f32 %v1211, %v102
      %v1232 = vmul.f32 %v1216, %v103
      %v1233 = vmul.f32 %v1216, %v104
      %v1234 = vrot.slane %v1218, 4
      %v1235 = vadd.f32 %v1218, %v1234
      %v1236 = vrot.slane %v1235, 2
      %v1237 = vadd.f32 %v1235, %v1236
      %v1238 = vrot.slane %v1237, 1
      %v1239 = vadd.f32 %v1237, %v1238
      %v1240 = vrot.slane %v1219, 4
      %v1241 = vadd.f32 %v1219, %v1240
      %v1242 = vrot.slane %v1241, 2
      %v1243 = vadd.f32 %v1241, %v1242
      %v1244 = vrot.slane %v1243, 1
      %v1245 = vadd.f32 %v1243, %v1244
      %v1246 = vrot.slane %v1220, 4
      %v1247 = vadd.f32 %v1220, %v1246
      %v1248 = vrot.slane %v1247, 2
      %v1249 = vadd.f32 %v1247, %v1248
      %v1250 = vrot.slane %v1249, 1
      %v1251 = vadd.f32 %v1249, %v1250
      %v1252 = vrot.slane %v1221, 4
      %v1253 = vadd.f32 %v1221, %v1252
      %v1254 = vrot.slane %v1253, 2
      %v1255 = vadd.f32 %v1253, %v1254
      %v1256 = vrot.slane %v1255, 1
      %v1257 = vadd.f32 %v1255, %v1256
      %v1258 = vrot.slane %v1222, 4
      %v1259 = vadd.f32 %v1222, %v1258
      %v1260 = vrot.slane %v1259, 2
      %v1261 = vadd.f32 %v1259, %v1260
      %v1262 = vrot.slane %v1261, 1
      %v1263 = vadd.f32 %v1261, %v1262
      %v1264 = vrot.slane %v1223, 4
      %v1265 = vadd.f32 %v1223, %v1264
      %v1266 = vrot.slane %v1265, 2
      %v1267 = vadd.f32 %v1265, %v1266
      %v1268 = vrot.slane %v1267, 1
      %v1269 = vadd.f32 %v1267, %v1268
      %v1270 = vrot.slane %v1224, 4
      %v1271 = vadd.f32 %v1224, %v1270
      %v1272 = vrot.slane %v1271, 2
      %v1273 = vadd.f32 %v1271, %v1272
      %v1274 = vrot.slane %v1273, 1
      %v1275 = vadd.f32 %v1273, %v1274
      %v1276 = vrot.slane %v1225, 4
      %v1277 = vadd.f32 %v1225, %v1276
      %v1278 = vrot.slane %v1277, 2
      %v1279 = vadd.f32 %v1277, %v1278
      %v1280 = vrot.slane %v1279, 1
      %v1281 = vadd.f32 %v1279, %v1280
      %v1282 = vrot.slane %v1226, 4
      %v1283 = vadd.f32 %v1226, %v1282
      %v1284 = vrot.slane %v1283, 2
      %v1285 = vadd.f32 %v1283, %v1284
      %v1286 = vrot.slane %v1285, 1
      %v1287 = vadd.f32 %v1285, %v1286
      %v1288 = vrot.slane %v1227, 4
      %v1289 = vadd.f32 %v1227, %v1288
      %v1290 = vrot.slane %v1289, 2
      %v1291 = vadd.f32 %v1289, %v1290
      %v1292 = vrot.slane %v1291, 1
      %v1293 = vadd.f32 %v1291, %v1292
      %v1294 = vrot.slane %v1228, 4
      %v1295 = vadd.f32 %v1228, %v1294
      %v1296 = vrot.slane %v1295, 2
      %v1297 = vadd.f32 %v1295, %v1296
      %v1298 = vrot.slane %v1297, 1
      %v1299 = vadd.f32 %v1297, %v1298
      %v1300 = vrot.slane %v1229, 4
      %v1301 = vadd.f32 %v1229, %v1300
      %v1302 = vrot.slane %v1301, 2
      %v1303 = vadd.f32 %v1301, %v1302
      %v1304 = vrot.slane %v1303, 1
      %v1305 = vadd.f32 %v1303, %v1304
      %v1306 = vrot.slane %v1230, 4
      %v1307 = vadd.f32 %v1230, %v1306
      %v1308 = vrot.slane %v1307, 2
      %v1309 = vadd.f32 %v1307, %v1308
      %v1310 = vrot.slane %v1309, 1
      %v1311 = vadd.f32 %v1309, %v1310
      %v1312 = vrot.slane %v1231, 4
      %v1313 = vadd.f32 %v1231, %v1312
      %v1314 = vrot.slane %v1313, 2
      %v1315 = vadd.f32 %v1313, %v1314
      %v1316 = vrot.slane %v1315, 1
      %v1317 = vadd.f32 %v1315, %v1316
      %v1318 = vrot.slane %v1232, 4
      %v1319 = vadd.f32 %v1232, %v1318
      %v1320 = vrot.slane %v1319, 2
      %v1321 = vadd.f32 %v1319, %v1320
      %v1322 = vrot.slane %v1321, 1
      %v1323 = vadd.f32 %v1321, %v1322
      %v1324 = vrot.slane %v1233, 4
      %v1325 = vadd.f32 %v1233, %v1324
      %v1326 = vrot.slane %v1325, 2
      %v1327 = vadd.f32 %v1325, %v1326
      %v1328 = vrot.slane %v1327, 1
      %v1329 = vadd.f32 %v1327, %v1328
      %v1346 = vsel %vm969, %v1251, %v1239
      %v1347 = vsel %vm971, %v1263, %v1346
      %v1348 = vsel %vm973, %v1275, %v1347
      %v1349 = vsel %vm975, %v1287, %v1348
      %v1350 = vsel %vm977, %v1299, %v1349
      %v1351 = vsel %vm979, %v1311, %v1350
      %v1352 = vsel %vm981, %v1323, %v1351
      %v1353 = vsel %vm969, %v1257, %v1245
      %v1354 = vsel %vm971, %v1269, %v1353
      %v1355 = vsel %vm973, %v1281, %v1354
      %v1356 = vsel %vm975, %v1293, %v1355
      %v1357 = vsel %vm977, %v1305, %v1356
      %v1358 = vsel %vm979, %v1317, %v1357
      %v1359 = vsel %vm981, %v1329, %v1358
      %1362 = vmatprep.subr.mxu0 %v188
      %1363 = vmatpush1.msra.mxu0 %v187
      %1364 = vmatprep.subr.mxu0 %v191
      %1365 = vmatpush1.msra.mxu0 %v190
      %1366 = vmatprep.subr.mxu0 %v194
      %1367 = vmatpush1.msra.mxu0 %v193
      %1368 = vmatprep.subr.mxu0 %v197
      %1369 = vmatpush1.msra.mxu0 %v196
      %1370 = vmatprep.subr.mxu0 %v200
      %1371 = vmatpush1.msra.mxu0 %v199
      %1372 = vmatprep.subr.mxu0 %v203
      %1373 = vmatpush1.msra.mxu0 %v202
      %1374 = vmatprep.subr.mxu0 %v206
      %1375 = vmatpush1.msra.mxu0 %v205
      %1376 = vmatprep.subr.mxu0 %v209
      %1377 = vmatpush1.msra.mxu0 %v208
      %1378 = vmatprep.subr.mxu0 %v212
      %1379 = vmatpush1.msra.mxu0 %v211
      %1380 = vmatprep.subr.mxu0 %v215
      %1381 = vmatpush1.msra.mxu0 %v214
      %1382 = vmatprep.subr.mxu0 %v218
      %1383 = vmatpush1.msra.mxu0 %v217
      %1384 = vmatprep.subr.mxu0 %v221
      %1385 = vmatpush1.msra.mxu0 %v220
      %1386 = vmatprep.subr.mxu0 %v224
      %1387 = vmatpush1.msra.mxu0 %v223
      %1388 = vmatprep.subr.mxu0 %v227
      %1389 = vmatpush1.msra.mxu0 %v226
      %1390 = vmatprep.subr.mxu0 %v230
      %1391 = vmatpush1.msra.mxu0 %v229
      %1392 = vmatprep.subr.mxu0 %v233
      %1393 = vmatpush1.msra.mxu0 %v232
      %1394 = vmatprep.subr.mxu0 %v236
      %1395 = vmatpush1.msra.mxu0 %v235
      %1396 = vmatprep.subr.mxu0 %v239
      %1397 = vmatpush1.msra.mxu0 %v238
      %1398 = vmatprep.subr.mxu0 %v242
      %1399 = vmatpush1.msra.mxu0 %v241
      %1400 = vmatprep.subr.mxu0 %v245
      %1401 = vmatpush1.msra.mxu0 %v244
      %1402 = vmatprep.subr.mxu0 %v248
      %1403 = vmatpush1.msra.mxu0 %v247
      %1404 = vmatprep.subr.mxu0 %v251
      %1405 = vmatpush1.msra.mxu0 %v250
      %1406 = vmatprep.subr.mxu0 %v254
      %1407 = vmatpush1.msra.mxu0 %v253
      %1408 = vmatprep.subr.mxu0 %v257
      %1409 = vmatpush1.msra.mxu0 %v256
      %1410 = vmatprep.subr.mxu0 %v260
      %1411 = vmatpush1.msra.mxu0 %v259
      %1412 = vmatprep.subr.mxu0 %v263
      %1413 = vmatpush1.msra.mxu0 %v262
      %1414 = vmatprep.subr.mxu0 %v266
      %1415 = vmatpush1.msra.mxu0 %v265
      %1416 = vmatprep.subr.mxu0 %v269
      %1417 = vmatpush1.msra.mxu0 %v268
      %1418 = vmatprep.subr.mxu0 %v272
      %1419 = vmatpush1.msra.mxu0 %v271
      %1420 = vmatprep.subr.mxu0 %v275
      %1421 = vmatpush1.msra.mxu0 %v274
      %1422 = vmatprep.subr.mxu0 %v278
      %1423 = vmatpush1.msra.mxu0 %v277
      %1424 = vmatprep.subr.mxu0 %v281
      %1425 = vmatpush1.msra.mxu0 %v280
      %1426 = vmatprep.mubr.f32.mxu0 %v1359
      %1427 = vmatmul.mubr.f32.gmra.mrb[0].mxu0 %v1352
      %v1428 = vpop.f32.mrb[0].mxu0
      %v1429 = vadd.f32 0.0, %v1428
      %v1430 = vpop.f32.mrb[0].mxu0
      %v1431 = vadd.f32 0.0, %v1430
      %1432 = vdwg.mxu0
      %1433 = vmatprep.subr.mxu0 0.0
      %1434 = vmatpush1.msra.mxu0 %v189
      %1435 = vmatprep.subr.mxu0 0.0
      %1436 = vmatpush1.msra.mxu0 %v192
      %1437 = vmatprep.subr.mxu0 0.0
      %1438 = vmatpush1.msra.mxu0 %v195
      %1439 = vmatprep.subr.mxu0 0.0
      %1440 = vmatpush1.msra.mxu0 %v198
      %1441 = vmatprep.subr.mxu0 0.0
      %1442 = vmatpush1.msra.mxu0 %v201
      %1443 = vmatprep.subr.mxu0 0.0
      %1444 = vmatpush1.msra.mxu0 %v204
      %1445 = vmatprep.subr.mxu0 0.0
      %1446 = vmatpush1.msra.mxu0 %v207
      %1447 = vmatprep.subr.mxu0 0.0
      %1448 = vmatpush1.msra.mxu0 %v210
      %1449 = vmatprep.subr.mxu0 0.0
      %1450 = vmatpush1.msra.mxu0 %v213
      %1451 = vmatprep.subr.mxu0 0.0
      %1452 = vmatpush1.msra.mxu0 %v216
      %1453 = vmatprep.subr.mxu0 0.0
      %1454 = vmatpush1.msra.mxu0 %v219
      %1455 = vmatprep.subr.mxu0 0.0
      %1456 = vmatpush1.msra.mxu0 %v222
      %1457 = vmatprep.subr.mxu0 0.0
      %1458 = vmatpush1.msra.mxu0 %v225
      %1459 = vmatprep.subr.mxu0 0.0
      %1460 = vmatpush1.msra.mxu0 %v228
      %1461 = vmatprep.subr.mxu0 0.0
      %1462 = vmatpush1.msra.mxu0 %v231
      %1463 = vmatprep.subr.mxu0 0.0
      %1464 = vmatpush1.msra.mxu0 %v234
      %1465 = vmatprep.subr.mxu0 0.0
      %1466 = vmatpush1.msra.mxu0 %v237
      %1467 = vmatprep.subr.mxu0 0.0
      %1468 = vmatpush1.msra.mxu0 %v240
      %1469 = vmatprep.subr.mxu0 0.0
      %1470 = vmatpush1.msra.mxu0 %v243
      %1471 = vmatprep.subr.mxu0 0.0
      %1472 = vmatpush1.msra.mxu0 %v246
      %1473 = vmatprep.subr.mxu0 0.0
      %1474 = vmatpush1.msra.mxu0 %v249
      %1475 = vmatprep.subr.mxu0 0.0
      %1476 = vmatpush1.msra.mxu0 %v252
      %1477 = vmatprep.subr.mxu0 0.0
      %1478 = vmatpush1.msra.mxu0 %v255
      %1479 = vmatprep.subr.mxu0 0.0
      %1480 = vmatpush1.msra.mxu0 %v258
      %1481 = vmatprep.subr.mxu0 0.0
      %1482 = vmatpush1.msra.mxu0 %v261
      %1483 = vmatprep.subr.mxu0 0.0
      %1484 = vmatpush1.msra.mxu0 %v264
      %1485 = vmatprep.subr.mxu0 0.0
      %1486 = vmatpush1.msra.mxu0 %v267
      %1487 = vmatprep.subr.mxu0 0.0
      %1488 = vmatpush1.msra.mxu0 %v270
      %1489 = vmatprep.subr.mxu0 0.0
      %1490 = vmatpush1.msra.mxu0 %v273
      %1491 = vmatprep.subr.mxu0 0.0
      %1492 = vmatpush1.msra.mxu0 %v276
      %1493 = vmatprep.subr.mxu0 0.0
      %1494 = vmatpush1.msra.mxu0 %v279
      %1495 = vmatprep.subr.mxu0 0.0
      %1496 = vmatpush1.msra.mxu0 %v282
      %1497 = vmatprep.mubr.f32.mxu0 %v1359
      %1498 = vmatmul.mubr.f32.gmra.mrb[0].mxu0 %v1352
      %v1499 = vpop.f32.mrb[0].mxu0
      %v1500 = vadd.f32 0.0, %v1499
      %v1501 = vpop.f32.mrb[0].mxu0
      %1502 = vdwg.mxu0
      %1503 = vmatprep.subr.mxu0 %v140
      %1504 = vmatpush1.msra.mxu0 %v139
      %1505 = vmatprep.subr.mxu0 %v143
      %1506 = vmatpush1.msra.mxu0 %v142
      %1507 = vmatprep.subr.mxu0 %v146
      %1508 = vmatpush1.msra.mxu0 %v145
      %1509 = vmatprep.subr.mxu0 %v149
      %1510 = vmatpush1.msra.mxu0 %v148
      %1511 = vmatprep.subr.mxu0 %v152
      %1512 = vmatpush1.msra.mxu0 %v151
      %1513 = vmatprep.subr.mxu0 %v155
      %1514 = vmatpush1.msra.mxu0 %v154
      %1515 = vmatprep.subr.mxu0 %v158
      %1516 = vmatpush1.msra.mxu0 %v157
      %1517 = vmatprep.subr.mxu0 %v161
      %1518 = vmatpush1.msra.mxu0 %v160
      %1519 = vmatprep.subr.mxu0 %v164
      %1520 = vmatpush1.msra.mxu0 %v163
      %1521 = vmatprep.subr.mxu0 %v167
      %1522 = vmatpush1.msra.mxu0 %v166
      %1523 = vmatprep.subr.mxu0 %v170
      %1524 = vmatpush1.msra.mxu0 %v169
      %1525 = vmatprep.subr.mxu0 %v173
      %1526 = vmatpush1.msra.mxu0 %v172
      %1527 = vmatprep.subr.mxu0 %v176
      %1528 = vmatpush1.msra.mxu0 %v175
      %1529 = vmatprep.subr.mxu0 %v179
      %1530 = vmatpush1.msra.mxu0 %v178
      %1531 = vmatprep.subr.mxu0 %v182
      %1532 = vmatpush1.msra.mxu0 %v181
      %1533 = vmatprep.subr.mxu0 %v185
      %1534 = vmatpush1.msra.mxu0 %v184
      %1535 = vmatprep.subr.mxu0 0.0
      %1536 = vmatpush1.msra.mxu0 0.0
      %1537 = vmatprep.subr.mxu0 0.0
      %1538 = vmatpush1.msra.mxu0 0.0
      %1539 = vmatprep.subr.mxu0 0.0
      %1540 = vmatpush1.msra.mxu0 0.0
      %1541 = vmatprep.subr.mxu0 0.0
      %1542 = vmatpush1.msra.mxu0 0.0
      %1543 = vmatprep.subr.mxu0 0.0
      %1544 = vmatpush1.msra.mxu0 0.0
      %1545 = vmatprep.subr.mxu0 0.0
      %1546 = vmatpush1.msra.mxu0 0.0
      %1547 = vmatprep.subr.mxu0 0.0
      %1548 = vmatpush1.msra.mxu0 0.0
      %1549 = vmatprep.subr.mxu0 0.0
      %1550 = vmatpush1.msra.mxu0 0.0
      %1551 = vmatprep.subr.mxu0 0.0
      %1552 = vmatpush1.msra.mxu0 0.0
      %1553 = vmatprep.subr.mxu0 0.0
      %1554 = vmatpush1.msra.mxu0 0.0
      %1555 = vmatprep.subr.mxu0 0.0
      %1556 = vmatpush1.msra.mxu0 0.0
      %1557 = vmatprep.subr.mxu0 0.0
      %1558 = vmatpush1.msra.mxu0 0.0
      %1559 = vmatprep.subr.mxu0 0.0
      %1560 = vmatpush1.msra.mxu0 0.0
      %1561 = vmatprep.subr.mxu0 0.0
      %1562 = vmatpush1.msra.mxu0 0.0
      %1563 = vmatprep.subr.mxu0 0.0
      %1564 = vmatpush1.msra.mxu0 0.0
      %1565 = vmatprep.subr.mxu0 0.0
      %1566 = vmatpush1.msra.mxu0 0.0
      %1567 = vmatprep.mubr.f32.mxu0 0.0
      %1568 = vmatmul.mubr.f32.gmra.mrb[0].mxu0 %v623
      %v1569 = vpop.f32.mrb[0].mxu0
      %v1570 = vadd.f32 %v1429, %v1569
      %v1571 = vpop.f32.mrb[0].mxu0
      %v1572 = vadd.f32 %v1431, %v1571
      %1573 = vdwg.mxu0
      %1574 = vmatprep.subr.mxu0 0.0
      %1575 = vmatpush1.msra.mxu0 %v141
      %1576 = vmatprep.subr.mxu0 0.0
      %1577 = vmatpush1.msra.mxu0 %v144
      %1578 = vmatprep.subr.mxu0 0.0
      %1579 = vmatpush1.msra.mxu0 %v147
      %1580 = vmatprep.subr.mxu0 0.0
      %1581 = vmatpush1.msra.mxu0 %v150
      %1582 = vmatprep.subr.mxu0 0.0
      %1583 = vmatpush1.msra.mxu0 %v153
      %1584 = vmatprep.subr.mxu0 0.0
      %1585 = vmatpush1.msra.mxu0 %v156
      %1586 = vmatprep.subr.mxu0 0.0
      %1587 = vmatpush1.msra.mxu0 %v159
      %1588 = vmatprep.subr.mxu0 0.0
      %1589 = vmatpush1.msra.mxu0 %v162
      %1590 = vmatprep.subr.mxu0 0.0
      %1591 = vmatpush1.msra.mxu0 %v165
      %1592 = vmatprep.subr.mxu0 0.0
      %1593 = vmatpush1.msra.mxu0 %v168
      %1594 = vmatprep.subr.mxu0 0.0
      %1595 = vmatpush1.msra.mxu0 %v171
      %1596 = vmatprep.subr.mxu0 0.0
      %1597 = vmatpush1.msra.mxu0 %v174
      %1598 = vmatprep.subr.mxu0 0.0
      %1599 = vmatpush1.msra.mxu0 %v177
      %1600 = vmatprep.subr.mxu0 0.0
      %1601 = vmatpush1.msra.mxu0 %v180
      %1602 = vmatprep.subr.mxu0 0.0
      %1603 = vmatpush1.msra.mxu0 %v183
      %1604 = vmatprep.subr.mxu0 0.0
      %1605 = vmatpush1.msra.mxu0 %v186
      %1606 = vmatprep.subr.mxu0 0.0
      %1607 = vmatpush1.msra.mxu0 0.0
      %1608 = vmatprep.subr.mxu0 0.0
      %1609 = vmatpush1.msra.mxu0 0.0
      %1610 = vmatprep.subr.mxu0 0.0
      %1611 = vmatpush1.msra.mxu0 0.0
      %1612 = vmatprep.subr.mxu0 0.0
      %1613 = vmatpush1.msra.mxu0 0.0
      %1614 = vmatprep.subr.mxu0 0.0
      %1615 = vmatpush1.msra.mxu0 0.0
      %1616 = vmatprep.subr.mxu0 0.0
      %1617 = vmatpush1.msra.mxu0 0.0
      %1618 = vmatprep.subr.mxu0 0.0
      %1619 = vmatpush1.msra.mxu0 0.0
      %1620 = vmatprep.subr.mxu0 0.0
      %1621 = vmatpush1.msra.mxu0 0.0
      %1622 = vmatprep.subr.mxu0 0.0
      %1623 = vmatpush1.msra.mxu0 0.0
      %1624 = vmatprep.subr.mxu0 0.0
      %1625 = vmatpush1.msra.mxu0 0.0
      %1626 = vmatprep.subr.mxu0 0.0
      %1627 = vmatpush1.msra.mxu0 0.0
      %1628 = vmatprep.subr.mxu0 0.0
      %1629 = vmatpush1.msra.mxu0 0.0
      %1630 = vmatprep.subr.mxu0 0.0
      %1631 = vmatpush1.msra.mxu0 0.0
      %1632 = vmatprep.subr.mxu0 0.0
      %1633 = vmatpush1.msra.mxu0 0.0
      %1634 = vmatprep.subr.mxu0 0.0
      %1635 = vmatpush1.msra.mxu0 0.0
      %1636 = vmatprep.subr.mxu0 0.0
      %1637 = vmatpush1.msra.mxu0 0.0
      %1638 = vmatprep.mubr.f32.mxu0 0.0
      %1639 = vmatmul.mubr.f32.gmra.mrb[0].mxu0 %v623
      %v1640 = vpop.f32.mrb[0].mxu0
      %v1641 = vadd.f32 %v1500, %v1640
      %v1642 = vpop.f32.mrb[0].mxu0
      %1643 = vdwg.mxu0
      %v1645 = vlaneseq
      %v1646 = vshrl.u32 %v1645, 7
      %v1647 = vsub.s32 0, %v1646
      %v1648 = vrot.slane %v331, %v1647
      %v1649 = vlaneseq
      %v1650 = vshrl.u32 %v1649, 7
      %v1651 = vsub.s32 1, %v1650
      %v1652 = vrot.slane %v331, %v1651
      %v1653 = vlaneseq
      %v1654 = vshrl.u32 %v1653, 7
      %v1655 = vsub.s32 2, %v1654
      %v1656 = vrot.slane %v331, %v1655
      %v1660 = vadd.f32 %v1570, %v1648
      %v1661 = vadd.f32 %v1572, %v1652
      %v1662 = vadd.f32 %v1641, %v1656
      %v1664 = vlaneseq
      %v1665 = vshrl.u32 %v1664, 7
      %v1666 = vsub.s32 0, %v1665
      %v1667 = vrot.slane %v332, %v1666
      %v1668 = vlaneseq
      %v1669 = vshrl.u32 %v1668, 7
      %v1670 = vsub.s32 1, %v1669
      %v1671 = vrot.slane %v332, %v1670
      %v1672 = vlaneseq
      %v1673 = vshrl.u32 %v1672, 7
      %v1674 = vsub.s32 2, %v1673
      %v1675 = vrot.slane %v332, %v1674
      %1679 = vmatprep.subr.mxu0 %v284
      %1680 = vmatpush1.msra.mxu0 %v283
      %1681 = vmatprep.subr.mxu0 %v287
      %1682 = vmatpush1.msra.mxu0 %v286
      %1683 = vmatprep.subr.mxu0 %v290
      %1684 = vmatpush1.msra.mxu0 %v289
      %1685 = vmatprep.subr.mxu0 %v293
      %1686 = vmatpush1.msra.mxu0 %v292
      %1687 = vmatprep.subr.mxu0 %v296
      %1688 = vmatpush1.msra.mxu0 %v295
      %1689 = vmatprep.subr.mxu0 %v299
      %1690 = vmatpush1.msra.mxu0 %v298
      %1691 = vmatprep.subr.mxu0 %v302
      %1692 = vmatpush1.msra.mxu0 %v301
      %1693 = vmatprep.subr.mxu0 %v305
      %1694 = vmatpush1.msra.mxu0 %v304
      %1695 = vmatprep.subr.mxu0 %v308
      %1696 = vmatpush1.msra.mxu0 %v307
      %1697 = vmatprep.subr.mxu0 %v311
      %1698 = vmatpush1.msra.mxu0 %v310
      %1699 = vmatprep.subr.mxu0 %v314
      %1700 = vmatpush1.msra.mxu0 %v313
      %1701 = vmatprep.subr.mxu0 %v317
      %1702 = vmatpush1.msra.mxu0 %v316
      %1703 = vmatprep.subr.mxu0 %v320
      %1704 = vmatpush1.msra.mxu0 %v319
      %1705 = vmatprep.subr.mxu0 %v323
      %1706 = vmatpush1.msra.mxu0 %v322
      %1707 = vmatprep.subr.mxu0 %v326
      %1708 = vmatpush1.msra.mxu0 %v325
      %1709 = vmatprep.subr.mxu0 %v329
      %1710 = vmatpush1.msra.mxu0 %v328
      %1711 = vmatprep.subr.mxu0 0.0
      %1712 = vmatpush1.msra.mxu0 0.0
      %1713 = vmatprep.subr.mxu0 0.0
      %1714 = vmatpush1.msra.mxu0 0.0
      %1715 = vmatprep.subr.mxu0 0.0
      %1716 = vmatpush1.msra.mxu0 0.0
      %1717 = vmatprep.subr.mxu0 0.0
      %1718 = vmatpush1.msra.mxu0 0.0
      %1719 = vmatprep.subr.mxu0 0.0
      %1720 = vmatpush1.msra.mxu0 0.0
      %1721 = vmatprep.subr.mxu0 0.0
      %1722 = vmatpush1.msra.mxu0 0.0
      %1723 = vmatprep.subr.mxu0 0.0
      %1724 = vmatpush1.msra.mxu0 0.0
      %1725 = vmatprep.subr.mxu0 0.0
      %1726 = vmatpush1.msra.mxu0 0.0
      %1727 = vmatprep.subr.mxu0 0.0
      %1728 = vmatpush1.msra.mxu0 0.0
      %1729 = vmatprep.subr.mxu0 0.0
      %1730 = vmatpush1.msra.mxu0 0.0
      %1731 = vmatprep.subr.mxu0 0.0
      %1732 = vmatpush1.msra.mxu0 0.0
      %1733 = vmatprep.subr.mxu0 0.0
      %1734 = vmatpush1.msra.mxu0 0.0
      %1735 = vmatprep.subr.mxu0 0.0
      %1736 = vmatpush1.msra.mxu0 0.0
      %1737 = vmatprep.subr.mxu0 0.0
      %1738 = vmatpush1.msra.mxu0 0.0
      %1739 = vmatprep.subr.mxu0 0.0
      %1740 = vmatpush1.msra.mxu0 0.0
      %1741 = vmatprep.subr.mxu0 0.0
      %1742 = vmatpush1.msra.mxu0 0.0
      %1743 = vmatprep.mubr.f32.mxu0 0.0
      %1744 = vmatmul.mubr.f32.gmra.mrb[0].mxu0 %v553
      %v1745 = vpop.f32.mrb[0].mxu0
      %v1746 = vadd.f32 %v1667, %v1745
      %v1747 = vpop.f32.mrb[0].mxu0
      %v1748 = vadd.f32 %v1671, %v1747
      %1749 = vdwg.mxu0
      %1750 = vmatprep.subr.mxu0 0.0
      %1751 = vmatpush1.msra.mxu0 %v285
      %1752 = vmatprep.subr.mxu0 0.0
      %1753 = vmatpush1.msra.mxu0 %v288
      %1754 = vmatprep.subr.mxu0 0.0
      %1755 = vmatpush1.msra.mxu0 %v291
      %1756 = vmatprep.subr.mxu0 0.0
      %1757 = vmatpush1.msra.mxu0 %v294
      %1758 = vmatprep.subr.mxu0 0.0
      %1759 = vmatpush1.msra.mxu0 %v297
      %1760 = vmatprep.subr.mxu0 0.0
      %1761 = vmatpush1.msra.mxu0 %v300
      %1762 = vmatprep.subr.mxu0 0.0
      %1763 = vmatpush1.msra.mxu0 %v303
      %1764 = vmatprep.subr.mxu0 0.0
      %1765 = vmatpush1.msra.mxu0 %v306
      %1766 = vmatprep.subr.mxu0 0.0
      %1767 = vmatpush1.msra.mxu0 %v309
      %1768 = vmatprep.subr.mxu0 0.0
      %1769 = vmatpush1.msra.mxu0 %v312
      %1770 = vmatprep.subr.mxu0 0.0
      %1771 = vmatpush1.msra.mxu0 %v315
      %1772 = vmatprep.subr.mxu0 0.0
      %1773 = vmatpush1.msra.mxu0 %v318
      %1774 = vmatprep.subr.mxu0 0.0
      %1775 = vmatpush1.msra.mxu0 %v321
      %1776 = vmatprep.subr.mxu0 0.0
      %1777 = vmatpush1.msra.mxu0 %v324
      %1778 = vmatprep.subr.mxu0 0.0
      %1779 = vmatpush1.msra.mxu0 %v327
      %1780 = vmatprep.subr.mxu0 0.0
      %1781 = vmatpush1.msra.mxu0 %v330
      %1782 = vmatprep.subr.mxu0 0.0
      %1783 = vmatpush1.msra.mxu0 0.0
      %1784 = vmatprep.subr.mxu0 0.0
      %1785 = vmatpush1.msra.mxu0 0.0
      %1786 = vmatprep.subr.mxu0 0.0
      %1787 = vmatpush1.msra.mxu0 0.0
      %1788 = vmatprep.subr.mxu0 0.0
      %1789 = vmatpush1.msra.mxu0 0.0
      %1790 = vmatprep.subr.mxu0 0.0
      %1791 = vmatpush1.msra.mxu0 0.0
      %1792 = vmatprep.subr.mxu0 0.0
      %1793 = vmatpush1.msra.mxu0 0.0
      %1794 = vmatprep.subr.mxu0 0.0
      %1795 = vmatpush1.msra.mxu0 0.0
      %1796 = vmatprep.subr.mxu0 0.0
      %1797 = vmatpush1.msra.mxu0 0.0
      %1798 = vmatprep.subr.mxu0 0.0
      %1799 = vmatpush1.msra.mxu0 0.0
      %1800 = vmatprep.subr.mxu0 0.0
      %1801 = vmatpush1.msra.mxu0 0.0
      %1802 = vmatprep.subr.mxu0 0.0
      %1803 = vmatpush1.msra.mxu0 0.0
      %1804 = vmatprep.subr.mxu0 0.0
      %1805 = vmatpush1.msra.mxu0 0.0
      %1806 = vmatprep.subr.mxu0 0.0
      %1807 = vmatpush1.msra.mxu0 0.0
      %1808 = vmatprep.subr.mxu0 0.0
      %1809 = vmatpush1.msra.mxu0 0.0
      %1810 = vmatprep.subr.mxu0 0.0
      %1811 = vmatpush1.msra.mxu0 0.0
      %1812 = vmatprep.subr.mxu0 0.0
      %1813 = vmatpush1.msra.mxu0 0.0
      %1814 = vmatprep.mubr.f32.mxu0 0.0
      %1815 = vmatmul.mubr.f32.gmra.mrb[0].mxu0 %v553
      %v1816 = vpop.f32.mrb[0].mxu0
      %v1817 = vadd.f32 %v1675, %v1816
      %v1818 = vpop.f32.mrb[0].mxu0
      %1819 = vdwg.mxu0
      %v1820 = vadd.f32 %v1660, %v1746
      %v1821 = vxor.u32 %v1820, 2147483648
      %v1822 = vmul.f32 %v1821, 1.442695
      %v1823 = vpow.pop %v1822
      %v1824 = vadd.f32 %v1823, 1.0
      %v1825 = vrcp.pop %v1824
      %v1826 = vmul.f32 1.0, %v1825
      %v1827 = vadd.f32 %v1661, %v1748
      %v1828 = vxor.u32 %v1827, 2147483648
      %v1829 = vmul.f32 %v1828, 1.442695
      %v1830 = vpow.pop %v1829
      %v1831 = vadd.f32 %v1830, 1.0
      %v1832 = vrcp.pop %v1831
      %v1833 = vmul.f32 1.0, %v1832
      %v1834 = vmul.f32 %v1826, %v1817
      %v1835 = vadd.f32 %v1662, %v1834
      %v1836 = vtanh.pop %v1835
      %v1837 = vsub.f32 1.0, %v1833
      %v1838 = vmul.f32 %v1837, %v1836
      %v1839 = vmul.f32 %v1833, %v553
      %v1840 = vadd.f32 %v1838, %v1839
      %1841 = vmatprep.subr.mxu0 0.0
      %1842 = vmatpush1.msra.mxu0 %v349
      %1843 = vmatprep.subr.mxu0 0.0
      %1844 = vmatpush1.msra.mxu0 %v350
      %1845 = vmatprep.subr.mxu0 0.0
      %1846 = vmatpush1.msra.mxu0 %v351
      %1847 = vmatprep.subr.mxu0 0.0
      %1848 = vmatpush1.msra.mxu0 %v352
      %1849 = vmatprep.subr.mxu0 0.0
      %1850 = vmatpush1.msra.mxu0 %v353
      %1851 = vmatprep.subr.mxu0 0.0
      %1852 = vmatpush1.msra.mxu0 %v354
      %1853 = vmatprep.subr.mxu0 0.0
      %1854 = vmatpush1.msra.mxu0 %v355
      %1855 = vmatprep.subr.mxu0 0.0
      %1856 = vmatpush1.msra.mxu0 %v356
      %1857 = vmatprep.subr.mxu0 0.0
      %1858 = vmatpush1.msra.mxu0 %v357
      %1859 = vmatprep.subr.mxu0 0.0
      %1860 = vmatpush1.msra.mxu0 %v358
      %1861 = vmatprep.subr.mxu0 0.0
      %1862 = vmatpush1.msra.mxu0 %v359
      %1863 = vmatprep.subr.mxu0 0.0
      %1864 = vmatpush1.msra.mxu0 %v360
      %1865 = vmatprep.subr.mxu0 0.0
      %1866 = vmatpush1.msra.mxu0 %v361
      %1867 = vmatprep.subr.mxu0 0.0
      %1868 = vmatpush1.msra.mxu0 %v362
      %1869 = vmatprep.subr.mxu0 0.0
      %1870 = vmatpush1.msra.mxu0 %v363
      %1871 = vmatprep.subr.mxu0 0.0
      %1872 = vmatpush1.msra.mxu0 %v364
      %1873 = vmatprep.subr.mxu0 0.0
      %1874 = vmatpush1.msra.mxu0 %v365
      %1875 = vmatprep.subr.mxu0 0.0
      %1876 = vmatpush1.msra.mxu0 %v366
      %1877 = vmatprep.subr.mxu0 0.0
      %1878 = vmatpush1.msra.mxu0 %v367
      %1879 = vmatprep.subr.mxu0 0.0
      %1880 = vmatpush1.msra.mxu0 %v368
      %1881 = vmatprep.subr.mxu0 0.0
      %1882 = vmatpush1.msra.mxu0 %v369
      %1883 = vmatprep.subr.mxu0 0.0
      %1884 = vmatpush1.msra.mxu0 %v370
      %1885 = vmatprep.subr.mxu0 0.0
      %1886 = vmatpush1.msra.mxu0 %v371
      %1887 = vmatprep.subr.mxu0 0.0
      %1888 = vmatpush1.msra.mxu0 %v372
      %1889 = vmatprep.subr.mxu0 0.0
      %1890 = vmatpush1.msra.mxu0 %v373
      %1891 = vmatprep.subr.mxu0 0.0
      %1892 = vmatpush1.msra.mxu0 %v374
      %1893 = vmatprep.subr.mxu0 0.0
      %1894 = vmatpush1.msra.mxu0 %v375
      %1895 = vmatprep.subr.mxu0 0.0
      %1896 = vmatpush1.msra.mxu0 %v376
      %1897 = vmatprep.subr.mxu0 0.0
      %1898 = vmatpush1.msra.mxu0 %v377
      %1899 = vmatprep.subr.mxu0 0.0
      %1900 = vmatpush1.msra.mxu0 %v378
      %1901 = vmatprep.subr.mxu0 0.0
      %1902 = vmatpush1.msra.mxu0 %v379
      %1903 = vmatprep.subr.mxu0 0.0
      %1904 = vmatpush1.msra.mxu0 %v380
      %1905 = vmatprep.mubr.f32.mxu0 %v1359
      %1906 = vmatmul.mubr.f32.gmra.mrb[0].mxu0 %v1352
      %v1907 = vpop.f32.mrb[0].mxu0
      %v1908 = vadd.f32 0.0, %v1907
      %v1909 = vpop.f32.mrb[0].mxu0
      %1910 = vdwg.mxu0
      %1911 = vmatprep.subr.mxu0 0.0
      %1912 = vmatpush1.msra.mxu0 %v333
      %1913 = vmatprep.subr.mxu0 0.0
      %1914 = vmatpush1.msra.mxu0 %v334
      %1915 = vmatprep.subr.mxu0 0.0
      %1916 = vmatpush1.msra.mxu0 %v335
      %1917 = vmatprep.subr.mxu0 0.0
      %1918 = vmatpush1.msra.mxu0 %v336
      %1919 = vmatprep.subr.mxu0 0.0
      %1920 = vmatpush1.msra.mxu0 %v337
      %1921 = vmatprep.subr.mxu0 0.0
      %1922 = vmatpush1.msra.mxu0 %v338
      %1923 = vmatprep.subr.mxu0 0.0
      %1924 = vmatpush1.msra.mxu0 %v339
      %1925 = vmatprep.subr.mxu0 0.0
      %1926 = vmatpush1.msra.mxu0 %v340
      %1927 = vmatprep.subr.mxu0 0.0
      %1928 = vmatpush1.msra.mxu0 %v341
      %1929 = vmatprep.subr.mxu0 0.0
      %1930 = vmatpush1.msra.mxu0 %v342
      %1931 = vmatprep.subr.mxu0 0.0
      %1932 = vmatpush1.msra.mxu0 %v343
      %1933 = vmatprep.subr.mxu0 0.0
      %1934 = vmatpush1.msra.mxu0 %v344
      %1935 = vmatprep.subr.mxu0 0.0
      %1936 = vmatpush1.msra.mxu0 %v345
      %1937 = vmatprep.subr.mxu0 0.0
      %1938 = vmatpush1.msra.mxu0 %v346
      %1939 = vmatprep.subr.mxu0 0.0
      %1940 = vmatpush1.msra.mxu0 %v347
      %1941 = vmatprep.subr.mxu0 0.0
      %1942 = vmatpush1.msra.mxu0 %v348
      %1943 = vmatprep.subr.mxu0 0.0
      %1944 = vmatpush1.msra.mxu0 0.0
      %1945 = vmatprep.subr.mxu0 0.0
      %1946 = vmatpush1.msra.mxu0 0.0
      %1947 = vmatprep.subr.mxu0 0.0
      %1948 = vmatpush1.msra.mxu0 0.0
      %1949 = vmatprep.subr.mxu0 0.0
      %1950 = vmatpush1.msra.mxu0 0.0
      %1951 = vmatprep.subr.mxu0 0.0
      %1952 = vmatpush1.msra.mxu0 0.0
      %1953 = vmatprep.subr.mxu0 0.0
      %1954 = vmatpush1.msra.mxu0 0.0
      %1955 = vmatprep.subr.mxu0 0.0
      %1956 = vmatpush1.msra.mxu0 0.0
      %1957 = vmatprep.subr.mxu0 0.0
      %1958 = vmatpush1.msra.mxu0 0.0
      %1959 = vmatprep.subr.mxu0 0.0
      %1960 = vmatpush1.msra.mxu0 0.0
      %1961 = vmatprep.subr.mxu0 0.0
      %1962 = vmatpush1.msra.mxu0 0.0
      %1963 = vmatprep.subr.mxu0 0.0
      %1964 = vmatpush1.msra.mxu0 0.0
      %1965 = vmatprep.subr.mxu0 0.0
      %1966 = vmatpush1.msra.mxu0 0.0
      %1967 = vmatprep.subr.mxu0 0.0
      %1968 = vmatpush1.msra.mxu0 0.0
      %1969 = vmatprep.subr.mxu0 0.0
      %1970 = vmatpush1.msra.mxu0 0.0
      %1971 = vmatprep.subr.mxu0 0.0
      %1972 = vmatpush1.msra.mxu0 0.0
      %1973 = vmatprep.subr.mxu0 0.0
      %1974 = vmatpush1.msra.mxu0 0.0
      %1975 = vmatprep.mubr.f32.mxu0 0.0
      %1976 = vmatmul.mubr.f32.gmra.mrb[0].mxu0 %v1840
      %v1977 = vpop.f32.mrb[0].mxu0
      %v1978 = vadd.f32 %v1908, %v1977
      %v1979 = vpop.f32.mrb[0].mxu0
      %1980 = vdwg.mxu0
      %1981 = vmatprep.subr.mxu0 0.0
      %1982 = vmatpush1.msra.mxu0 %v381
      %1983 = vmatprep.subr.mxu0 0.0
      %1984 = vmatpush1.msra.mxu0 %v382
      %1985 = vmatprep.subr.mxu0 0.0
      %1986 = vmatpush1.msra.mxu0 %v383
      %1987 = vmatprep.subr.mxu0 0.0
      %1988 = vmatpush1.msra.mxu0 %v384
      %1989 = vmatprep.subr.mxu0 0.0
      %1990 = vmatpush1.msra.mxu0 %v385
      %1991 = vmatprep.subr.mxu0 0.0
      %1992 = vmatpush1.msra.mxu0 %v386
      %1993 = vmatprep.subr.mxu0 0.0
      %1994 = vmatpush1.msra.mxu0 %v387
      %1995 = vmatprep.subr.mxu0 0.0
      %1996 = vmatpush1.msra.mxu0 %v388
      %1997 = vmatprep.subr.mxu0 0.0
      %1998 = vmatpush1.msra.mxu0 %v389
      %1999 = vmatprep.subr.mxu0 0.0
      %2000 = vmatpush1.msra.mxu0 %v390
      %2001 = vmatprep.subr.mxu0 0.0
      %2002 = vmatpush1.msra.mxu0 %v391
      %2003 = vmatprep.subr.mxu0 0.0
      %2004 = vmatpush1.msra.mxu0 %v392
      %2005 = vmatprep.subr.mxu0 0.0
      %2006 = vmatpush1.msra.mxu0 %v393
      %2007 = vmatprep.subr.mxu0 0.0
      %2008 = vmatpush1.msra.mxu0 %v394
      %2009 = vmatprep.subr.mxu0 0.0
      %2010 = vmatpush1.msra.mxu0 %v395
      %2011 = vmatprep.subr.mxu0 0.0
      %2012 = vmatpush1.msra.mxu0 %v396
      %2013 = vmatprep.subr.mxu0 0.0
      %2014 = vmatpush1.msra.mxu0 0.0
      %2015 = vmatprep.subr.mxu0 0.0
      %2016 = vmatpush1.msra.mxu0 0.0
      %2017 = vmatprep.subr.mxu0 0.0
      %2018 = vmatpush1.msra.mxu0 0.0
      %2019 = vmatprep.subr.mxu0 0.0
      %2020 = vmatpush1.msra.mxu0 0.0
      %2021 = vmatprep.subr.mxu0 0.0
      %2022 = vmatpush1.msra.mxu0 0.0
      %2023 = vmatprep.subr.mxu0 0.0
      %2024 = vmatpush1.msra.mxu0 0.0
      %2025 = vmatprep.subr.mxu0 0.0
      %2026 = vmatpush1.msra.mxu0 0.0
      %2027 = vmatprep.subr.mxu0 0.0
      %2028 = vmatpush1.msra.mxu0 0.0
      %2029 = vmatprep.subr.mxu0 0.0
      %2030 = vmatpush1.msra.mxu0 0.0
      %2031 = vmatprep.subr.mxu0 0.0
      %2032 = vmatpush1.msra.mxu0 0.0
      %2033 = vmatprep.subr.mxu0 0.0
      %2034 = vmatpush1.msra.mxu0 0.0
      %2035 = vmatprep.subr.mxu0 0.0
      %2036 = vmatpush1.msra.mxu0 0.0
      %2037 = vmatprep.subr.mxu0 0.0
      %2038 = vmatpush1.msra.mxu0 0.0
      %2039 = vmatprep.subr.mxu0 0.0
      %2040 = vmatpush1.msra.mxu0 0.0
      %2041 = vmatprep.subr.mxu0 0.0
      %2042 = vmatpush1.msra.mxu0 0.0
      %2043 = vmatprep.subr.mxu0 0.0
      %2044 = vmatpush1.msra.mxu0 0.0
      %2045 = vmatprep.mubr.f32.mxu0 0.0
      %2046 = vmatmul.mubr.f32.gmra.mrb[0].mxu0 %v623
      %v2047 = vpop.f32.mrb[0].mxu0
      %v2048 = vadd.f32 0.0, %v2047
      %v2049 = vpop.f32.mrb[0].mxu0
      %2050 = vdwg.mxu0
      %v2051 = vadd.f32 %v1978, %v2048
      %v2053 = vlaneseq
      %v2054 = vshrl.u32 %v2053, 7
      %v2055 = vsub.s32 0, %v2054
      %v2056 = vrot.slane %v397, %v2055
      %v2058 = vadd.f32 %v2051, %v2056
      %s2059 = smul.u32 %s555, 8
      %s2060 = scalar_lea.vmem %s19, %s2059
      %2061 = vst [vmem:[%s2060] sm:$0xff] %v2058
      %vm2062 = vcmp.lt.s32.totalorder %v543, 25
      %v2063 = vsel %vm2062, %v2058, -1e+30
      %2064 = vmax.xlane.f32.xlu0 %v2063
      %v2065 = vpop.xlane.xlu0 %2064
      %vm2066 = vcmp.eq.f32.partialorder %v2063, %v2065
      %v2067 = vsel %vm2066, %v543, 128
      %v2068 = vand.u32 %v2067, 65535
      %v2069 = vshra.s32 %v2067, 16
      %v2070 = vcvt.s32.f32 %v2068
      %v2071 = vcvt.s32.f32 %v2069
      %2072 = vmin.xlane.f32.xlu0 %v2071
      %v2073 = vpop.xlane.xlu0 %2072
      %vm2074 = vcmp.eq.f32.partialorder %v2071, %v2073
      %v2075 = vsel %vm2074, %v2070, inf
      %2076 = vmin.xlane.f32.xlu0 %v2075
      %v2077 = vpop.xlane.xlu0 %2076
      %v2078 = vcvt.f32.s32 %v2077
      %v2079 = vcvt.f32.s32 %v2073
      %v2080 = vshll.u32 %v2079, 16
      %v2081 = vadd.s32 %v2080, %v2078
      %vm2082 = vcmp.eq.s32.totalorder %v543, %v2081
      %v2083 = vsel %vm2082, 1, 0
      %v2084 = vcvt.s32.f32 %v2083
      %s2085 = sld [smem:[#allocation2 + %s555]]
      %s2086 = scalar_lea.vmem %s4, %s2059
      %v2087 = vld [vmem:[%s2086] sm:$0xff]
      %v2088 = vstv %s2085
      %v2089 = vmul.f32 %v2088, %v2087
      %s2090 = ssub.f32 1.0, %s2085
      %v2091 = vstv %s2090
      %v2092 = vmul.f32 %v2091, %v2084
      %v2093 = vadd.f32 %v2089, %v2092
    $region90: #{forward.3} parent=1 // loop_footer
      %s552 = sadd.s32 1, %s548
    $region91: #{forward.3} parent=1 // loop_footer_branch
      %547 = sbr.rel target = $region87
    $region92: #{forward.3} parent=1 // loop_exit
      _
    // Predicated region
    $region93: #{forward.3} parent=1 // pred_check
      _
    $region94: #{forward.3} parent=1 // pred_check_branch
      %2095 = sbr.rel (0) target = $region96
    $region95: #{forward.3} parent=1 // pred_region
      _
    $region96: #{forward.3} parent=1 // pred_fallthru
      _
    // Predicated region
    $region97: #{forward.3} parent=1 // pred_check
      _
    $region98: #{forward.3} parent=1 // pred_check_branch
      %2097 = sbr.rel (0) target = $region100
    $region99: #{forward.3} parent=1 // pred_region
      _
    $region100: #{forward.3} parent=1 // pred_fallthru
      _
    %2098 = vsyncpa [#allocation3], 1
    %2099 = vsyncpa [#allocation4], 1

</llo_original>
